<compile_context>
chip_gen: v7x
topology: tpu7x:2x2x1
jax: 0.10.0
libtpu: 0.0.40
codegen_flags: <defaults>
</compile_context>

<pallas_src>
import functools
import math

import jax
import jax.numpy as jnp
from jax import lax
from jax.experimental import pallas as pl
from jax.experimental.pallas import tpu as pltpu

LN_EPS = 1e-5


def _gelu_tanh(x):
    # TODO(synk): nn.GELU() default is the exact erf formulation; the tanh
    # approximation is used for guaranteed Mosaic lowering (max dev ~3e-4).
    c = math.sqrt(2.0 / math.pi)
    return 0.5 * x * (1.0 + jnp.tanh(c * (x + 0.044715 * x * x * x)))


def _layer_norm(x, gamma, beta, eps):
    # x: (M, D), gamma/beta: (1, D).  rsqrt on the (M,1) stats vector, then a
    # fused multiply-add over the big tile (no full-tile divide, no sqrt).
    mean = jnp.mean(x, axis=-1, keepdims=True)
    cen = x - mean
    var = jnp.mean(cen * cen, axis=-1, keepdims=True)
    rstd = lax.rsqrt(var + eps)
    return cen * rstd * gamma + beta


# --------------------------------------------------------------------------
# Kernel: one full encoder layer for a block of Bb sequences per grid step.
# --------------------------------------------------------------------------
def _encoder_layer_kernel(x_ref, wqkv_ref, bqkv_ref, wo_ref, bo_ref,
                          g1_ref, be1_ref, w1_ref, bf1_ref, w2_ref, bf2_ref,
                          g2_ref, be2_ref, o_ref, *, n_heads, eps):
    Bb, L, D = x_ref.shape
    dh = D // n_heads
    M = Bb * L

    # Flatten to (Bb*L, D): taller MXU M dim for every dense matmul / LN.
    x = x_ref[...].reshape(M, D).astype(jnp.float32)   # residual path, f32
    xb = x.astype(jnp.bfloat16)                        # MXU operand

    # ---- fused QKV projection (1/sqrt(dh) already folded into Q cols) ----
    qkv = (jnp.dot(xb, wqkv_ref[...], preferred_element_type=jnp.float32)
           + bqkv_ref[...])                            # (M, 3D) f32

    # ---- per-sequence multi-head attention --------------------------------
    # 'qd,kd->qk' (no explicit transpose); head outputs are projected through
    # sublane-aligned row slices of w_o and accumulated (no lane concat).
    dims_qk = (((1,), (1,)), ((), ()))
    seq_out = []
    for b in range(Bb):                                # static unroll
        r0 = b * L
        acc = jnp.zeros((L, D), jnp.float32)
        for h in range(n_heads):                       # static unroll
            c0 = h * dh
            qh = qkv[r0:r0 + L, c0:c0 + dh].astype(jnp.bfloat16)
            kh = qkv[r0:r0 + L, D + c0:D + c0 + dh].astype(jnp.bfloat16)
            vh = qkv[r0:r0 + L, 2 * D + c0:2 * D + c0 + dh].astype(jnp.bfloat16)
            s = lax.dot_general(qh, kh, dims_qk,
                                preferred_element_type=jnp.float32)   # (L, L)
            s = s - jnp.max(s, axis=-1, keepdims=True)
            p = jnp.exp(s)
            p = p * pl.reciprocal(jnp.sum(p, axis=-1, keepdims=True),
                                  approx=True)
            hv = jnp.dot(p.astype(jnp.bfloat16), vh,
                         preferred_element_type=jnp.float32)           # (L, dh)
            acc = acc + jnp.dot(hv.astype(jnp.bfloat16),
                                wo_ref[c0:c0 + dh, :],
                                preferred_element_type=jnp.float32)    # (L, D)
        seq_out.append(acc)
    attn = seq_out[0] if Bb == 1 else jnp.concatenate(seq_out, axis=0)  # row concat
    attn = attn + bo_ref[...]

    # ---- residual + LayerNorm1 (dropout == identity in eval) --------------
    xn = _layer_norm(x + attn, g1_ref[...], be1_ref[...], eps)

    # ---- GELU MLP ----------------------------------------------------------
    hmid = _gelu_tanh(
        jnp.dot(xn.astype(jnp.bfloat16), w1_ref[...],
                preferred_element_type=jnp.float32) + bf1_ref[...])
    y = (jnp.dot(hmid.astype(jnp.bfloat16), w2_ref[...],
                 preferred_element_type=jnp.float32) + bf2_ref[...])

    # ---- residual + LayerNorm2 ---------------------------------------------
    out = _layer_norm(xn + y, g2_ref[...], be2_ref[...], eps)
    o_ref[...] = out.reshape(Bb, L, D).astype(o_ref.dtype)


# --------------------------------------------------------------------------
# Wrapper helpers
# --------------------------------------------------------------------------
def _pick_block_batch(batch, seq_len):
    """Rows-per-step heuristic: fill the MXU (~128 rows) per step, but keep
    >= 2 parallel grid steps on dual-TensorCore chips (v7x)."""
    try:
        kind = jax.devices()[0].device_kind.lower()
    except Exception:  # pragma: no cover
        kind = ""
    min_steps = 2 if "v7" in kind else 1
    bb = max(1, min(batch, 128 // max(seq_len, 1)))
    while batch % bb:
        bb -= 1
    while bb > 1 and (batch // bb) < min_steps:
        bb -= 1
        while batch % bb:
            bb -= 1
    return max(bb, 1)


def _weight_spec(shape, buffer_count=None):
    """Grid-invariant (revisited) weight block.  buffer_count=1 single-buffers
    it (matters at large d_model on v7x's 64 MiB VMEM)."""
    idx = lambda i: (0,) * len(shape)
    if buffer_count is None:
        return pl.BlockSpec(shape, idx)
    try:
        return pl.BlockSpec(shape, idx, pipeline_mode=pl.Buffered(buffer_count))
    except Exception:  # pipeline_mode unsupported in this jax build -> default
        return pl.BlockSpec(shape, idx)


@functools.partial(
    jax.jit,
    static_argnames=("n_heads", "eps", "block_batch", "weight_buffer_count"))
def encoder_layer(x, w_qkv, b_qkv, w_o, b_o, ln1_g, ln1_b,
                  w_fc1, b_fc1, w_fc2, b_fc2, ln2_g, ln2_b,
                  n_heads=4, eps=LN_EPS, block_batch=None,
                  weight_buffer_count=None):
    """Fused EncoderLayer forward.  x: (B, L, D)."""
    B, L, D = x.shape
    Dff = w_fc1.shape[1]
    assert D % n_heads == 0
    dh = D // n_heads

    bb = block_batch if block_batch is not None else _pick_block_batch(B, L)
    assert B % bb == 0, (B, bb)

    # Fold the 1/sqrt(dh) attention scale into the Q columns of the QKV
    # projection once, outside the kernel.
    scale = 1.0 / math.sqrt(dh)
    col_scale = jnp.concatenate([jnp.full((D,), scale, jnp.float32),
                                 jnp.ones((2 * D,), jnp.float32)])
    w_qkv_b = (w_qkv.astype(jnp.float32) * col_scale).astype(jnp.bfloat16)
    b_qkv_f = (b_qkv.astype(jnp.float32) * col_scale)
    w_o_b = w_o.astype(jnp.bfloat16)
    w1_b = w_fc1.astype(jnp.bfloat16)
    w2_b = w_fc2.astype(jnp.bfloat16)
    b_o_f = b_o.astype(jnp.float32)
    b1_f = b_fc1.astype(jnp.float32)
    b2_f = b_fc2.astype(jnp.float32)
    g1_f, be1_f = ln1_g.astype(jnp.float32), ln1_b.astype(jnp.float32)
    g2_f, be2_f = ln2_g.astype(jnp.float32), ln2_b.astype(jnp.float32)

    kernel = functools.partial(_encoder_layer_kernel, n_heads=n_heads, eps=eps)
    wspec = functools.partial(_weight_spec, buffer_count=weight_buffer_count)

    return pl.pallas_call(
        kernel,
        out_shape=jax.ShapeDtypeStruct((B, L, D), x.dtype),
        grid_spec=pltpu.PrefetchScalarGridSpec(
            num_scalar_prefetch=0,
            grid=(B // bb,),
            in_specs=[
                pl.BlockSpec((bb, L, D), lambda i: (i, 0, 0)),   # x
                wspec((D, 3 * D)),                               # w_qkv (bf16)
                wspec((1, 3 * D)),                               # b_qkv
                wspec((D, D)),                                   # w_o   (bf16)
                wspec((1, D)),                                   # b_o
                wspec((1, D)),                                   # ln1 gamma
                wspec((1, D)),                                   # ln1 beta
                wspec((D, Dff)),                                 # w_fc1 (bf16)
                wspec((1, Dff)),                                 # b_fc1
                wspec((Dff, D)),                                 # w_fc2 (bf16)
                wspec((1, D)),                                   # b_fc2
                wspec((1, D)),                                   # ln2 gamma
                wspec((1, D)),                                   # ln2 beta
            ],
            out_specs=pl.BlockSpec((bb, L, D), lambda i: (i, 0, 0)),
        ),
        compiler_params=pltpu.CompilerParams(
            dimension_semantics=("parallel",)),
    )(x, w_qkv_b, b_qkv_f, w_o_b, b_o_f, g1_f, be1_f,
      w1_b, b1_f, w2_b, b2_f, g2_f, be2_f)


# --------------------------------------------------------------------------
# Pure-JAX f32 reference (same math as the PyTorch module in eval mode)
# --------------------------------------------------------------------------
def encoder_layer_ref(x, w_qkv, b_qkv, w_o, b_o, ln1_g, ln1_b,
                      w_fc1, b_fc1, w_fc2, b_fc2, ln2_g, ln2_b,
                      n_heads=4, eps=LN_EPS):
    B, L, D = x.shape
    dh = D // n_heads

    def ln(t, g, b):
        m = jnp.mean(t, axis=-1, keepdims=True)
        c = t - m
        v = jnp.mean(c * c, axis=-1, keepdims=True)
        return c * lax.rsqrt(v + eps) * g + b

    qkv = x @ w_qkv + b_qkv
    q, k, v = jnp.split(qkv, 3, axis=-1)
    q = q.reshape(B, L, n_heads, dh).transpose(0, 2, 1, 3)
    k = k.reshape(B, L, n_heads, dh).transpose(0, 2, 1, 3)
    v = v.reshape(B, L, n_heads, dh).transpose(0, 2, 1, 3)
    s = jnp.einsum("bhqd,bhkd->bhqk", q, k) / math.sqrt(dh)
    s = s - jnp.max(s, axis=-1, keepdims=True)
    p = jnp.exp(s)
    p = p / jnp.sum(p, axis=-1, keepdims=True)
    attn = jnp.einsum("bhqk,bhkd->bhqd", p, v)
    attn = attn.transpose(0, 2, 1, 3).reshape(B, L, D)
    attn = attn @ w_o + b_o

    xn = ln(x + attn, ln1_g, ln1_b)
    h = _gelu_tanh(xn @ w_fc1 + b_fc1)
    y = h @ w_fc2 + b_fc2
    return ln(xn + y, ln2_g, ln2_b)


# --------------------------------------------------------------------------
if __name__ == "__main__":
    key = jax.random.PRNGKey(0)
    B, L, D, H = 2, 16, 128, 4        # batch, seq_len, d_model, n_heads
    Dff = 4 * D                       # d_feed_forward = 4 * d_model

    ks = jax.random.split(key, 14)
    sw = 0.1
    x = jax.random.normal(ks[0], (B, L, D), dtype=jnp.float32)
    w_qkv = sw * jax.random.normal(ks[1], (D, 3 * D), dtype=jnp.float32)
    b_qkv = 0.02 * jax.random.normal(ks[2], (1, 3 * D), dtype=jnp.float32)
    w_o = sw * jax.random.normal(ks[3], (D, D), dtype=jnp.float32)
    b_o = 0.02 * jax.random.normal(ks[4], (1, D), dtype=jnp.float32)
    w_fc1 = sw * jax.random.normal(ks[5], (D, Dff), dtype=jnp.float32)
    b_fc1 = 0.02 * jax.random.normal(ks[6], (1, Dff), dtype=jnp.float32)
    w_fc2 = sw * jax.random.normal(ks[7], (Dff, D), dtype=jnp.float32)
    b_fc2 = 0.02 * jax.random.normal(ks[8], (1, D), dtype=jnp.float32)
    ln1_g = 1.0 + 0.1 * jax.random.normal(ks[9], (1, D), dtype=jnp.float32)
    ln1_b = 0.05 * jax.random.normal(ks[10], (1, D), dtype=jnp.float32)
    ln2_g = 1.0 + 0.1 * jax.random.normal(ks[11], (1, D), dtype=jnp.float32)
    ln2_b = 0.05 * jax.random.normal(ks[12], (1, D), dtype=jnp.float32)

    out = encoder_layer(x, w_qkv, b_qkv, w_o, b_o, ln1_g, ln1_b,
                        w_fc1, b_fc1, w_fc2, b_fc2, ln2_g, ln2_b, n_heads=H)
    out = jax.block_until_ready(out)

    out_ref = encoder_layer_ref(x, w_qkv, b_qkv, w_o, b_o, ln1_g, ln1_b,
                                w_fc1, b_fc1, w_fc2, b_fc2, ln2_g, ln2_b,
                                n_heads=H)
    out_ref = jax.block_until_ready(out_ref)

    assert out.shape == (B, L, D)
    assert bool(jnp.all(jnp.isfinite(out)))
    # Kernel feeds the MXU bf16 operands (f32 accumulation) and uses the
    # approximate EUP reciprocal, per the perf review; the f32 XLA reference
    # therefore differs by a few 1e-2 at worst on ~unit-variance outputs.
    max_diff = float(jnp.max(jnp.abs(out - out_ref)))
    assert bool(jnp.allclose(out, out_ref, atol=5e-2, rtol=5e-2)), (
        "encoder layer mismatch: max|diff|=" + str(max_diff))

    print("KERNEL_OK")
</pallas_src>

<mosaic_0001>
module attributes {stable_mosaic.version = 11 : i64} {
  func.func @_encoder_layer_kernel(%arg0: i32, %arg1: memref<2x16x128xf32, #tpu.memory_space<vmem>>, %arg2: memref<128x384xbf16, #tpu.memory_space<vmem>>, %arg3: memref<1x384xf32, #tpu.memory_space<vmem>>, %arg4: memref<128x128xbf16, #tpu.memory_space<vmem>>, %arg5: memref<1x128xf32, #tpu.memory_space<vmem>>, %arg6: memref<1x128xf32, #tpu.memory_space<vmem>>, %arg7: memref<1x128xf32, #tpu.memory_space<vmem>>, %arg8: memref<128x512xbf16, #tpu.memory_space<vmem>>, %arg9: memref<1x512xf32, #tpu.memory_space<vmem>>, %arg10: memref<512x128xbf16, #tpu.memory_space<vmem>>, %arg11: memref<1x128xf32, #tpu.memory_space<vmem>>, %arg12: memref<1x128xf32, #tpu.memory_space<vmem>>, %arg13: memref<1x128xf32, #tpu.memory_space<vmem>>, %arg14: memref<2x16x128xf32, #tpu.memory_space<vmem>>) attributes {dimension_semantics = [#tpu.dimension_semantics<parallel>], iteration_bounds = array<i64: 1>, scalar_prefetch = 0 : i64, scratch_operands = 0 : i64, tpu.core_type = #tpu.core_type<tc>, window_params = [{transform_indices = @transform_0, window_bounds = array<i64: 2, 16, 128>}, {pipeline_mode = #tpu.pipeline_mode<synchronous>, transform_indices = @transform_1, window_bounds = array<i64: 128, 384>}, {pipeline_mode = #tpu.pipeline_mode<synchronous>, transform_indices = @transform_2, window_bounds = array<i64: 1, 384>}, {pipeline_mode = #tpu.pipeline_mode<synchronous>, transform_indices = @transform_3, window_bounds = array<i64: 128, 128>}, {pipeline_mode = #tpu.pipeline_mode<synchronous>, transform_indices = @transform_4, window_bounds = array<i64: 1, 128>}, {pipeline_mode = #tpu.pipeline_mode<synchronous>, transform_indices = @transform_5, window_bounds = array<i64: 1, 128>}, {pipeline_mode = #tpu.pipeline_mode<synchronous>, transform_indices = @transform_6, window_bounds = array<i64: 1, 128>}, {pipeline_mode = #tpu.pipeline_mode<synchronous>, transform_indices = @transform_7, window_bounds = array<i64: 128, 512>}, {pipeline_mode = #tpu.pipeline_mode<synchronous>, transform_indices = @transform_8, window_bounds = array<i64: 1, 512>}, {pipeline_mode = #tpu.pipeline_mode<synchronous>, transform_indices = @transform_9, window_bounds = array<i64: 512, 128>}, {pipeline_mode = #tpu.pipeline_mode<synchronous>, transform_indices = @transform_10, window_bounds = array<i64: 1, 128>}, {pipeline_mode = #tpu.pipeline_mode<synchronous>, transform_indices = @transform_11, window_bounds = array<i64: 1, 128>}, {pipeline_mode = #tpu.pipeline_mode<synchronous>, transform_indices = @transform_12, window_bounds = array<i64: 1, 128>}, {transform_indices = @transform_13, window_bounds = array<i64: 2, 16, 128>}]} {
    %c0 = arith.constant 0 : index
    %c0_0 = arith.constant 0 : index
    %c0_1 = arith.constant 0 : index
    %0 = vector.load %arg1[%c0, %c0_0, %c0_1] : memref<2x16x128xf32, #tpu.memory_space<vmem>>, vector<2x16x128xf32>
    %1 = vector.shape_cast %0 : vector<2x16x128xf32> to vector<32x128xf32>
    %2 = arith.truncf %1 : vector<32x128xf32> to vector<32x128xbf16>
    %c0_2 = arith.constant 0 : index
    %c0_3 = arith.constant 0 : index
    %3 = vector.load %arg2[%c0_2, %c0_3] : memref<128x384xbf16, #tpu.memory_space<vmem>>, vector<128x384xbf16>
    %cst = arith.constant dense<0.000000e+00> : vector<32x384xf32>
    %4 = tpu.matmul %2, %3, %cst {dimension_numbers = #tpu.dot_dimension_numbers<[1], [0], [0], [1], [0, 0, 1, 1], [], []>} : vector<32x128xbf16>, vector<128x384xbf16>, vector<32x384xf32> -> vector<32x384xf32>
    %c0_4 = arith.constant 0 : index
    %c0_5 = arith.constant 0 : index
    %5 = vector.load %arg3[%c0_4, %c0_5] : memref<1x384xf32, #tpu.memory_space<vmem>>, vector<1x384xf32>
    %6 = vector.broadcast %5 : vector<1x384xf32> to vector<32x384xf32>
    %7 = arith.addf %4, %6 : vector<32x384xf32>
    %cst_6 = arith.constant 0.000000e+00 : f32
    %8 = vector.broadcast %cst_6 : f32 to vector<16x128xf32>
    %9 = vector.extract_strided_slice %7 {offsets = [0, 0], sizes = [16, 32], strides = [1, 1]} : vector<32x384xf32> to vector<16x32xf32>
    %10 = arith.truncf %9 : vector<16x32xf32> to vector<16x32xbf16>
    %11 = vector.extract_strided_slice %7 {offsets = [0, 128], sizes = [16, 32], strides = [1, 1]} : vector<32x384xf32> to vector<16x32xf32>
    %12 = arith.truncf %11 : vector<16x32xf32> to vector<16x32xbf16>
    %13 = vector.extract_strided_slice %7 {offsets = [0, 256], sizes = [16, 32], strides = [1, 1]} : vector<32x384xf32> to vector<16x32xf32>
    %14 = arith.truncf %13 : vector<16x32xf32> to vector<16x32xbf16>
    %cst_7 = arith.constant dense<0.000000e+00> : vector<16x16xf32>
    %15 = tpu.matmul %10, %12, %cst_7 {dimension_numbers = #tpu.dot_dimension_numbers<[1], [1], [0], [0], [0, 0, 1, 0], [], []>} : vector<16x32xbf16>, vector<16x32xbf16>, vector<16x16xf32> -> vector<16x16xf32>
    %cst_8 = arith.constant dense<0xFF800000> : vector<16xf32>
    %16 = vector.multi_reduction <maximumf>, %15, %cst_8 [1] : vector<16x16xf32> to vector<16xf32>
    %17 = vector.shape_cast %16 : vector<16xf32> to vector<16x1xf32>
    %18 = vector.broadcast %17 : vector<16x1xf32> to vector<16x16xf32>
    %19 = arith.subf %15, %18 : vector<16x16xf32>
    %20 = math.exp %19 : vector<16x16xf32>
    %cst_9 = arith.constant dense<0.000000e+00> : vector<16xf32>
    %21 = vector.multi_reduction <add>, %20, %cst_9 [1] : vector<16x16xf32> to vector<16xf32>
    %22 = vector.shape_cast %21 : vector<16xf32> to vector<16x1xf32>
    %23 = tpu.reciprocal %22 {approx = true} : vector<16x1xf32> -> vector<16x1xf32>
    %24 = vector.broadcast %23 : vector<16x1xf32> to vector<16x16xf32>
    %25 = arith.mulf %20, %24 : vector<16x16xf32>
    %26 = arith.truncf %25 : vector<16x16xf32> to vector<16x16xbf16>
    %cst_10 = arith.constant dense<0.000000e+00> : vector<16x32xf32>
    %27 = tpu.matmul %26, %14, %cst_10 {dimension_numbers = #tpu.dot_dimension_numbers<[1], [0], [0], [1], [0, 0, 1, 1], [], []>} : vector<16x16xbf16>, vector<16x32xbf16>, vector<16x32xf32> -> vector<16x32xf32>
    %28 = arith.truncf %27 : vector<16x32xf32> to vector<16x32xbf16>
    %c0_11 = arith.constant 0 : index
    %c0_12 = arith.constant 0 : index
    %29 = vector.load %arg4[%c0_11, %c0_12] : memref<128x128xbf16, #tpu.memory_space<vmem>>, vector<32x128xbf16>
    %cst_13 = arith.constant dense<0.000000e+00> : vector<16x128xf32>
    %30 = tpu.matmul %28, %29, %cst_13 {dimension_numbers = #tpu.dot_dimension_numbers<[1], [0], [0], [1], [0, 0, 1, 1], [], []>} : vector<16x32xbf16>, vector<32x128xbf16>, vector<16x128xf32> -> vector<16x128xf32>
    %31 = arith.addf %8, %30 : vector<16x128xf32>
    %32 = vector.extract_strided_slice %7 {offsets = [0, 32], sizes = [16, 32], strides = [1, 1]} : vector<32x384xf32> to vector<16x32xf32>
    %33 = arith.truncf %32 : vector<16x32xf32> to vector<16x32xbf16>
    %34 = vector.extract_strided_slice %7 {offsets = [0, 160], sizes = [16, 32], strides = [1, 1]} : vector<32x384xf32> to vector<16x32xf32>
    %35 = arith.truncf %34 : vector<16x32xf32> to vector<16x32xbf16>
    %36 = vector.extract_strided_slice %7 {offsets = [0, 288], sizes = [16, 32], strides = [1, 1]} : vector<32x384xf32> to vector<16x32xf32>
    %37 = arith.truncf %36 : vector<16x32xf32> to vector<16x32xbf16>
    %cst_14 = arith.constant dense<0.000000e+00> : vector<16x16xf32>
    %38 = tpu.matmul %33, %35, %cst_14 {dimension_numbers = #tpu.dot_dimension_numbers<[1], [1], [0], [0], [0, 0, 1, 0], [], []>} : vector<16x32xbf16>, vector<16x32xbf16>, vector<16x16xf32> -> vector<16x16xf32>
    %cst_15 = arith.constant dense<0xFF800000> : vector<16xf32>
    %39 = vector.multi_reduction <maximumf>, %38, %cst_15 [1] : vector<16x16xf32> to vector<16xf32>
    %40 = vector.shape_cast %39 : vector<16xf32> to vector<16x1xf32>
    %41 = vector.broadcast %40 : vector<16x1xf32> to vector<16x16xf32>
    %42 = arith.subf %38, %41 : vector<16x16xf32>
    %43 = math.exp %42 : vector<16x16xf32>
    %cst_16 = arith.constant dense<0.000000e+00> : vector<16xf32>
    %44 = vector.multi_reduction <add>, %43, %cst_16 [1] : vector<16x16xf32> to vector<16xf32>
    %45 = vector.shape_cast %44 : vector<16xf32> to vector<16x1xf32>
    %46 = tpu.reciprocal %45 {approx = true} : vector<16x1xf32> -> vector<16x1xf32>
    %47 = vector.broadcast %46 : vector<16x1xf32> to vector<16x16xf32>
    %48 = arith.mulf %43, %47 : vector<16x16xf32>
    %49 = arith.truncf %48 : vector<16x16xf32> to vector<16x16xbf16>
    %cst_17 = arith.constant dense<0.000000e+00> : vector<16x32xf32>
    %50 = tpu.matmul %49, %37, %cst_17 {dimension_numbers = #tpu.dot_dimension_numbers<[1], [0], [0], [1], [0, 0, 1, 1], [], []>} : vector<16x16xbf16>, vector<16x32xbf16>, vector<16x32xf32> -> vector<16x32xf32>
    %51 = arith.truncf %50 : vector<16x32xf32> to vector<16x32xbf16>
    %c32 = arith.constant 32 : index
    %c0_18 = arith.constant 0 : index
    %52 = vector.load %arg4[%c32, %c0_18] : memref<128x128xbf16, #tpu.memory_space<vmem>>, vector<32x128xbf16>
    %cst_19 = arith.constant dense<0.000000e+00> : vector<16x128xf32>
    %53 = tpu.matmul %51, %52, %cst_19 {dimension_numbers = #tpu.dot_dimension_numbers<[1], [0], [0], [1], [0, 0, 1, 1], [], []>} : vector<16x32xbf16>, vector<32x128xbf16>, vector<16x128xf32> -> vector<16x128xf32>
    %54 = arith.addf %31, %53 : vector<16x128xf32>
    %55 = vector.extract_strided_slice %7 {offsets = [0, 64], sizes = [16, 32], strides = [1, 1]} : vector<32x384xf32> to vector<16x32xf32>
    %56 = arith.truncf %55 : vector<16x32xf32> to vector<16x32xbf16>
    %57 = vector.extract_strided_slice %7 {offsets = [0, 192], sizes = [16, 32], strides = [1, 1]} : vector<32x384xf32> to vector<16x32xf32>
    %58 = arith.truncf %57 : vector<16x32xf32> to vector<16x32xbf16>
    %59 = vector.extract_strided_slice %7 {offsets = [0, 320], sizes = [16, 32], strides = [1, 1]} : vector<32x384xf32> to vector<16x32xf32>
    %60 = arith.truncf %59 : vector<16x32xf32> to vector<16x32xbf16>
    %cst_20 = arith.constant dense<0.000000e+00> : vector<16x16xf32>
    %61 = tpu.matmul %56, %58, %cst_20 {dimension_numbers = #tpu.dot_dimension_numbers<[1], [1], [0], [0], [0, 0, 1, 0], [], []>} : vector<16x32xbf16>, vector<16x32xbf16>, vector<16x16xf32> -> vector<16x16xf32>
    %cst_21 = arith.constant dense<0xFF800000> : vector<16xf32>
    %62 = vector.multi_reduction <maximumf>, %61, %cst_21 [1] : vector<16x16xf32> to vector<16xf32>
    %63 = vector.shape_cast %62 : vector<16xf32> to vector<16x1xf32>
    %64 = vector.broadcast %63 : vector<16x1xf32> to vector<16x16xf32>
    %65 = arith.subf %61, %64 : vector<16x16xf32>
    %66 = math.exp %65 : vector<16x16xf32>
    %cst_22 = arith.constant dense<0.000000e+00> : vector<16xf32>
    %67 = vector.multi_reduction <add>, %66, %cst_22 [1] : vector<16x16xf32> to vector<16xf32>
    %68 = vector.shape_cast %67 : vector<16xf32> to vector<16x1xf32>
    %69 = tpu.reciprocal %68 {approx = true} : vector<16x1xf32> -> vector<16x1xf32>
    %70 = vector.broadcast %69 : vector<16x1xf32> to vector<16x16xf32>
    %71 = arith.mulf %66, %70 : vector<16x16xf32>
    %72 = arith.truncf %71 : vector<16x16xf32> to vector<16x16xbf16>
    %cst_23 = arith.constant dense<0.000000e+00> : vector<16x32xf32>
    %73 = tpu.matmul %72, %60, %cst_23 {dimension_numbers = #tpu.dot_dimension_numbers<[1], [0], [0], [1], [0, 0, 1, 1], [], []>} : vector<16x16xbf16>, vector<16x32xbf16>, vector<16x32xf32> -> vector<16x32xf32>
    %74 = arith.truncf %73 : vector<16x32xf32> to vector<16x32xbf16>
    %c64 = arith.constant 64 : index
    %c0_24 = arith.constant 0 : index
    %75 = vector.load %arg4[%c64, %c0_24] : memref<128x128xbf16, #tpu.memory_space<vmem>>, vector<32x128xbf16>
    %cst_25 = arith.constant dense<0.000000e+00> : vector<16x128xf32>
    %76 = tpu.matmul %74, %75, %cst_25 {dimension_numbers = #tpu.dot_dimension_numbers<[1], [0], [0], [1], [0, 0, 1, 1], [], []>} : vector<16x32xbf16>, vector<32x128xbf16>, vector<16x128xf32> -> vector<16x128xf32>
    %77 = arith.addf %54, %76 : vector<16x128xf32>
    %78 = vector.extract_strided_slice %7 {offsets = [0, 96], sizes = [16, 32], strides = [1, 1]} : vector<32x384xf32> to vector<16x32xf32>
    %79 = arith.truncf %78 : vector<16x32xf32> to vector<16x32xbf16>
    %80 = vector.extract_strided_slice %7 {offsets = [0, 224], sizes = [16, 32], strides = [1, 1]} : vector<32x384xf32> to vector<16x32xf32>
    %81 = arith.truncf %80 : vector<16x32xf32> to vector<16x32xbf16>
    %82 = vector.extract_strided_slice %7 {offsets = [0, 352], sizes = [16, 32], strides = [1, 1]} : vector<32x384xf32> to vector<16x32xf32>
    %83 = arith.truncf %82 : vector<16x32xf32> to vector<16x32xbf16>
    %cst_26 = arith.constant dense<0.000000e+00> : vector<16x16xf32>
    %84 = tpu.matmul %79, %81, %cst_26 {dimension_numbers = #tpu.dot_dimension_numbers<[1], [1], [0], [0], [0, 0, 1, 0], [], []>} : vector<16x32xbf16>, vector<16x32xbf16>, vector<16x16xf32> -> vector<16x16xf32>
    %cst_27 = arith.constant dense<0xFF800000> : vector<16xf32>
    %85 = vector.multi_reduction <maximumf>, %84, %cst_27 [1] : vector<16x16xf32> to vector<16xf32>
    %86 = vector.shape_cast %85 : vector<16xf32> to vector<16x1xf32>
    %87 = vector.broadcast %86 : vector<16x1xf32> to vector<16x16xf32>
    %88 = arith.subf %84, %87 : vector<16x16xf32>
    %89 = math.exp %88 : vector<16x16xf32>
    %cst_28 = arith.constant dense<0.000000e+00> : vector<16xf32>
    %90 = vector.multi_reduction <add>, %89, %cst_28 [1] : vector<16x16xf32> to vector<16xf32>
    %91 = vector.shape_cast %90 : vector<16xf32> to vector<16x1xf32>
    %92 = tpu.reciprocal %91 {approx = true} : vector<16x1xf32> -> vector<16x1xf32>
    %93 = vector.broadcast %92 : vector<16x1xf32> to vector<16x16xf32>
    %94 = arith.mulf %89, %93 : vector<16x16xf32>
    %95 = arith.truncf %94 : vector<16x16xf32> to vector<16x16xbf16>
    %cst_29 = arith.constant dense<0.000000e+00> : vector<16x32xf32>
    %96 = tpu.matmul %95, %83, %cst_29 {dimension_numbers = #tpu.dot_dimension_numbers<[1], [0], [0], [1], [0, 0, 1, 1], [], []>} : vector<16x16xbf16>, vector<16x32xbf16>, vector<16x32xf32> -> vector<16x32xf32>
    %97 = arith.truncf %96 : vector<16x32xf32> to vector<16x32xbf16>
    %c96 = arith.constant 96 : index
    %c0_30 = arith.constant 0 : index
    %98 = vector.load %arg4[%c96, %c0_30] : memref<128x128xbf16, #tpu.memory_space<vmem>>, vector<32x128xbf16>
    %cst_31 = arith.constant dense<0.000000e+00> : vector<16x128xf32>
    %99 = tpu.matmul %97, %98, %cst_31 {dimension_numbers = #tpu.dot_dimension_numbers<[1], [0], [0], [1], [0, 0, 1, 1], [], []>} : vector<16x32xbf16>, vector<32x128xbf16>, vector<16x128xf32> -> vector<16x128xf32>
    %100 = arith.addf %77, %99 : vector<16x128xf32>
    %cst_32 = arith.constant 0.000000e+00 : f32
    %101 = vector.broadcast %cst_32 : f32 to vector<16x128xf32>
    %102 = vector.extract_strided_slice %7 {offsets = [16, 0], sizes = [16, 32], strides = [1, 1]} : vector<32x384xf32> to vector<16x32xf32>
    %103 = arith.truncf %102 : vector<16x32xf32> to vector<16x32xbf16>
    %104 = vector.extract_strided_slice %7 {offsets = [16, 128], sizes = [16, 32], strides = [1, 1]} : vector<32x384xf32> to vector<16x32xf32>
    %105 = arith.truncf %104 : vector<16x32xf32> to vector<16x32xbf16>
    %106 = vector.extract_strided_slice %7 {offsets = [16, 256], sizes = [16, 32], strides = [1, 1]} : vector<32x384xf32> to vector<16x32xf32>
    %107 = arith.truncf %106 : vector<16x32xf32> to vector<16x32xbf16>
    %cst_33 = arith.constant dense<0.000000e+00> : vector<16x16xf32>
    %108 = tpu.matmul %103, %105, %cst_33 {dimension_numbers = #tpu.dot_dimension_numbers<[1], [1], [0], [0], [0, 0, 1, 0], [], []>} : vector<16x32xbf16>, vector<16x32xbf16>, vector<16x16xf32> -> vector<16x16xf32>
    %cst_34 = arith.constant dense<0xFF800000> : vector<16xf32>
    %109 = vector.multi_reduction <maximumf>, %108, %cst_34 [1] : vector<16x16xf32> to vector<16xf32>
    %110 = vector.shape_cast %109 : vector<16xf32> to vector<16x1xf32>
    %111 = vector.broadcast %110 : vector<16x1xf32> to vector<16x16xf32>
    %112 = arith.subf %108, %111 : vector<16x16xf32>
    %113 = math.exp %112 : vector<16x16xf32>
    %cst_35 = arith.constant dense<0.000000e+00> : vector<16xf32>
    %114 = vector.multi_reduction <add>, %113, %cst_35 [1] : vector<16x16xf32> to vector<16xf32>
    %115 = vector.shape_cast %114 : vector<16xf32> to vector<16x1xf32>
    %116 = tpu.reciprocal %115 {approx = true} : vector<16x1xf32> -> vector<16x1xf32>
    %117 = vector.broadcast %116 : vector<16x1xf32> to vector<16x16xf32>
    %118 = arith.mulf %113, %117 : vector<16x16xf32>
    %119 = arith.truncf %118 : vector<16x16xf32> to vector<16x16xbf16>
    %cst_36 = arith.constant dense<0.000000e+00> : vector<16x32xf32>
    %120 = tpu.matmul %119, %107, %cst_36 {dimension_numbers = #tpu.dot_dimension_numbers<[1], [0], [0], [1], [0, 0, 1, 1], [], []>} : vector<16x16xbf16>, vector<16x32xbf16>, vector<16x32xf32> -> vector<16x32xf32>
    %121 = arith.truncf %120 : vector<16x32xf32> to vector<16x32xbf16>
    %c0_37 = arith.constant 0 : index
    %c0_38 = arith.constant 0 : index
    %122 = vector.load %arg4[%c0_37, %c0_38] : memref<128x128xbf16, #tpu.memory_space<vmem>>, vector<32x128xbf16>
    %cst_39 = arith.constant dense<0.000000e+00> : vector<16x128xf32>
    %123 = tpu.matmul %121, %122, %cst_39 {dimension_numbers = #tpu.dot_dimension_numbers<[1], [0], [0], [1], [0, 0, 1, 1], [], []>} : vector<16x32xbf16>, vector<32x128xbf16>, vector<16x128xf32> -> vector<16x128xf32>
    %124 = arith.addf %101, %123 : vector<16x128xf32>
    %125 = vector.extract_strided_slice %7 {offsets = [16, 32], sizes = [16, 32], strides = [1, 1]} : vector<32x384xf32> to vector<16x32xf32>
    %126 = arith.truncf %125 : vector<16x32xf32> to vector<16x32xbf16>
    %127 = vector.extract_strided_slice %7 {offsets = [16, 160], sizes = [16, 32], strides = [1, 1]} : vector<32x384xf32> to vector<16x32xf32>
    %128 = arith.truncf %127 : vector<16x32xf32> to vector<16x32xbf16>
    %129 = vector.extract_strided_slice %7 {offsets = [16, 288], sizes = [16, 32], strides = [1, 1]} : vector<32x384xf32> to vector<16x32xf32>
    %130 = arith.truncf %129 : vector<16x32xf32> to vector<16x32xbf16>
    %cst_40 = arith.constant dense<0.000000e+00> : vector<16x16xf32>
    %131 = tpu.matmul %126, %128, %cst_40 {dimension_numbers = #tpu.dot_dimension_numbers<[1], [1], [0], [0], [0, 0, 1, 0], [], []>} : vector<16x32xbf16>, vector<16x32xbf16>, vector<16x16xf32> -> vector<16x16xf32>
    %cst_41 = arith.constant dense<0xFF800000> : vector<16xf32>
    %132 = vector.multi_reduction <maximumf>, %131, %cst_41 [1] : vector<16x16xf32> to vector<16xf32>
    %133 = vector.shape_cast %132 : vector<16xf32> to vector<16x1xf32>
    %134 = vector.broadcast %133 : vector<16x1xf32> to vector<16x16xf32>
    %135 = arith.subf %131, %134 : vector<16x16xf32>
    %136 = math.exp %135 : vector<16x16xf32>
    %cst_42 = arith.constant dense<0.000000e+00> : vector<16xf32>
    %137 = vector.multi_reduction <add>, %136, %cst_42 [1] : vector<16x16xf32> to vector<16xf32>
    %138 = vector.shape_cast %137 : vector<16xf32> to vector<16x1xf32>
    %139 = tpu.reciprocal %138 {approx = true} : vector<16x1xf32> -> vector<16x1xf32>
    %140 = vector.broadcast %139 : vector<16x1xf32> to vector<16x16xf32>
    %141 = arith.mulf %136, %140 : vector<16x16xf32>
    %142 = arith.truncf %141 : vector<16x16xf32> to vector<16x16xbf16>
    %cst_43 = arith.constant dense<0.000000e+00> : vector<16x32xf32>
    %143 = tpu.matmul %142, %130, %cst_43 {dimension_numbers = #tpu.dot_dimension_numbers<[1], [0], [0], [1], [0, 0, 1, 1], [], []>} : vector<16x16xbf16>, vector<16x32xbf16>, vector<16x32xf32> -> vector<16x32xf32>
    %144 = arith.truncf %143 : vector<16x32xf32> to vector<16x32xbf16>
    %c32_44 = arith.constant 32 : index
    %c0_45 = arith.constant 0 : index
    %145 = vector.load %arg4[%c32_44, %c0_45] : memref<128x128xbf16, #tpu.memory_space<vmem>>, vector<32x128xbf16>
    %cst_46 = arith.constant dense<0.000000e+00> : vector<16x128xf32>
    %146 = tpu.matmul %144, %145, %cst_46 {dimension_numbers = #tpu.dot_dimension_numbers<[1], [0], [0], [1], [0, 0, 1, 1], [], []>} : vector<16x32xbf16>, vector<32x128xbf16>, vector<16x128xf32> -> vector<16x128xf32>
    %147 = arith.addf %124, %146 : vector<16x128xf32>
    %148 = vector.extract_strided_slice %7 {offsets = [16, 64], sizes = [16, 32], strides = [1, 1]} : vector<32x384xf32> to vector<16x32xf32>
    %149 = arith.truncf %148 : vector<16x32xf32> to vector<16x32xbf16>
    %150 = vector.extract_strided_slice %7 {offsets = [16, 192], sizes = [16, 32], strides = [1, 1]} : vector<32x384xf32> to vector<16x32xf32>
    %151 = arith.truncf %150 : vector<16x32xf32> to vector<16x32xbf16>
    %152 = vector.extract_strided_slice %7 {offsets = [16, 320], sizes = [16, 32], strides = [1, 1]} : vector<32x384xf32> to vector<16x32xf32>
    %153 = arith.truncf %152 : vector<16x32xf32> to vector<16x32xbf16>
    %cst_47 = arith.constant dense<0.000000e+00> : vector<16x16xf32>
    %154 = tpu.matmul %149, %151, %cst_47 {dimension_numbers = #tpu.dot_dimension_numbers<[1], [1], [0], [0], [0, 0, 1, 0], [], []>} : vector<16x32xbf16>, vector<16x32xbf16>, vector<16x16xf32> -> vector<16x16xf32>
    %cst_48 = arith.constant dense<0xFF800000> : vector<16xf32>
    %155 = vector.multi_reduction <maximumf>, %154, %cst_48 [1] : vector<16x16xf32> to vector<16xf32>
    %156 = vector.shape_cast %155 : vector<16xf32> to vector<16x1xf32>
    %157 = vector.broadcast %156 : vector<16x1xf32> to vector<16x16xf32>
    %158 = arith.subf %154, %157 : vector<16x16xf32>
    %159 = math.exp %158 : vector<16x16xf32>
    %cst_49 = arith.constant dense<0.000000e+00> : vector<16xf32>
    %160 = vector.multi_reduction <add>, %159, %cst_49 [1] : vector<16x16xf32> to vector<16xf32>
    %161 = vector.shape_cast %160 : vector<16xf32> to vector<16x1xf32>
    %162 = tpu.reciprocal %161 {approx = true} : vector<16x1xf32> -> vector<16x1xf32>
    %163 = vector.broadcast %162 : vector<16x1xf32> to vector<16x16xf32>
    %164 = arith.mulf %159, %163 : vector<16x16xf32>
    %165 = arith.truncf %164 : vector<16x16xf32> to vector<16x16xbf16>
    %cst_50 = arith.constant dense<0.000000e+00> : vector<16x32xf32>
    %166 = tpu.matmul %165, %153, %cst_50 {dimension_numbers = #tpu.dot_dimension_numbers<[1], [0], [0], [1], [0, 0, 1, 1], [], []>} : vector<16x16xbf16>, vector<16x32xbf16>, vector<16x32xf32> -> vector<16x32xf32>
    %167 = arith.truncf %166 : vector<16x32xf32> to vector<16x32xbf16>
    %c64_51 = arith.constant 64 : index
    %c0_52 = arith.constant 0 : index
    %168 = vector.load %arg4[%c64_51, %c0_52] : memref<128x128xbf16, #tpu.memory_space<vmem>>, vector<32x128xbf16>
    %cst_53 = arith.constant dense<0.000000e+00> : vector<16x128xf32>
    %169 = tpu.matmul %167, %168, %cst_53 {dimension_numbers = #tpu.dot_dimension_numbers<[1], [0], [0], [1], [0, 0, 1, 1], [], []>} : vector<16x32xbf16>, vector<32x128xbf16>, vector<16x128xf32> -> vector<16x128xf32>
    %170 = arith.addf %147, %169 : vector<16x128xf32>
    %171 = vector.extract_strided_slice %7 {offsets = [16, 96], sizes = [16, 32], strides = [1, 1]} : vector<32x384xf32> to vector<16x32xf32>
    %172 = arith.truncf %171 : vector<16x32xf32> to vector<16x32xbf16>
    %173 = vector.extract_strided_slice %7 {offsets = [16, 224], sizes = [16, 32], strides = [1, 1]} : vector<32x384xf32> to vector<16x32xf32>
    %174 = arith.truncf %173 : vector<16x32xf32> to vector<16x32xbf16>
    %175 = vector.extract_strided_slice %7 {offsets = [16, 352], sizes = [16, 32], strides = [1, 1]} : vector<32x384xf32> to vector<16x32xf32>
    %176 = arith.truncf %175 : vector<16x32xf32> to vector<16x32xbf16>
    %cst_54 = arith.constant dense<0.000000e+00> : vector<16x16xf32>
    %177 = tpu.matmul %172, %174, %cst_54 {dimension_numbers = #tpu.dot_dimension_numbers<[1], [1], [0], [0], [0, 0, 1, 0], [], []>} : vector<16x32xbf16>, vector<16x32xbf16>, vector<16x16xf32> -> vector<16x16xf32>
    %cst_55 = arith.constant dense<0xFF800000> : vector<16xf32>
    %178 = vector.multi_reduction <maximumf>, %177, %cst_55 [1] : vector<16x16xf32> to vector<16xf32>
    %179 = vector.shape_cast %178 : vector<16xf32> to vector<16x1xf32>
    %180 = vector.broadcast %179 : vector<16x1xf32> to vector<16x16xf32>
    %181 = arith.subf %177, %180 : vector<16x16xf32>
    %182 = math.exp %181 : vector<16x16xf32>
    %cst_56 = arith.constant dense<0.000000e+00> : vector<16xf32>
    %183 = vector.multi_reduction <add>, %182, %cst_56 [1] : vector<16x16xf32> to vector<16xf32>
    %184 = vector.shape_cast %183 : vector<16xf32> to vector<16x1xf32>
    %185 = tpu.reciprocal %184 {approx = true} : vector<16x1xf32> -> vector<16x1xf32>
    %186 = vector.broadcast %185 : vector<16x1xf32> to vector<16x16xf32>
    %187 = arith.mulf %182, %186 : vector<16x16xf32>
    %188 = arith.truncf %187 : vector<16x16xf32> to vector<16x16xbf16>
    %cst_57 = arith.constant dense<0.000000e+00> : vector<16x32xf32>
    %189 = tpu.matmul %188, %176, %cst_57 {dimension_numbers = #tpu.dot_dimension_numbers<[1], [0], [0], [1], [0, 0, 1, 1], [], []>} : vector<16x16xbf16>, vector<16x32xbf16>, vector<16x32xf32> -> vector<16x32xf32>
    %190 = arith.truncf %189 : vector<16x32xf32> to vector<16x32xbf16>
    %c96_58 = arith.constant 96 : index
    %c0_59 = arith.constant 0 : index
    %191 = vector.load %arg4[%c96_58, %c0_59] : memref<128x128xbf16, #tpu.memory_space<vmem>>, vector<32x128xbf16>
    %cst_60 = arith.constant dense<0.000000e+00> : vector<16x128xf32>
    %192 = tpu.matmul %190, %191, %cst_60 {dimension_numbers = #tpu.dot_dimension_numbers<[1], [0], [0], [1], [0, 0, 1, 1], [], []>} : vector<16x32xbf16>, vector<32x128xbf16>, vector<16x128xf32> -> vector<16x128xf32>
    %193 = arith.addf %170, %192 : vector<16x128xf32>
    %194 = tpu.concatenate %100, %193 in 0 : vector<16x128xf32>, vector<16x128xf32> -> vector<32x128xf32>
    %c0_61 = arith.constant 0 : index
    %c0_62 = arith.constant 0 : index
    %195 = vector.load %arg5[%c0_61, %c0_62] : memref<1x128xf32, #tpu.memory_space<vmem>>, vector<1x128xf32>
    %196 = vector.broadcast %195 : vector<1x128xf32> to vector<32x128xf32>
    %197 = arith.addf %194, %196 : vector<32x128xf32>
    %198 = arith.addf %1, %197 : vector<32x128xf32>
    %c0_63 = arith.constant 0 : index
    %c0_64 = arith.constant 0 : index
    %199 = vector.load %arg6[%c0_63, %c0_64] : memref<1x128xf32, #tpu.memory_space<vmem>>, vector<1x128xf32>
    %c0_65 = arith.constant 0 : index
    %c0_66 = arith.constant 0 : index
    %200 = vector.load %arg7[%c0_65, %c0_66] : memref<1x128xf32, #tpu.memory_space<vmem>>, vector<1x128xf32>
    %cst_67 = arith.constant dense<0.000000e+00> : vector<32xf32>
    %201 = vector.multi_reduction <add>, %198, %cst_67 [1] : vector<32x128xf32> to vector<32xf32>
    %202 = vector.shape_cast %201 : vector<32xf32> to vector<32x1xf32>
    %cst_68 = arith.constant 1.280000e+02 : f32
    %203 = vector.broadcast %cst_68 : f32 to vector<32x1xf32>
    %204 = arith.divf %202, %203 : vector<32x1xf32>
    %205 = vector.broadcast %204 : vector<32x1xf32> to vector<32x128xf32>
    %206 = arith.subf %198, %205 : vector<32x128xf32>
    %207 = arith.mulf %206, %206 : vector<32x128xf32>
    %cst_69 = arith.constant dense<0.000000e+00> : vector<32xf32>
    %208 = vector.multi_reduction <add>, %207, %cst_69 [1] : vector<32x128xf32> to vector<32xf32>
    %209 = vector.shape_cast %208 : vector<32xf32> to vector<32x1xf32>
    %cst_70 = arith.constant 1.280000e+02 : f32
    %210 = vector.broadcast %cst_70 : f32 to vector<32x1xf32>
    %211 = arith.divf %209, %210 : vector<32x1xf32>
    %cst_71 = arith.constant 9.99999974E-6 : f32
    %212 = vector.broadcast %cst_71 : f32 to vector<32x1xf32>
    %213 = arith.addf %211, %212 : vector<32x1xf32>
    %214 = math.rsqrt %213 : vector<32x1xf32>
    %215 = vector.broadcast %214 : vector<32x1xf32> to vector<32x128xf32>
    %216 = arith.mulf %206, %215 : vector<32x128xf32>
    %217 = vector.broadcast %199 : vector<1x128xf32> to vector<32x128xf32>
    %218 = arith.mulf %216, %217 : vector<32x128xf32>
    %219 = vector.broadcast %200 : vector<1x128xf32> to vector<32x128xf32>
    %220 = arith.addf %218, %219 : vector<32x128xf32>
    %221 = arith.truncf %220 : vector<32x128xf32> to vector<32x128xbf16>
    %c0_72 = arith.constant 0 : index
    %c0_73 = arith.constant 0 : index
    %222 = vector.load %arg8[%c0_72, %c0_73] : memref<128x512xbf16, #tpu.memory_space<vmem>>, vector<128x512xbf16>
    %cst_74 = arith.constant dense<0.000000e+00> : vector<32x512xf32>
    %223 = tpu.matmul %221, %222, %cst_74 {dimension_numbers = #tpu.dot_dimension_numbers<[1], [0], [0], [1], [0, 0, 1, 1], [], []>} : vector<32x128xbf16>, vector<128x512xbf16>, vector<32x512xf32> -> vector<32x512xf32>
    %c0_75 = arith.constant 0 : index
    %c0_76 = arith.constant 0 : index
    %224 = vector.load %arg9[%c0_75, %c0_76] : memref<1x512xf32, #tpu.memory_space<vmem>>, vector<1x512xf32>
    %225 = vector.broadcast %224 : vector<1x512xf32> to vector<32x512xf32>
    %226 = arith.addf %223, %225 : vector<32x512xf32>
    %cst_77 = arith.constant 5.000000e-01 : f32
    %227 = vector.broadcast %cst_77 : f32 to vector<32x512xf32>
    %228 = arith.mulf %227, %226 : vector<32x512xf32>
    %cst_78 = arith.constant 4.471500e-02 : f32
    %229 = vector.broadcast %cst_78 : f32 to vector<32x512xf32>
    %230 = arith.mulf %229, %226 : vector<32x512xf32>
    %231 = arith.mulf %230, %226 : vector<32x512xf32>
    %232 = arith.mulf %231, %226 : vector<32x512xf32>
    %233 = arith.addf %226, %232 : vector<32x512xf32>
    %cst_79 = arith.constant 0.797884583 : f32
    %234 = vector.broadcast %cst_79 : f32 to vector<32x512xf32>
    %235 = arith.mulf %234, %233 : vector<32x512xf32>
    %236 = math.tanh %235 : vector<32x512xf32>
    %cst_80 = arith.constant 1.000000e+00 : f32
    %237 = vector.broadcast %cst_80 : f32 to vector<32x512xf32>
    %238 = arith.addf %237, %236 : vector<32x512xf32>
    %239 = arith.mulf %228, %238 : vector<32x512xf32>
    %240 = arith.truncf %239 : vector<32x512xf32> to vector<32x512xbf16>
    %c0_81 = arith.constant 0 : index
    %c0_82 = arith.constant 0 : index
    %241 = vector.load %arg10[%c0_81, %c0_82] : memref<512x128xbf16, #tpu.memory_space<vmem>>, vector<512x128xbf16>
    %cst_83 = arith.constant dense<0.000000e+00> : vector<32x128xf32>
    %242 = tpu.matmul %240, %241, %cst_83 {dimension_numbers = #tpu.dot_dimension_numbers<[1], [0], [0], [1], [0, 0, 1, 1], [], []>} : vector<32x512xbf16>, vector<512x128xbf16>, vector<32x128xf32> -> vector<32x128xf32>
    %c0_84 = arith.constant 0 : index
    %c0_85 = arith.constant 0 : index
    %243 = vector.load %arg11[%c0_84, %c0_85] : memref<1x128xf32, #tpu.memory_space<vmem>>, vector<1x128xf32>
    %244 = vector.broadcast %243 : vector<1x128xf32> to vector<32x128xf32>
    %245 = arith.addf %242, %244 : vector<32x128xf32>
    %246 = arith.addf %220, %245 : vector<32x128xf32>
    %c0_86 = arith.constant 0 : index
    %c0_87 = arith.constant 0 : index
    %247 = vector.load %arg12[%c0_86, %c0_87] : memref<1x128xf32, #tpu.memory_space<vmem>>, vector<1x128xf32>
    %c0_88 = arith.constant 0 : index
    %c0_89 = arith.constant 0 : index
    %248 = vector.load %arg13[%c0_88, %c0_89] : memref<1x128xf32, #tpu.memory_space<vmem>>, vector<1x128xf32>
    %cst_90 = arith.constant dense<0.000000e+00> : vector<32xf32>
    %249 = vector.multi_reduction <add>, %246, %cst_90 [1] : vector<32x128xf32> to vector<32xf32>
    %250 = vector.shape_cast %249 : vector<32xf32> to vector<32x1xf32>
    %cst_91 = arith.constant 1.280000e+02 : f32
    %251 = vector.broadcast %cst_91 : f32 to vector<32x1xf32>
    %252 = arith.divf %250, %251 : vector<32x1xf32>
    %253 = vector.broadcast %252 : vector<32x1xf32> to vector<32x128xf32>
    %254 = arith.subf %246, %253 : vector<32x128xf32>
    %255 = arith.mulf %254, %254 : vector<32x128xf32>
    %cst_92 = arith.constant dense<0.000000e+00> : vector<32xf32>
    %256 = vector.multi_reduction <add>, %255, %cst_92 [1] : vector<32x128xf32> to vector<32xf32>
    %257 = vector.shape_cast %256 : vector<32xf32> to vector<32x1xf32>
    %cst_93 = arith.constant 1.280000e+02 : f32
    %258 = vector.broadcast %cst_93 : f32 to vector<32x1xf32>
    %259 = arith.divf %257, %258 : vector<32x1xf32>
    %cst_94 = arith.constant 9.99999974E-6 : f32
    %260 = vector.broadcast %cst_94 : f32 to vector<32x1xf32>
    %261 = arith.addf %259, %260 : vector<32x1xf32>
    %262 = math.rsqrt %261 : vector<32x1xf32>
    %263 = vector.broadcast %262 : vector<32x1xf32> to vector<32x128xf32>
    %264 = arith.mulf %254, %263 : vector<32x128xf32>
    %265 = vector.broadcast %247 : vector<1x128xf32> to vector<32x128xf32>
    %266 = arith.mulf %264, %265 : vector<32x128xf32>
    %267 = vector.broadcast %248 : vector<1x128xf32> to vector<32x128xf32>
    %268 = arith.addf %266, %267 : vector<32x128xf32>
    %269 = vector.shape_cast %268 : vector<32x128xf32> to vector<2x16x128xf32>
    %c0_95 = arith.constant 0 : index
    %c0_96 = arith.constant 0 : index
    %c0_97 = arith.constant 0 : index
    %270 = vector.load %arg14[%c0_95, %c0_96, %c0_97] : memref<2x16x128xf32, #tpu.memory_space<vmem>>, vector<2x16x128xf32>
    tpu.vector_store %arg14[%c0_95, %c0_96, %c0_97], %269 {strides = array<i32>} : memref<2x16x128xf32, #tpu.memory_space<vmem>>, vector<2x16x128xf32>,
    return
  }
  func.func @transform_0(%arg0: i32) -> (i32, i32, i32) {
    %c0_i32 = arith.constant 0 : i32
    %c0_i32_0 = arith.constant 0 : i32
    %c0_i32_1 = arith.constant 0 : i32
    return %arg0, %c0_i32, %c0_i32_0 : i32, i32, i32
  }
  func.func @transform_1(%arg0: i32) -> (i32, i32) {
    %c0_i32 = arith.constant 0 : i32
    %c0_i32_0 = arith.constant 0 : i32
    %c0_i32_1 = arith.constant 0 : i32
    return %c0_i32, %c0_i32_0 : i32, i32
  }
  func.func @transform_2(%arg0: i32) -> (i32, i32) {
    %c0_i32 = arith.constant 0 : i32
    %c0_i32_0 = arith.constant 0 : i32
    %c0_i32_1 = arith.constant 0 : i32
    return %c0_i32, %c0_i32_0 : i32, i32
  }
  func.func @transform_3(%arg0: i32) -> (i32, i32) {
    %c0_i32 = arith.constant 0 : i32
    %c0_i32_0 = arith.constant 0 : i32
    %c0_i32_1 = arith.constant 0 : i32
    return %c0_i32, %c0_i32_0 : i32, i32
  }
  func.func @transform_4(%arg0: i32) -> (i32, i32) {
    %c0_i32 = arith.constant 0 : i32
    %c0_i32_0 = arith.constant 0 : i32
    %c0_i32_1 = arith.constant 0 : i32
    return %c0_i32, %c0_i32_0 : i32, i32
  }
  func.func @transform_5(%arg0: i32) -> (i32, i32) {
    %c0_i32 = arith.constant 0 : i32
    %c0_i32_0 = arith.constant 0 : i32
    %c0_i32_1 = arith.constant 0 : i32
    return %c0_i32, %c0_i32_0 : i32, i32
  }
  func.func @transform_6(%arg0: i32) -> (i32, i32) {
    %c0_i32 = arith.constant 0 : i32
    %c0_i32_0 = arith.constant 0 : i32
    %c0_i32_1 = arith.constant 0 : i32
    return %c0_i32, %c0_i32_0 : i32, i32
  }
  func.func @transform_7(%arg0: i32) -> (i32, i32) {
    %c0_i32 = arith.constant 0 : i32
    %c0_i32_0 = arith.constant 0 : i32
    %c0_i32_1 = arith.constant 0 : i32
    return %c0_i32, %c0_i32_0 : i32, i32
  }
  func.func @transform_8(%arg0: i32) -> (i32, i32) {
    %c0_i32 = arith.constant 0 : i32
    %c0_i32_0 = arith.constant 0 : i32
    %c0_i32_1 = arith.constant 0 : i32
    return %c0_i32, %c0_i32_0 : i32, i32
  }
  func.func @transform_9(%arg0: i32) -> (i32, i32) {
    %c0_i32 = arith.constant 0 : i32
    %c0_i32_0 = arith.constant 0 : i32
    %c0_i32_1 = arith.constant 0 : i32
    return %c0_i32, %c0_i32_0 : i32, i32
  }
  func.func @transform_10(%arg0: i32) -> (i32, i32) {
    %c0_i32 = arith.constant 0 : i32
    %c0_i32_0 = arith.constant 0 : i32
    %c0_i32_1 = arith.constant 0 : i32
    return %c0_i32, %c0_i32_0 : i32, i32
  }
  func.func @transform_11(%arg0: i32) -> (i32, i32) {
    %c0_i32 = arith.constant 0 : i32
    %c0_i32_0 = arith.constant 0 : i32
    %c0_i32_1 = arith.constant 0 : i32
    return %c0_i32, %c0_i32_0 : i32, i32
  }
  func.func @transform_12(%arg0: i32) -> (i32, i32) {
    %c0_i32 = arith.constant 0 : i32
    %c0_i32_0 = arith.constant 0 : i32
    %c0_i32_1 = arith.constant 0 : i32
    return %c0_i32, %c0_i32_0 : i32, i32
  }
  func.func @transform_13(%arg0: i32) -> (i32, i32, i32) {
    %c0_i32 = arith.constant 0 : i32
    %c0_i32_0 = arith.constant 0 : i32
    %c0_i32_1 = arith.constant 0 : i32
    return %arg0, %c0_i32, %c0_i32_0 : i32, i32, i32
  }
}

</mosaic_0001>

<llo_original>
// kernel: mul.9
$region0: #{mul.9}
  #allocation2 [shape = 's32[1]{0}', space=sflag, size = 0x4, scoped, tag = 'scoped memory for mul.9']
  %s0 = inlined_call_operand.hbm [shape: f32[1,384], index: 0, kind: input, shape index: {}]
  %s1 = inlined_call_operand.vmem [shape: f32[1,384], index: 1, kind: input, shape index: {}]
  %s2 = inlined_call_operand.vmem [shape: f32[1,384], index: 2, kind: output, shape index: {}]
  $region1: #{mul.9} parent=0
    #allocation0 [shape = 'u8[1536]{0}', space=vmem, size = 0x800, scoped, tag = 'operand span for operand 0']
    #allocation1 [shape = 's32[1]{0}', space=sflag, size = 0x4, scoped, tag = 'scoped memory for mul.9']
    %3 = vsyncpa [#allocation1], 0
    %s5 = ssub.s32 48, 48
    %6 = vsyncadd [#allocation1], %s5
    %s8 = sshll.u32 [#allocation0], 4
    %s9 = int_to_ptr.vmem [resolvable:$true] %s8
    %11 = dma.hbm_to_vmem [thread:$0]  %s0, 48, %s9, [#allocation1]
    %12 = dma.done [#allocation1], 48
    %v13 = vld [vmem:[#allocation0] sm:$0x1]
    %v14 = vld [vmem:[%s1] sm:$0x1]
    %15 = xla_tuple %v13, %v14
    %16 = xla_tuple %15
    %v17 = vmul.f32 %v13, %v14
    %18 = xla_tuple %v17
    %19 = vst [vmem:[%s2] sm:$0x1] %v17
    %s20 = scalar_lea.vmem [#allocation0], 1
    %v21 = vld [vmem:[%s20] sm:$0x1]
    %s22 = scalar_lea.vmem %s1, 1
    %v23 = vld [vmem:[%s22] sm:$0x1]
    %24 = xla_tuple %v21, %v23
    %25 = xla_tuple %24
    %v26 = vmul.f32 %v21, %v23
    %27 = xla_tuple %v26
    %s28 = scalar_lea.vmem %s2, 1
    %29 = vst [vmem:[%s28] sm:$0x1] %v26
    %s30 = scalar_lea.vmem [#allocation0], 2
    %v31 = vld [vmem:[%s30] sm:$0x1]
    %s32 = scalar_lea.vmem %s1, 2
    %v33 = vld [vmem:[%s32] sm:$0x1]
    %34 = xla_tuple %v31, %v33
    %35 = xla_tuple %34
    %v36 = vmul.f32 %v31, %v33
    %37 = xla_tuple %v36
    %s38 = scalar_lea.vmem %s2, 2
    %39 = vst [vmem:[%s38] sm:$0x1] %v36
    %40 = vsyncpa [#allocation1], 1

// kernel: encoder_layer.1
$region0: #{encoder_layer.1}
  #allocation0 [shape = 'u32[]', space=smem, size = 0x4, offset = 0x4, fixed_abs, tag = 'smem constant byte address 0x4 - core index']
  #allocation1 [shape = 'u32[144,128]{1,0:T(1,128)}', space=vmem, size = 0x12000, scoped, tag = 'internal scratch']
  %s0 = inlined_call_operand.vmem [shape: f32[2,16,128], index: 0, kind: input, shape index: {}]
  %s1 = inlined_call_operand.vmem [shape: bf16[128,384], index: 1, kind: input, shape index: {}]
  %s2 = inlined_call_operand.vmem [shape: f32[1,384], index: 2, kind: input, shape index: {}]
  %s3 = inlined_call_operand.vmem [shape: bf16[128,128], index: 3, kind: input, shape index: {}]
  %s4 = inlined_call_operand.vmem [shape: f32[1,128], index: 4, kind: input, shape index: {}]
  %s5 = inlined_call_operand.vmem [shape: f32[1,128], index: 5, kind: input, shape index: {}]
  %s6 = inlined_call_operand.vmem [shape: f32[1,128], index: 6, kind: input, shape index: {}]
  %s7 = inlined_call_operand.vmem [shape: bf16[128,512], index: 7, kind: input, shape index: {}]
  %s8 = inlined_call_operand.vmem [shape: f32[1,512], index: 8, kind: input, shape index: {}]
  %s9 = inlined_call_operand.vmem [shape: bf16[512,128], index: 9, kind: input, shape index: {}]
  %s10 = inlined_call_operand.vmem [shape: f32[1,128], index: 10, kind: input, shape index: {}]
  %s11 = inlined_call_operand.vmem [shape: f32[1,128], index: 11, kind: input, shape index: {}]
  %s12 = inlined_call_operand.vmem [shape: f32[1,128], index: 12, kind: input, shape index: {}]
  %s13 = inlined_call_operand.hbm [shape: f32[2,16,128], index: 13, kind: output, shape index: {}]
  %s14 = sld [smem:[#allocation0]]
  $region62: #{encoder_layer.1} parent=0
    _
  %s16 = ssub.s32 1, %s14
  %s17 = scalar_select 0, %s16, %s14
  $region1: #{encoder_layer.1} parent=0
    #allocation2 [shape = 'u8[16384]{0}', space=vmem, size = 0x4000, scoped, tag = 'output window, operand 0, single buffered']
    #allocation3 [shape = 's32[1]{0}', space=sflag, size = 0x4, scoped, tag = 'scoped memory for encoder_layer.1']
    %18 = vsyncpa [#allocation3], 0
    // Predicated region
    $region2: #{encoder_layer.1} parent=1 // pred_check
      _
    $region3: #{encoder_layer.1} parent=1 // pred_check_branch
      %20 = sbr.rel (0) target = $region5
    $region4: #{encoder_layer.1} parent=1 // pred_region
      _
    $region5: #{encoder_layer.1} parent=1 // pred_fallthru
      _
    // Predicated region
    $region6: #{encoder_layer.1} parent=1 // pred_check
      _
    $region7: #{encoder_layer.1} parent=1 // pred_check_branch
      %22 = sbr.rel (0) target = $region9
    $region8: #{encoder_layer.1} parent=1 // pred_region
      _
    $region9: #{encoder_layer.1} parent=1 // pred_fallthru
      _
    // Predicated region
    $region10: #{encoder_layer.1} parent=1 // pred_check
      _
    $region11: #{encoder_layer.1} parent=1 // pred_check_branch
      %24 = sbr.rel (0) target = $region13
    $region12: #{encoder_layer.1} parent=1 // pred_region
      _
    $region13: #{encoder_layer.1} parent=1 // pred_fallthru
      _
    // Predicated region
    $region14: #{encoder_layer.1} parent=1 // pred_check
      _
    $region15: #{encoder_layer.1} parent=1 // pred_check_branch
      %26 = sbr.rel (0) target = $region17
    $region16: #{encoder_layer.1} parent=1 // pred_region
      _
    $region17: #{encoder_layer.1} parent=1 // pred_fallthru
      _
    // Predicated region
    $region18: #{encoder_layer.1} parent=1 // pred_check
      _
    $region19: #{encoder_layer.1} parent=1 // pred_check_branch
      %28 = sbr.rel (0) target = $region21
    $region20: #{encoder_layer.1} parent=1 // pred_region
      _
    $region21: #{encoder_layer.1} parent=1 // pred_fallthru
      _
    // Predicated region
    $region22: #{encoder_layer.1} parent=1 // pred_check
      _
    $region23: #{encoder_layer.1} parent=1 // pred_check_branch
      %30 = sbr.rel (0) target = $region25
    $region24: #{encoder_layer.1} parent=1 // pred_region
      _
    $region25: #{encoder_layer.1} parent=1 // pred_fallthru
      _
    // Predicated region
    $region26: #{encoder_layer.1} parent=1 // pred_check
      _
    $region27: #{encoder_layer.1} parent=1 // pred_check_branch
      %32 = sbr.rel (0) target = $region29
    $region28: #{encoder_layer.1} parent=1 // pred_region
      _
    $region29: #{encoder_layer.1} parent=1 // pred_fallthru
      _
    // Predicated region
    $region30: #{encoder_layer.1} parent=1 // pred_check
      _
    $region31: #{encoder_layer.1} parent=1 // pred_check_branch
      %34 = sbr.rel (0) target = $region33
    $region32: #{encoder_layer.1} parent=1 // pred_region
      _
    $region33: #{encoder_layer.1} parent=1 // pred_fallthru
      _
    // Predicated region
    $region34: #{encoder_layer.1} parent=1 // pred_check
      _
    $region35: #{encoder_layer.1} parent=1 // pred_check_branch
      %36 = sbr.rel (0) target = $region37
    $region36: #{encoder_layer.1} parent=1 // pred_region
      _
    $region37: #{encoder_layer.1} parent=1 // pred_fallthru
      _
    // Predicated region
    $region38: #{encoder_layer.1} parent=1 // pred_check
      _
    $region39: #{encoder_layer.1} parent=1 // pred_check_branch
      %38 = sbr.rel (0) target = $region41
    $region40: #{encoder_layer.1} parent=1 // pred_region
      _
    $region41: #{encoder_layer.1} parent=1 // pred_fallthru
      _
    // Predicated region
    $region42: #{encoder_layer.1} parent=1 // pred_check
      _
    $region43: #{encoder_layer.1} parent=1 // pred_check_branch
      %40 = sbr.rel (0) target = $region45
    $region44: #{encoder_layer.1} parent=1 // pred_region
      _
    $region45: #{encoder_layer.1} parent=1 // pred_fallthru
      _
    // Predicated region
    $region46: #{encoder_layer.1} parent=1 // pred_check
      _
    $region47: #{encoder_layer.1} parent=1 // pred_check_branch
      %42 = sbr.rel (0) target = $region49
    $region48: #{encoder_layer.1} parent=1 // pred_region
      _
    $region49: #{encoder_layer.1} parent=1 // pred_fallthru
      _
    // Predicated region
    $region50: #{encoder_layer.1} parent=1 // pred_check
      _
    $region51: #{encoder_layer.1} parent=1 // pred_check_branch
      %44 = sbr.rel (0) target = $region53
    $region52: #{encoder_layer.1} parent=1 // pred_region
      _
    $region53: #{encoder_layer.1} parent=1 // pred_fallthru
      _
    %v46 = vld [vmem:[%s0] sm:$0xff]
    %v47 = vld [vmem:[%s0 + $0x8] sm:$0xff]
    %v48 = vld [vmem:[%s0 + $0x10] sm:$0xff]
    %v49 = vld [vmem:[%s0 + $0x18] sm:$0xff]
    %v50 = vpack.c.bf16 %v47, %v46
    %v51 = vpack.c.bf16 %v49, %v48
    %v52 = vld [vmem:[%s1] sm:$0xff]
    %v53 = vld [vmem:[%s1 + $0x8] sm:$0xf]
    %v54 = vld [vmem:[%s1 + $0xc] sm:$0xff]
    %v55 = vld [vmem:[%s1 + $0x14] sm:$0xf]
    %v56 = vld [vmem:[%s1 + $0x18] sm:$0xff]
    %v57 = vld [vmem:[%s1 + $0x20] sm:$0xf]
    %v58 = vld [vmem:[%s1 + $0x24] sm:$0xff]
    %v59 = vld [vmem:[%s1 + $0x2c] sm:$0xf]
    %v60 = vld [vmem:[%s1 + $0x30] sm:$0xff]
    %v61 = vld [vmem:[%s1 + $0x38] sm:$0xf]
    %v62 = vld [vmem:[%s1 + $0x3c] sm:$0xff]
    %v63 = vld [vmem:[%s1 + $0x44] sm:$0xf]
    %v64 = vld [vmem:[%s1 + $0x48] sm:$0xff]
    %v65 = vld [vmem:[%s1 + $0x50] sm:$0xf]
    %v66 = vld [vmem:[%s1 + $0x54] sm:$0xff]
    %v67 = vld [vmem:[%s1 + $0x5c] sm:$0xf]
    %v68 = vld [vmem:[%s1 + $0x60] sm:$0xff]
    %v69 = vld [vmem:[%s1 + $0x68] sm:$0xf]
    %v70 = vld [vmem:[%s1 + $0x6c] sm:$0xff]
    %v71 = vld [vmem:[%s1 + $0x74] sm:$0xf]
    %v72 = vld [vmem:[%s1 + $0x78] sm:$0xff]
    %v73 = vld [vmem:[%s1 + $0x80] sm:$0xf]
    %v74 = vld [vmem:[%s1 + $0x84] sm:$0xff]
    %v75 = vld [vmem:[%s1 + $0x8c] sm:$0xf]
    %v76 = vld [vmem:[%s1 + $0x90] sm:$0xff]
    %v77 = vld [vmem:[%s1 + $0x98] sm:$0xf]
    %v78 = vld [vmem:[%s1 + $0x9c] sm:$0xff]
    %v79 = vld [vmem:[%s1 + $0xa4] sm:$0xf]
    %v80 = vld [vmem:[%s1 + $0xa8] sm:$0xff]
    %v81 = vld [vmem:[%s1 + $0xb0] sm:$0xf]
    %v82 = vld [vmem:[%s1 + $0xb4] sm:$0xff]
    %v83 = vld [vmem:[%s1 + $0xbc] sm:$0xf]
    %v84 = vld [vmem:[%s2] sm:$0x7]
    %v86 = vlaneseq
    %v87 = vshrl.u32 %v86, 7
    %v88 = vsub.s32 0, %v87
    %v89 = vrot.slane %v84, %v88
    %v90 = vlaneseq
    %v91 = vshrl.u32 %v90, 7
    %v92 = vsub.s32 1, %v91
    %v93 = vrot.slane %v84, %v92
    %v94 = vlaneseq
    %v95 = vshrl.u32 %v94, 7
    %v96 = vsub.s32 2, %v95
    %v97 = vrot.slane %v84, %v96
    %v133 = vunpack.c.l.b16 %v52
    %v134 = vunpack.c.h.b16 %v52
    %v135 = vunpack.c.l.b16 %v53
    %v136 = vunpack.c.l.b16 %v54
    %v137 = vunpack.c.h.b16 %v54
    %v138 = vunpack.c.l.b16 %v55
    %v139 = vunpack.c.l.b16 %v56
    %v140 = vunpack.c.h.b16 %v56
    %v141 = vunpack.c.l.b16 %v57
    %v142 = vunpack.c.l.b16 %v58
    %v143 = vunpack.c.h.b16 %v58
    %v144 = vunpack.c.l.b16 %v59
    %v145 = vunpack.c.l.b16 %v60
    %v146 = vunpack.c.h.b16 %v60
    %v147 = vunpack.c.l.b16 %v61
    %v148 = vunpack.c.l.b16 %v62
    %v149 = vunpack.c.h.b16 %v62
    %v150 = vunpack.c.l.b16 %v63
    %v151 = vunpack.c.l.b16 %v64
    %v152 = vunpack.c.h.b16 %v64
    %v153 = vunpack.c.l.b16 %v65
    %v154 = vunpack.c.l.b16 %v66
    %v155 = vunpack.c.h.b16 %v66
    %v156 = vunpack.c.l.b16 %v67
    %v157 = vunpack.c.l.b16 %v68
    %v158 = vunpack.c.h.b16 %v68
    %v159 = vunpack.c.l.b16 %v69
    %v160 = vunpack.c.l.b16 %v70
    %v161 = vunpack.c.h.b16 %v70
    %v162 = vunpack.c.l.b16 %v71
    %v163 = vunpack.c.l.b16 %v72
    %v164 = vunpack.c.h.b16 %v72
    %v165 = vunpack.c.l.b16 %v73
    %v166 = vunpack.c.l.b16 %v74
    %v167 = vunpack.c.h.b16 %v74
    %v168 = vunpack.c.l.b16 %v75
    %v169 = vunpack.c.l.b16 %v76
    %v170 = vunpack.c.h.b16 %v76
    %v171 = vunpack.c.l.b16 %v77
    %v172 = vunpack.c.l.b16 %v78
    %v173 = vunpack.c.h.b16 %v78
    %v174 = vunpack.c.l.b16 %v79
    %v175 = vunpack.c.l.b16 %v80
    %v176 = vunpack.c.h.b16 %v80
    %v177 = vunpack.c.l.b16 %v81
    %v178 = vunpack.c.l.b16 %v82
    %v179 = vunpack.c.h.b16 %v82
    %v180 = vunpack.c.l.b16 %v83
    %v181 = vpack.c.b16 %v136, %v133
    %v182 = vpack.c.b16 %v137, %v134
    %v183 = vpack.c.b16 %v138, %v135
    %v184 = vpack.c.b16 %v142, %v139
    %v185 = vpack.c.b16 %v143, %v140
    %v186 = vpack.c.b16 %v144, %v141
    %v187 = vpack.c.b16 %v148, %v145
    %v188 = vpack.c.b16 %v149, %v146
    %v189 = vpack.c.b16 %v150, %v147
    %v190 = vpack.c.b16 %v154, %v151
    %v191 = vpack.c.b16 %v155, %v152
    %v192 = vpack.c.b16 %v156, %v153
    %v193 = vpack.c.b16 %v160, %v157
    %v194 = vpack.c.b16 %v161, %v158
    %v195 = vpack.c.b16 %v162, %v159
    %v196 = vpack.c.b16 %v166, %v163
    %v197 = vpack.c.b16 %v167, %v164
    %v198 = vpack.c.b16 %v168, %v165
    %v199 = vpack.c.b16 %v172, %v169
    %v200 = vpack.c.b16 %v173, %v170
    %v201 = vpack.c.b16 %v174, %v171
    %v202 = vpack.c.b16 %v178, %v175
    %v203 = vpack.c.b16 %v179, %v176
    %v204 = vpack.c.b16 %v180, %v177
    %229 = vmatprep.subr.bf16.mxu0 %v182
    %230 = vmatpush1.bf16.msra.mxu0 %v181
    %231 = vmatprep.subr.bf16.mxu0 %v185
    %232 = vmatpush1.bf16.msra.mxu0 %v184
    %233 = vmatprep.subr.bf16.mxu0 %v188
    %234 = vmatpush1.bf16.msra.mxu0 %v187
    %235 = vmatprep.subr.bf16.mxu0 %v191
    %236 = vmatpush1.bf16.msra.mxu0 %v190
    %237 = vmatprep.subr.bf16.mxu0 %v194
    %238 = vmatpush1.bf16.msra.mxu0 %v193
    %239 = vmatprep.subr.bf16.mxu0 %v197
    %240 = vmatpush1.bf16.msra.mxu0 %v196
    %241 = vmatprep.subr.bf16.mxu0 %v200
    %242 = vmatpush1.bf16.msra.mxu0 %v199
    %243 = vmatprep.subr.bf16.mxu0 %v203
    %244 = vmatpush1.bf16.msra.mxu0 %v202
    %245 = vmatprep.subr.bf16.mxu0 0
    %246 = vmatpush1.bf16.msra.mxu0 0
    %247 = vmatprep.subr.bf16.mxu0 0
    %248 = vmatpush1.bf16.msra.mxu0 0
    %249 = vmatprep.subr.bf16.mxu0 0
    %250 = vmatpush1.bf16.msra.mxu0 0
    %251 = vmatprep.subr.bf16.mxu0 0
    %252 = vmatpush1.bf16.msra.mxu0 0
    %253 = vmatprep.subr.bf16.mxu0 0
    %254 = vmatpush1.bf16.msra.mxu0 0
    %255 = vmatprep.subr.bf16.mxu0 0
    %256 = vmatpush1.bf16.msra.mxu0 0
    %257 = vmatprep.subr.bf16.mxu0 0
    %258 = vmatpush1.bf16.msra.mxu0 0
    %259 = vmatprep.subr.bf16.mxu0 0
    %260 = vmatpush1.bf16.msra.mxu0 0
    %261 = vmatprep.mubr.bf16.mxu0 0
    %262 = vmatmul.mubr.bf16.gmra.mrb[0].mxu0 %v50
    %v263 = vpop.f32.mrb[0].mxu0
    %v264 = vadd.f32 %v89, %v263
    %v265 = vpop.f32.mrb[0].mxu0
    %v266 = vadd.f32 %v93, %v265
    %v267 = vpop.f32.mrb[0].mxu0
    %v268 = vadd.f32 %v89, %v267
    %v269 = vpop.f32.mrb[0].mxu0
    %v270 = vadd.f32 %v93, %v269
    %271 = vmatprep.mubr.bf16.mxu0 0
    %272 = vmatmul.mubr.bf16.gmra.mrb[0].mxu0 %v51
    %v273 = vpop.f32.mrb[0].mxu0
    %v274 = vadd.f32 %v89, %v273
    %v275 = vpop.f32.mrb[0].mxu0
    %v276 = vadd.f32 %v93, %v275
    %v277 = vpop.f32.mrb[0].mxu0
    %v278 = vadd.f32 %v89, %v277
    %v279 = vpop.f32.mrb[0].mxu0
    %v280 = vadd.f32 %v93, %v279
    %281 = vdwg.mxu0
    %282 = vmatprep.subr.bf16.mxu0 0
    %283 = vmatpush1.bf16.msra.mxu0 %v183
    %284 = vmatprep.subr.bf16.mxu0 0
    %285 = vmatpush1.bf16.msra.mxu0 %v186
    %286 = vmatprep.subr.bf16.mxu0 0
    %287 = vmatpush1.bf16.msra.mxu0 %v189
    %288 = vmatprep.subr.bf16.mxu0 0
    %289 = vmatpush1.bf16.msra.mxu0 %v192
    %290 = vmatprep.subr.bf16.mxu0 0
    %291 = vmatpush1.bf16.msra.mxu0 %v195
    %292 = vmatprep.subr.bf16.mxu0 0
    %293 = vmatpush1.bf16.msra.mxu0 %v198
    %294 = vmatprep.subr.bf16.mxu0 0
    %295 = vmatpush1.bf16.msra.mxu0 %v201
    %296 = vmatprep.subr.bf16.mxu0 0
    %297 = vmatpush1.bf16.msra.mxu0 %v204
    %298 = vmatprep.subr.bf16.mxu0 0
    %299 = vmatpush1.bf16.msra.mxu0 0
    %300 = vmatprep.subr.bf16.mxu0 0
    %301 = vmatpush1.bf16.msra.mxu0 0
    %302 = vmatprep.subr.bf16.mxu0 0
    %303 = vmatpush1.bf16.msra.mxu0 0
    %304 = vmatprep.subr.bf16.mxu0 0
    %305 = vmatpush1.bf16.msra.mxu0 0
    %306 = vmatprep.subr.bf16.mxu0 0
    %307 = vmatpush1.bf16.msra.mxu0 0
    %308 = vmatprep.subr.bf16.mxu0 0
    %309 = vmatpush1.bf16.msra.mxu0 0
    %310 = vmatprep.subr.bf16.mxu0 0
    %311 = vmatpush1.bf16.msra.mxu0 0
    %312 = vmatprep.subr.bf16.mxu0 0
    %313 = vmatpush1.bf16.msra.mxu0 0
    %314 = vmatprep.mubr.bf16.mxu0 0
    %315 = vmatmul.mubr.bf16.gmra.mrb[0].mxu0 %v50
    %v316 = vpop.f32.mrb[0].mxu0
    %v317 = vadd.f32 %v97, %v316
    %v318 = vpop.f32.mrb[0].mxu0
    %v319 = vpop.f32.mrb[0].mxu0
    %v320 = vadd.f32 %v97, %v319
    %v321 = vpop.f32.mrb[0].mxu0
    %322 = vmatprep.mubr.bf16.mxu0 0
    %323 = vmatmul.mubr.bf16.gmra.mrb[0].mxu0 %v51
    %v324 = vpop.f32.mrb[0].mxu0
    %v325 = vadd.f32 %v97, %v324
    %v326 = vpop.f32.mrb[0].mxu0
    %v327 = vpop.f32.mrb[0].mxu0
    %v328 = vadd.f32 %v97, %v327
    %v329 = vpop.f32.mrb[0].mxu0
    %330 = vdwg.mxu0
    %v331 = vpack.c.bf16 %v268, %v264
    %v332 = vpack.c.bf16 %v270, %v266
    %v333 = vpack.c.bf16 %v320, %v317
    %vm334 = vcmask 261120
    %v336 = vsel %vm334, %v331, 0
    %v339 = vsel %vm334, %v332, 0
    %341 = vmatprep.subr.bf16.mxu0 0
    %342 = vmatpush1.bf16.xpose.msra.mxu0 %v339
    %343 = vmatprep.subr.bf16.mxu0 0
    %344 = vmatpush1.bf16.xpose.msra.mxu0 0
    %345 = vmatprep.subr.bf16.mxu0 0
    %346 = vmatpush1.bf16.xpose.msra.mxu0 0
    %347 = vmatprep.subr.bf16.mxu0 0
    %348 = vmatpush1.bf16.xpose.msra.mxu0 0
    %349 = vmatprep.subr.bf16.mxu0 0
    %350 = vmatpush1.bf16.xpose.msra.mxu0 0
    %351 = vmatprep.subr.bf16.mxu0 0
    %352 = vmatpush1.bf16.xpose.msra.mxu0 0
    %353 = vmatprep.subr.bf16.mxu0 0
    %354 = vmatpush1.bf16.xpose.msra.mxu0 0
    %355 = vmatprep.subr.bf16.mxu0 0
    %356 = vmatpush1.bf16.xpose.msra.mxu0 0
    %357 = vmatprep.subr.bf16.mxu0 0
    %358 = vmatpush1.bf16.xpose.msra.mxu0 0
    %359 = vmatprep.subr.bf16.mxu0 0
    %360 = vmatpush1.bf16.xpose.msra.mxu0 0
    %361 = vmatprep.subr.bf16.mxu0 0
    %362 = vmatpush1.bf16.xpose.msra.mxu0 0
    %363 = vmatprep.subr.bf16.mxu0 0
    %364 = vmatpush1.bf16.xpose.msra.mxu0 0
    %365 = vmatprep.subr.bf16.mxu0 0
    %366 = vmatpush1.bf16.xpose.msra.mxu0 0
    %367 = vmatprep.subr.bf16.mxu0 0
    %368 = vmatpush1.bf16.xpose.msra.mxu0 0
    %369 = vmatprep.subr.bf16.mxu0 0
    %370 = vmatpush1.bf16.xpose.msra.mxu0 0
    %371 = vmatprep.subr.bf16.mxu0 0
    %372 = vmatpush1.bf16.xpose.msra.mxu0 0
    %373 = vmatprep.mubr.bf16.mxu0 0
    %374 = vmatmul.mubr.bf16.gmra.mrb[0].mxu0 %v336
    %v375 = vpop.f32.mrb[0].mxu0
    %v376 = vadd.f32 0.0, %v375
    %v377 = vpop.f32.mrb[0].mxu0
    %v378 = vpop.f32.mrb[0].mxu0
    %v379 = vadd.f32 0.0, %v378
    %v380 = vpop.f32.mrb[0].mxu0
    %381 = vdwg.mxu0
    %vm382 = vcmask 130048
    %v383 = vsel %vm382, %v376, -inf
    %384 = vmax.xlane.f32.xlu0 %v383
    %v385 = vpop.xlane.xlu0 %384
    %v386 = vsel %vm382, %v379, -inf
    %387 = vmax.xlane.f32.xlu0 %v386
    %v388 = vpop.xlane.xlu0 %387
    %v389 = vsub.f32 %v376, %v385
    %v390 = vsub.f32 %v379, %v388
    %v391 = vmul.f32 %v389, 1.442695
    %v392 = vpow.pop %v391
    %v393 = vmul.f32 %v390, 1.442695
    %v394 = vpow.pop %v393
    %v395 = vsel %vm382, %v392, 0.0
    %396 = vadd.xlane.f32.xlu0 %v395
    %v397 = vpop.xlane.xlu0 %396
    %v398 = vsel %vm382, %v394, 0.0
    %399 = vadd.xlane.f32.xlu0 %v398
    %v400 = vpop.xlane.xlu0 %399
    %v401 = vrcp.pop %v397
    %v402 = vrcp.pop %v400
    %v403 = vmul.f32 %v392, %v401
    %v404 = vmul.f32 %v394, %v402
    %v405 = vpack.c.bf16 %v404, %v403
    %v407 = vsel %vm382, %v405, 0
    %409 = vmatprep.subr.bf16.mxu0 0
    %410 = vmatpush1.bf16.msra.mxu0 %v333
    %411 = vmatprep.subr.bf16.mxu0 0
    %412 = vmatpush1.bf16.msra.mxu0 0
    %413 = vmatprep.subr.bf16.mxu0 0
    %414 = vmatpush1.bf16.msra.mxu0 0
    %415 = vmatprep.subr.bf16.mxu0 0
    %416 = vmatpush1.bf16.msra.mxu0 0
    %417 = vmatprep.subr.bf16.mxu0 0
    %418 = vmatpush1.bf16.msra.mxu0 0
    %419 = vmatprep.subr.bf16.mxu0 0
    %420 = vmatpush1.bf16.msra.mxu0 0
    %421 = vmatprep.subr.bf16.mxu0 0
    %422 = vmatpush1.bf16.msra.mxu0 0
    %423 = vmatprep.subr.bf16.mxu0 0
    %424 = vmatpush1.bf16.msra.mxu0 0
    %425 = vmatprep.subr.bf16.mxu0 0
    %426 = vmatpush1.bf16.msra.mxu0 0
    %427 = vmatprep.subr.bf16.mxu0 0
    %428 = vmatpush1.bf16.msra.mxu0 0
    %429 = vmatprep.subr.bf16.mxu0 0
    %430 = vmatpush1.bf16.msra.mxu0 0
    %431 = vmatprep.subr.bf16.mxu0 0
    %432 = vmatpush1.bf16.msra.mxu0 0
    %433 = vmatprep.subr.bf16.mxu0 0
    %434 = vmatpush1.bf16.msra.mxu0 0
    %435 = vmatprep.subr.bf16.mxu0 0
    %436 = vmatpush1.bf16.msra.mxu0 0
    %437 = vmatprep.subr.bf16.mxu0 0
    %438 = vmatpush1.bf16.msra.mxu0 0
    %439 = vmatprep.subr.bf16.mxu0 0
    %440 = vmatpush1.bf16.msra.mxu0 0
    %441 = vmatprep.mubr.bf16.mxu0 0
    %442 = vmatmul.mubr.bf16.gmra.mrb[0].mxu0 %v407
    %v443 = vpop.f32.mrb[0].mxu0
    %v444 = vadd.f32 0.0, %v443
    %v445 = vpop.f32.mrb[0].mxu0
    %v446 = vpop.f32.mrb[0].mxu0
    %v447 = vadd.f32 0.0, %v446
    %v448 = vpop.f32.mrb[0].mxu0
    %449 = vdwg.mxu0
    %v450 = vpack.c.bf16 %v447, %v444
    %v451 = vld [vmem:[%s3] sm:$0xf]
    %v452 = vld [vmem:[%s3 + $0x4] sm:$0xf]
    %v453 = vld [vmem:[%s3 + $0x8] sm:$0xf]
    %v454 = vld [vmem:[%s3 + $0xc] sm:$0xf]
    %456 = vrot.lane.b32.xlu0 %v331, 96
    %v457 = vpop.permute.xlu0 %456
    %459 = vrot.lane.b32.xlu0 %v332, 96
    %v460 = vpop.permute.xlu0 %459
    %v462 = vsel %vm334, %v457, 0
    %v465 = vsel %vm334, %v460, 0
    %467 = vmatprep.subr.bf16.mxu0 0
    %468 = vmatpush1.bf16.xpose.msra.mxu0 %v465
    %469 = vmatprep.subr.bf16.mxu0 0
    %470 = vmatpush1.bf16.xpose.msra.mxu0 0
    %471 = vmatprep.subr.bf16.mxu0 0
    %472 = vmatpush1.bf16.xpose.msra.mxu0 0
    %473 = vmatprep.subr.bf16.mxu0 0
    %474 = vmatpush1.bf16.xpose.msra.mxu0 0
    %475 = vmatprep.subr.bf16.mxu0 0
    %476 = vmatpush1.bf16.xpose.msra.mxu0 0
    %477 = vmatprep.subr.bf16.mxu0 0
    %478 = vmatpush1.bf16.xpose.msra.mxu0 0
    %479 = vmatprep.subr.bf16.mxu0 0
    %480 = vmatpush1.bf16.xpose.msra.mxu0 0
    %481 = vmatprep.subr.bf16.mxu0 0
    %482 = vmatpush1.bf16.xpose.msra.mxu0 0
    %483 = vmatprep.subr.bf16.mxu0 0
    %484 = vmatpush1.bf16.xpose.msra.mxu0 0
    %485 = vmatprep.subr.bf16.mxu0 0
    %486 = vmatpush1.bf16.xpose.msra.mxu0 0
    %487 = vmatprep.subr.bf16.mxu0 0
    %488 = vmatpush1.bf16.xpose.msra.mxu0 0
    %489 = vmatprep.subr.bf16.mxu0 0
    %490 = vmatpush1.bf16.xpose.msra.mxu0 0
    %491 = vmatprep.subr.bf16.mxu0 0
    %492 = vmatpush1.bf16.xpose.msra.mxu0 0
    %493 = vmatprep.subr.bf16.mxu0 0
    %494 = vmatpush1.bf16.xpose.msra.mxu0 0
    %495 = vmatprep.subr.bf16.mxu0 0
    %496 = vmatpush1.bf16.xpose.msra.mxu0 0
    %497 = vmatprep.subr.bf16.mxu0 0
    %498 = vmatpush1.bf16.xpose.msra.mxu0 0
    %499 = vmatprep.mubr.bf16.mxu0 0
    %500 = vmatmul.mubr.bf16.gmra.mrb[0].mxu0 %v462
    %v501 = vpop.f32.mrb[0].mxu0
    %v502 = vadd.f32 0.0, %v501
    %v503 = vpop.f32.mrb[0].mxu0
    %v504 = vpop.f32.mrb[0].mxu0
    %v505 = vadd.f32 0.0, %v504
    %v506 = vpop.f32.mrb[0].mxu0
    %507 = vdwg.mxu0
    %v508 = vsel %vm382, %v502, -inf
    %509 = vmax.xlane.f32.xlu0 %v508
    %v510 = vpop.xlane.xlu0 %509
    %v511 = vsel %vm382, %v505, -inf
    %512 = vmax.xlane.f32.xlu0 %v511
    %v513 = vpop.xlane.xlu0 %512
    %v514 = vsub.f32 %v502, %v510
    %v515 = vsub.f32 %v505, %v513
    %v516 = vmul.f32 %v514, 1.442695
    %v517 = vpow.pop %v516
    %v518 = vmul.f32 %v515, 1.442695
    %v519 = vpow.pop %v518
    %v520 = vsel %vm382, %v517, 0.0
    %521 = vadd.xlane.f32.xlu0 %v520
    %v522 = vpop.xlane.xlu0 %521
    %v523 = vsel %vm382, %v519, 0.0
    %524 = vadd.xlane.f32.xlu0 %v523
    %v525 = vpop.xlane.xlu0 %524
    %v526 = vrcp.pop %v522
    %v527 = vrcp.pop %v525
    %v528 = vmul.f32 %v517, %v526
    %v529 = vmul.f32 %v519, %v527
    %v530 = vpack.c.bf16 %v529, %v528
    %532 = vrot.lane.b32.xlu0 %v333, 96
    %v533 = vpop.permute.xlu0 %532
    %v536 = vsel %vm382, %v530, 0
    %538 = vmatprep.subr.bf16.mxu0 0
    %539 = vmatpush1.bf16.msra.mxu0 %v533
    %540 = vmatprep.subr.bf16.mxu0 0
    %541 = vmatpush1.bf16.msra.mxu0 0
    %542 = vmatprep.subr.bf16.mxu0 0
    %543 = vmatpush1.bf16.msra.mxu0 0
    %544 = vmatprep.subr.bf16.mxu0 0
    %545 = vmatpush1.bf16.msra.mxu0 0
    %546 = vmatprep.subr.bf16.mxu0 0
    %547 = vmatpush1.bf16.msra.mxu0 0
    %548 = vmatprep.subr.bf16.mxu0 0
    %549 = vmatpush1.bf16.msra.mxu0 0
    %550 = vmatprep.subr.bf16.mxu0 0
    %551 = vmatpush1.bf16.msra.mxu0 0
    %552 = vmatprep.subr.bf16.mxu0 0
    %553 = vmatpush1.bf16.msra.mxu0 0
    %554 = vmatprep.subr.bf16.mxu0 0
    %555 = vmatpush1.bf16.msra.mxu0 0
    %556 = vmatprep.subr.bf16.mxu0 0
    %557 = vmatpush1.bf16.msra.mxu0 0
    %558 = vmatprep.subr.bf16.mxu0 0
    %559 = vmatpush1.bf16.msra.mxu0 0
    %560 = vmatprep.subr.bf16.mxu0 0
    %561 = vmatpush1.bf16.msra.mxu0 0
    %562 = vmatprep.subr.bf16.mxu0 0
    %563 = vmatpush1.bf16.msra.mxu0 0
    %564 = vmatprep.subr.bf16.mxu0 0
    %565 = vmatpush1.bf16.msra.mxu0 0
    %566 = vmatprep.subr.bf16.mxu0 0
    %567 = vmatpush1.bf16.msra.mxu0 0
    %568 = vmatprep.subr.bf16.mxu0 0
    %569 = vmatpush1.bf16.msra.mxu0 0
    %570 = vmatprep.mubr.bf16.mxu0 0
    %571 = vmatmul.mubr.bf16.gmra.mrb[0].mxu0 %v536
    %v572 = vpop.f32.mrb[0].mxu0
    %v573 = vadd.f32 0.0, %v572
    %v574 = vpop.f32.mrb[0].mxu0
    %v575 = vpop.f32.mrb[0].mxu0
    %v576 = vadd.f32 0.0, %v575
    %v577 = vpop.f32.mrb[0].mxu0
    %578 = vdwg.mxu0
    %v579 = vpack.c.bf16 %v576, %v573
    %v580 = vld [vmem:[%s3 + $0x10] sm:$0xf]
    %v581 = vld [vmem:[%s3 + $0x14] sm:$0xf]
    %v582 = vld [vmem:[%s3 + $0x18] sm:$0xf]
    %v583 = vld [vmem:[%s3 + $0x1c] sm:$0xf]
    %v588 = vunpack.c.l.b16 %v580
    %v589 = vunpack.c.l.b16 %v581
    %v590 = vunpack.c.l.b16 %v582
    %v591 = vunpack.c.l.b16 %v583
    %v592 = vpack.c.b16 %v589, %v588
    %v593 = vpack.c.b16 %v591, %v590
    %v597 = vsel %vm334, %v579, 0
    %599 = vmatprep.subr.bf16.mxu0 0
    %600 = vmatpush1.bf16.msra.mxu0 %v592
    %601 = vmatprep.subr.bf16.mxu0 0
    %602 = vmatpush1.bf16.msra.mxu0 %v593
    %603 = vmatprep.subr.bf16.mxu0 0
    %604 = vmatpush1.bf16.msra.mxu0 0
    %605 = vmatprep.subr.bf16.mxu0 0
    %606 = vmatpush1.bf16.msra.mxu0 0
    %607 = vmatprep.subr.bf16.mxu0 0
    %608 = vmatpush1.bf16.msra.mxu0 0
    %609 = vmatprep.subr.bf16.mxu0 0
    %610 = vmatpush1.bf16.msra.mxu0 0
    %611 = vmatprep.subr.bf16.mxu0 0
    %612 = vmatpush1.bf16.msra.mxu0 0
    %613 = vmatprep.subr.bf16.mxu0 0
    %614 = vmatpush1.bf16.msra.mxu0 0
    %615 = vmatprep.subr.bf16.mxu0 0
    %616 = vmatpush1.bf16.msra.mxu0 0
    %617 = vmatprep.subr.bf16.mxu0 0
    %618 = vmatpush1.bf16.msra.mxu0 0
    %619 = vmatprep.subr.bf16.mxu0 0
    %620 = vmatpush1.bf16.msra.mxu0 0
    %621 = vmatprep.subr.bf16.mxu0 0
    %622 = vmatpush1.bf16.msra.mxu0 0
    %623 = vmatprep.subr.bf16.mxu0 0
    %624 = vmatpush1.bf16.msra.mxu0 0
    %625 = vmatprep.subr.bf16.mxu0 0
    %626 = vmatpush1.bf16.msra.mxu0 0
    %627 = vmatprep.subr.bf16.mxu0 0
    %628 = vmatpush1.bf16.msra.mxu0 0
    %629 = vmatprep.subr.bf16.mxu0 0
    %630 = vmatpush1.bf16.msra.mxu0 0
    %631 = vmatprep.mubr.bf16.mxu0 0
    %632 = vmatmul.mubr.bf16.gmra.mrb[0].mxu0 %v597
    %v633 = vpop.f32.mrb[0].mxu0
    %v634 = vadd.f32 0.0, %v633
    %v635 = vpop.f32.mrb[0].mxu0
    %v636 = vpop.f32.mrb[0].mxu0
    %v637 = vadd.f32 0.0, %v636
    %v638 = vpop.f32.mrb[0].mxu0
    %639 = vdwg.mxu0
    %v644 = vunpack.c.l.b16 %v451
    %v645 = vunpack.c.l.b16 %v452
    %v646 = vunpack.c.l.b16 %v453
    %v647 = vunpack.c.l.b16 %v454
    %v648 = vpack.c.b16 %v645, %v644
    %v649 = vpack.c.b16 %v647, %v646
    %v653 = vsel %vm334, %v450, 0
    %655 = vmatprep.subr.bf16.mxu0 0
    %656 = vmatpush1.bf16.msra.mxu0 %v648
    %657 = vmatprep.subr.bf16.mxu0 0
    %658 = vmatpush1.bf16.msra.mxu0 %v649
    %659 = vmatprep.subr.bf16.mxu0 0
    %660 = vmatpush1.bf16.msra.mxu0 0
    %661 = vmatprep.subr.bf16.mxu0 0
    %662 = vmatpush1.bf16.msra.mxu0 0
    %663 = vmatprep.subr.bf16.mxu0 0
    %664 = vmatpush1.bf16.msra.mxu0 0
    %665 = vmatprep.subr.bf16.mxu0 0
    %666 = vmatpush1.bf16.msra.mxu0 0
    %667 = vmatprep.subr.bf16.mxu0 0
    %668 = vmatpush1.bf16.msra.mxu0 0
    %669 = vmatprep.subr.bf16.mxu0 0
    %670 = vmatpush1.bf16.msra.mxu0 0
    %671 = vmatprep.subr.bf16.mxu0 0
    %672 = vmatpush1.bf16.msra.mxu0 0
    %673 = vmatprep.subr.bf16.mxu0 0
    %674 = vmatpush1.bf16.msra.mxu0 0
    %675 = vmatprep.subr.bf16.mxu0 0
    %676 = vmatpush1.bf16.msra.mxu0 0
    %677 = vmatprep.subr.bf16.mxu0 0
    %678 = vmatpush1.bf16.msra.mxu0 0
    %679 = vmatprep.subr.bf16.mxu0 0
    %680 = vmatpush1.bf16.msra.mxu0 0
    %681 = vmatprep.subr.bf16.mxu0 0
    %682 = vmatpush1.bf16.msra.mxu0 0
    %683 = vmatprep.subr.bf16.mxu0 0
    %684 = vmatpush1.bf16.msra.mxu0 0
    %685 = vmatprep.subr.bf16.mxu0 0
    %686 = vmatpush1.bf16.msra.mxu0 0
    %687 = vmatprep.mubr.bf16.mxu0 0
    %688 = vmatmul.mubr.bf16.gmra.mrb[0].mxu0 %v653
    %v689 = vpop.f32.mrb[0].mxu0
    %v690 = vadd.f32 %v634, %v689
    %v691 = vpop.f32.mrb[0].mxu0
    %v692 = vpop.f32.mrb[0].mxu0
    %v693 = vadd.f32 %v637, %v692
    %v694 = vpop.f32.mrb[0].mxu0
    %695 = vdwg.mxu0
    %696 = vrot.lane.b32.xlu0 %v331, 64
    %v697 = vpop.permute.xlu0 %696
    %698 = vrot.lane.b32.xlu0 %v332, 64
    %v699 = vpop.permute.xlu0 %698
    %v701 = vsel %vm334, %v697, 0
    %v704 = vsel %vm334, %v699, 0
    %706 = vmatprep.subr.bf16.mxu0 0
    %707 = vmatpush1.bf16.xpose.msra.mxu0 %v704
    %708 = vmatprep.subr.bf16.mxu0 0
    %709 = vmatpush1.bf16.xpose.msra.mxu0 0
    %710 = vmatprep.subr.bf16.mxu0 0
    %711 = vmatpush1.bf16.xpose.msra.mxu0 0
    %712 = vmatprep.subr.bf16.mxu0 0
    %713 = vmatpush1.bf16.xpose.msra.mxu0 0
    %714 = vmatprep.subr.bf16.mxu0 0
    %715 = vmatpush1.bf16.xpose.msra.mxu0 0
    %716 = vmatprep.subr.bf16.mxu0 0
    %717 = vmatpush1.bf16.xpose.msra.mxu0 0
    %718 = vmatprep.subr.bf16.mxu0 0
    %719 = vmatpush1.bf16.xpose.msra.mxu0 0
    %720 = vmatprep.subr.bf16.mxu0 0
    %721 = vmatpush1.bf16.xpose.msra.mxu0 0
    %722 = vmatprep.subr.bf16.mxu0 0
    %723 = vmatpush1.bf16.xpose.msra.mxu0 0
    %724 = vmatprep.subr.bf16.mxu0 0
    %725 = vmatpush1.bf16.xpose.msra.mxu0 0
    %726 = vmatprep.subr.bf16.mxu0 0
    %727 = vmatpush1.bf16.xpose.msra.mxu0 0
    %728 = vmatprep.subr.bf16.mxu0 0
    %729 = vmatpush1.bf16.xpose.msra.mxu0 0
    %730 = vmatprep.subr.bf16.mxu0 0
    %731 = vmatpush1.bf16.xpose.msra.mxu0 0
    %732 = vmatprep.subr.bf16.mxu0 0
    %733 = vmatpush1.bf16.xpose.msra.mxu0 0
    %734 = vmatprep.subr.bf16.mxu0 0
    %735 = vmatpush1.bf16.xpose.msra.mxu0 0
    %736 = vmatprep.subr.bf16.mxu0 0
    %737 = vmatpush1.bf16.xpose.msra.mxu0 0
    %738 = vmatprep.mubr.bf16.mxu0 0
    %739 = vmatmul.mubr.bf16.gmra.mrb[0].mxu0 %v701
    %v740 = vpop.f32.mrb[0].mxu0
    %v741 = vadd.f32 0.0, %v740
    %v742 = vpop.f32.mrb[0].mxu0
    %v743 = vpop.f32.mrb[0].mxu0
    %v744 = vadd.f32 0.0, %v743
    %v745 = vpop.f32.mrb[0].mxu0
    %746 = vdwg.mxu0
    %v747 = vsel %vm382, %v741, -inf
    %748 = vmax.xlane.f32.xlu0 %v747
    %v749 = vpop.xlane.xlu0 %748
    %v750 = vsel %vm382, %v744, -inf
    %751 = vmax.xlane.f32.xlu0 %v750
    %v752 = vpop.xlane.xlu0 %751
    %v753 = vsub.f32 %v741, %v749
    %v754 = vsub.f32 %v744, %v752
    %v755 = vmul.f32 %v753, 1.442695
    %v756 = vpow.pop %v755
    %v757 = vmul.f32 %v754, 1.442695
    %v758 = vpow.pop %v757
    %v759 = vsel %vm382, %v756, 0.0
    %760 = vadd.xlane.f32.xlu0 %v759
    %v761 = vpop.xlane.xlu0 %760
    %v762 = vsel %vm382, %v758, 0.0
    %763 = vadd.xlane.f32.xlu0 %v762
    %v764 = vpop.xlane.xlu0 %763
    %v765 = vrcp.pop %v761
    %v766 = vrcp.pop %v764
    %v767 = vmul.f32 %v756, %v765
    %v768 = vmul.f32 %v758, %v766
    %v769 = vpack.c.bf16 %v768, %v767
    %770 = vrot.lane.b32.xlu0 %v333, 64
    %v771 = vpop.permute.xlu0 %770
    %v774 = vsel %vm382, %v769, 0
    %776 = vmatprep.subr.bf16.mxu0 0
    %777 = vmatpush1.bf16.msra.mxu0 %v771
    %778 = vmatprep.subr.bf16.mxu0 0
    %779 = vmatpush1.bf16.msra.mxu0 0
    %780 = vmatprep.subr.bf16.mxu0 0
    %781 = vmatpush1.bf16.msra.mxu0 0
    %782 = vmatprep.subr.bf16.mxu0 0
    %783 = vmatpush1.bf16.msra.mxu0 0
    %784 = vmatprep.subr.bf16.mxu0 0
    %785 = vmatpush1.bf16.msra.mxu0 0
    %786 = vmatprep.subr.bf16.mxu0 0
    %787 = vmatpush1.bf16.msra.mxu0 0
    %788 = vmatprep.subr.bf16.mxu0 0
    %789 = vmatpush1.bf16.msra.mxu0 0
    %790 = vmatprep.subr.bf16.mxu0 0
    %791 = vmatpush1.bf16.msra.mxu0 0
    %792 = vmatprep.subr.bf16.mxu0 0
    %793 = vmatpush1.bf16.msra.mxu0 0
    %794 = vmatprep.subr.bf16.mxu0 0
    %795 = vmatpush1.bf16.msra.mxu0 0
    %796 = vmatprep.subr.bf16.mxu0 0
    %797 = vmatpush1.bf16.msra.mxu0 0
    %798 = vmatprep.subr.bf16.mxu0 0
    %799 = vmatpush1.bf16.msra.mxu0 0
    %800 = vmatprep.subr.bf16.mxu0 0
    %801 = vmatpush1.bf16.msra.mxu0 0
    %802 = vmatprep.subr.bf16.mxu0 0
    %803 = vmatpush1.bf16.msra.mxu0 0
    %804 = vmatprep.subr.bf16.mxu0 0
    %805 = vmatpush1.bf16.msra.mxu0 0
    %806 = vmatprep.subr.bf16.mxu0 0
    %807 = vmatpush1.bf16.msra.mxu0 0
    %808 = vmatprep.mubr.bf16.mxu0 0
    %809 = vmatmul.mubr.bf16.gmra.mrb[0].mxu0 %v774
    %v810 = vpop.f32.mrb[0].mxu0
    %v811 = vadd.f32 0.0, %v810
    %v812 = vpop.f32.mrb[0].mxu0
    %v813 = vpop.f32.mrb[0].mxu0
    %v814 = vadd.f32 0.0, %v813
    %v815 = vpop.f32.mrb[0].mxu0
    %816 = vdwg.mxu0
    %v817 = vpack.c.bf16 %v814, %v811
    %v818 = vld [vmem:[%s3 + $0x20] sm:$0xf]
    %v819 = vld [vmem:[%s3 + $0x24] sm:$0xf]
    %v820 = vld [vmem:[%s3 + $0x28] sm:$0xf]
    %v821 = vld [vmem:[%s3 + $0x2c] sm:$0xf]
    %v826 = vunpack.c.l.b16 %v818
    %v827 = vunpack.c.l.b16 %v819
    %v828 = vunpack.c.l.b16 %v820
    %v829 = vunpack.c.l.b16 %v821
    %v830 = vpack.c.b16 %v827, %v826
    %v831 = vpack.c.b16 %v829, %v828
    %v835 = vsel %vm334, %v817, 0
    %837 = vmatprep.subr.bf16.mxu0 0
    %838 = vmatpush1.bf16.msra.mxu0 %v830
    %839 = vmatprep.subr.bf16.mxu0 0
    %840 = vmatpush1.bf16.msra.mxu0 %v831
    %841 = vmatprep.subr.bf16.mxu0 0
    %842 = vmatpush1.bf16.msra.mxu0 0
    %843 = vmatprep.subr.bf16.mxu0 0
    %844 = vmatpush1.bf16.msra.mxu0 0
    %845 = vmatprep.subr.bf16.mxu0 0
    %846 = vmatpush1.bf16.msra.mxu0 0
    %847 = vmatprep.subr.bf16.mxu0 0
    %848 = vmatpush1.bf16.msra.mxu0 0
    %849 = vmatprep.subr.bf16.mxu0 0
    %850 = vmatpush1.bf16.msra.mxu0 0
    %851 = vmatprep.subr.bf16.mxu0 0
    %852 = vmatpush1.bf16.msra.mxu0 0
    %853 = vmatprep.subr.bf16.mxu0 0
    %854 = vmatpush1.bf16.msra.mxu0 0
    %855 = vmatprep.subr.bf16.mxu0 0
    %856 = vmatpush1.bf16.msra.mxu0 0
    %857 = vmatprep.subr.bf16.mxu0 0
    %858 = vmatpush1.bf16.msra.mxu0 0
    %859 = vmatprep.subr.bf16.mxu0 0
    %860 = vmatpush1.bf16.msra.mxu0 0
    %861 = vmatprep.subr.bf16.mxu0 0
    %862 = vmatpush1.bf16.msra.mxu0 0
    %863 = vmatprep.subr.bf16.mxu0 0
    %864 = vmatpush1.bf16.msra.mxu0 0
    %865 = vmatprep.subr.bf16.mxu0 0
    %866 = vmatpush1.bf16.msra.mxu0 0
    %867 = vmatprep.subr.bf16.mxu0 0
    %868 = vmatpush1.bf16.msra.mxu0 0
    %869 = vmatprep.mubr.bf16.mxu0 0
    %870 = vmatmul.mubr.bf16.gmra.mrb[0].mxu0 %v835
    %v871 = vpop.f32.mrb[0].mxu0
    %v872 = vadd.f32 0.0, %v871
    %v873 = vpop.f32.mrb[0].mxu0
    %v874 = vpop.f32.mrb[0].mxu0
    %v875 = vadd.f32 0.0, %v874
    %v876 = vpop.f32.mrb[0].mxu0
    %877 = vdwg.mxu0
    %v878 = vadd.f32 %v690, %v872
    %v879 = vadd.f32 %v693, %v875
    %880 = vrot.lane.b32.xlu0 %v331, 32
    %v881 = vpop.permute.xlu0 %880
    %882 = vrot.lane.b32.xlu0 %v332, 32
    %v883 = vpop.permute.xlu0 %882
    %v885 = vsel %vm334, %v881, 0
    %v888 = vsel %vm334, %v883, 0
    %890 = vmatprep.subr.bf16.mxu0 0
    %891 = vmatpush1.bf16.xpose.msra.mxu0 %v888
    %892 = vmatprep.subr.bf16.mxu0 0
    %893 = vmatpush1.bf16.xpose.msra.mxu0 0
    %894 = vmatprep.subr.bf16.mxu0 0
    %895 = vmatpush1.bf16.xpose.msra.mxu0 0
    %896 = vmatprep.subr.bf16.mxu0 0
    %897 = vmatpush1.bf16.xpose.msra.mxu0 0
    %898 = vmatprep.subr.bf16.mxu0 0
    %899 = vmatpush1.bf16.xpose.msra.mxu0 0
    %900 = vmatprep.subr.bf16.mxu0 0
    %901 = vmatpush1.bf16.xpose.msra.mxu0 0
    %902 = vmatprep.subr.bf16.mxu0 0
    %903 = vmatpush1.bf16.xpose.msra.mxu0 0
    %904 = vmatprep.subr.bf16.mxu0 0
    %905 = vmatpush1.bf16.xpose.msra.mxu0 0
    %906 = vmatprep.subr.bf16.mxu0 0
    %907 = vmatpush1.bf16.xpose.msra.mxu0 0
    %908 = vmatprep.subr.bf16.mxu0 0
    %909 = vmatpush1.bf16.xpose.msra.mxu0 0
    %910 = vmatprep.subr.bf16.mxu0 0
    %911 = vmatpush1.bf16.xpose.msra.mxu0 0
    %912 = vmatprep.subr.bf16.mxu0 0
    %913 = vmatpush1.bf16.xpose.msra.mxu0 0
    %914 = vmatprep.subr.bf16.mxu0 0
    %915 = vmatpush1.bf16.xpose.msra.mxu0 0
    %916 = vmatprep.subr.bf16.mxu0 0
    %917 = vmatpush1.bf16.xpose.msra.mxu0 0
    %918 = vmatprep.subr.bf16.mxu0 0
    %919 = vmatpush1.bf16.xpose.msra.mxu0 0
    %920 = vmatprep.subr.bf16.mxu0 0
    %921 = vmatpush1.bf16.xpose.msra.mxu0 0
    %922 = vmatprep.mubr.bf16.mxu0 0
    %923 = vmatmul.mubr.bf16.gmra.mrb[0].mxu0 %v885
    %v924 = vpop.f32.mrb[0].mxu0
    %v925 = vadd.f32 0.0, %v924
    %v926 = vpop.f32.mrb[0].mxu0
    %v927 = vpop.f32.mrb[0].mxu0
    %v928 = vadd.f32 0.0, %v927
    %v929 = vpop.f32.mrb[0].mxu0
    %930 = vdwg.mxu0
    %v931 = vsel %vm382, %v925, -inf
    %932 = vmax.xlane.f32.xlu0 %v931
    %v933 = vpop.xlane.xlu0 %932
    %v934 = vsel %vm382, %v928, -inf
    %935 = vmax.xlane.f32.xlu0 %v934
    %v936 = vpop.xlane.xlu0 %935
    %v937 = vsub.f32 %v925, %v933
    %v938 = vsub.f32 %v928, %v936
    %v939 = vmul.f32 %v937, 1.442695
    %v940 = vpow.pop %v939
    %v941 = vmul.f32 %v938, 1.442695
    %v942 = vpow.pop %v941
    %v943 = vsel %vm382, %v940, 0.0
    %944 = vadd.xlane.f32.xlu0 %v943
    %v945 = vpop.xlane.xlu0 %944
    %v946 = vsel %vm382, %v942, 0.0
    %947 = vadd.xlane.f32.xlu0 %v946
    %v948 = vpop.xlane.xlu0 %947
    %v949 = vrcp.pop %v945
    %v950 = vrcp.pop %v948
    %v951 = vmul.f32 %v940, %v949
    %v952 = vmul.f32 %v942, %v950
    %v953 = vpack.c.bf16 %v952, %v951
    %954 = vrot.lane.b32.xlu0 %v333, 32
    %v955 = vpop.permute.xlu0 %954
    %v958 = vsel %vm382, %v953, 0
    %960 = vmatprep.subr.bf16.mxu0 0
    %961 = vmatpush1.bf16.msra.mxu0 %v955
    %962 = vmatprep.subr.bf16.mxu0 0
    %963 = vmatpush1.bf16.msra.mxu0 0
    %964 = vmatprep.subr.bf16.mxu0 0
    %965 = vmatpush1.bf16.msra.mxu0 0
    %966 = vmatprep.subr.bf16.mxu0 0
    %967 = vmatpush1.bf16.msra.mxu0 0
    %968 = vmatprep.subr.bf16.mxu0 0
    %969 = vmatpush1.bf16.msra.mxu0 0
    %970 = vmatprep.subr.bf16.mxu0 0
    %971 = vmatpush1.bf16.msra.mxu0 0
    %972 = vmatprep.subr.bf16.mxu0 0
    %973 = vmatpush1.bf16.msra.mxu0 0
    %974 = vmatprep.subr.bf16.mxu0 0
    %975 = vmatpush1.bf16.msra.mxu0 0
    %976 = vmatprep.subr.bf16.mxu0 0
    %977 = vmatpush1.bf16.msra.mxu0 0
    %978 = vmatprep.subr.bf16.mxu0 0
    %979 = vmatpush1.bf16.msra.mxu0 0
    %980 = vmatprep.subr.bf16.mxu0 0
    %981 = vmatpush1.bf16.msra.mxu0 0
    %982 = vmatprep.subr.bf16.mxu0 0
    %983 = vmatpush1.bf16.msra.mxu0 0
    %984 = vmatprep.subr.bf16.mxu0 0
    %985 = vmatpush1.bf16.msra.mxu0 0
    %986 = vmatprep.subr.bf16.mxu0 0
    %987 = vmatpush1.bf16.msra.mxu0 0
    %988 = vmatprep.subr.bf16.mxu0 0
    %989 = vmatpush1.bf16.msra.mxu0 0
    %990 = vmatprep.subr.bf16.mxu0 0
    %991 = vmatpush1.bf16.msra.mxu0 0
    %992 = vmatprep.mubr.bf16.mxu0 0
    %993 = vmatmul.mubr.bf16.gmra.mrb[0].mxu0 %v958
    %v994 = vpop.f32.mrb[0].mxu0
    %v995 = vadd.f32 0.0, %v994
    %v996 = vpop.f32.mrb[0].mxu0
    %v997 = vpop.f32.mrb[0].mxu0
    %v998 = vadd.f32 0.0, %v997
    %v999 = vpop.f32.mrb[0].mxu0
    %1000 = vdwg.mxu0
    %v1001 = vpack.c.bf16 %v998, %v995
    %v1002 = vld [vmem:[%s3 + $0x30] sm:$0xf]
    %v1003 = vld [vmem:[%s3 + $0x34] sm:$0xf]
    %v1004 = vld [vmem:[%s3 + $0x38] sm:$0xf]
    %v1005 = vld [vmem:[%s3 + $0x3c] sm:$0xf]
    %v1010 = vunpack.c.l.b16 %v1002
    %v1011 = vunpack.c.l.b16 %v1003
    %v1012 = vunpack.c.l.b16 %v1004
    %v1013 = vunpack.c.l.b16 %v1005
    %v1014 = vpack.c.b16 %v1011, %v1010
    %v1015 = vpack.c.b16 %v1013, %v1012
    %v1019 = vsel %vm334, %v1001, 0
    %1021 = vmatprep.subr.bf16.mxu0 0
    %1022 = vmatpush1.bf16.msra.mxu0 %v1014
    %1023 = vmatprep.subr.bf16.mxu0 0
    %1024 = vmatpush1.bf16.msra.mxu0 %v1015
    %1025 = vmatprep.subr.bf16.mxu0 0
    %1026 = vmatpush1.bf16.msra.mxu0 0
    %1027 = vmatprep.subr.bf16.mxu0 0
    %1028 = vmatpush1.bf16.msra.mxu0 0
    %1029 = vmatprep.subr.bf16.mxu0 0
    %1030 = vmatpush1.bf16.msra.mxu0 0
    %1031 = vmatprep.subr.bf16.mxu0 0
    %1032 = vmatpush1.bf16.msra.mxu0 0
    %1033 = vmatprep.subr.bf16.mxu0 0
    %1034 = vmatpush1.bf16.msra.mxu0 0
    %1035 = vmatprep.subr.bf16.mxu0 0
    %1036 = vmatpush1.bf16.msra.mxu0 0
    %1037 = vmatprep.subr.bf16.mxu0 0
    %1038 = vmatpush1.bf16.msra.mxu0 0
    %1039 = vmatprep.subr.bf16.mxu0 0
    %1040 = vmatpush1.bf16.msra.mxu0 0
    %1041 = vmatprep.subr.bf16.mxu0 0
    %1042 = vmatpush1.bf16.msra.mxu0 0
    %1043 = vmatprep.subr.bf16.mxu0 0
    %1044 = vmatpush1.bf16.msra.mxu0 0
    %1045 = vmatprep.subr.bf16.mxu0 0
    %1046 = vmatpush1.bf16.msra.mxu0 0
    %1047 = vmatprep.subr.bf16.mxu0 0
    %1048 = vmatpush1.bf16.msra.mxu0 0
    %1049 = vmatprep.subr.bf16.mxu0 0
    %1050 = vmatpush1.bf16.msra.mxu0 0
    %1051 = vmatprep.subr.bf16.mxu0 0
    %1052 = vmatpush1.bf16.msra.mxu0 0
    %1053 = vmatprep.mubr.bf16.mxu0 0
    %1054 = vmatmul.mubr.bf16.gmra.mrb[0].mxu0 %v1019
    %v1055 = vpop.f32.mrb[0].mxu0
    %v1056 = vadd.f32 0.0, %v1055
    %v1057 = vpop.f32.mrb[0].mxu0
    %v1058 = vpop.f32.mrb[0].mxu0
    %v1059 = vadd.f32 0.0, %v1058
    %v1060 = vpop.f32.mrb[0].mxu0
    %1061 = vdwg.mxu0
    %v1062 = vadd.f32 %v878, %v1056
    %v1063 = vadd.f32 %v879, %v1059
    %v1064 = vpack.c.bf16 %v278, %v274
    %v1065 = vpack.c.bf16 %v280, %v276
    %v1066 = vpack.c.bf16 %v328, %v325
    %v1068 = vsel %vm334, %v1064, 0
    %v1071 = vsel %vm334, %v1065, 0
    %1073 = vmatprep.subr.bf16.mxu0 0
    %1074 = vmatpush1.bf16.xpose.msra.mxu0 %v1071
    %1075 = vmatprep.subr.bf16.mxu0 0
    %1076 = vmatpush1.bf16.xpose.msra.mxu0 0
    %1077 = vmatprep.subr.bf16.mxu0 0
    %1078 = vmatpush1.bf16.xpose.msra.mxu0 0
    %1079 = vmatprep.subr.bf16.mxu0 0
    %1080 = vmatpush1.bf16.xpose.msra.mxu0 0
    %1081 = vmatprep.subr.bf16.mxu0 0
    %1082 = vmatpush1.bf16.xpose.msra.mxu0 0
    %1083 = vmatprep.subr.bf16.mxu0 0
    %1084 = vmatpush1.bf16.xpose.msra.mxu0 0
    %1085 = vmatprep.subr.bf16.mxu0 0
    %1086 = vmatpush1.bf16.xpose.msra.mxu0 0
    %1087 = vmatprep.subr.bf16.mxu0 0
    %1088 = vmatpush1.bf16.xpose.msra.mxu0 0
    %1089 = vmatprep.subr.bf16.mxu0 0
    %1090 = vmatpush1.bf16.xpose.msra.mxu0 0
    %1091 = vmatprep.subr.bf16.mxu0 0
    %1092 = vmatpush1.bf16.xpose.msra.mxu0 0
    %1093 = vmatprep.subr.bf16.mxu0 0
    %1094 = vmatpush1.bf16.xpose.msra.mxu0 0
    %1095 = vmatprep.subr.bf16.mxu0 0
    %1096 = vmatpush1.bf16.xpose.msra.mxu0 0
    %1097 = vmatprep.subr.bf16.mxu0 0
    %1098 = vmatpush1.bf16.xpose.msra.mxu0 0
    %1099 = vmatprep.subr.bf16.mxu0 0
    %1100 = vmatpush1.bf16.xpose.msra.mxu0 0
    %1101 = vmatprep.subr.bf16.mxu0 0
    %1102 = vmatpush1.bf16.xpose.msra.mxu0 0
    %1103 = vmatprep.subr.bf16.mxu0 0
    %1104 = vmatpush1.bf16.xpose.msra.mxu0 0
    %1105 = vmatprep.mubr.bf16.mxu0 0
    %1106 = vmatmul.mubr.bf16.gmra.mrb[0].mxu0 %v1068
    %v1107 = vpop.f32.mrb[0].mxu0
    %v1108 = vadd.f32 0.0, %v1107
    %v1109 = vpop.f32.mrb[0].mxu0
    %v1110 = vpop.f32.mrb[0].mxu0
    %v1111 = vadd.f32 0.0, %v1110
    %v1112 = vpop.f32.mrb[0].mxu0
    %1113 = vdwg.mxu0
    %v1114 = vsel %vm382, %v1108, -inf
    %1115 = vmax.xlane.f32.xlu0 %v1114
    %v1116 = vpop.xlane.xlu0 %1115
    %v1117 = vsel %vm382, %v1111, -inf
    %1118 = vmax.xlane.f32.xlu0 %v1117
    %v1119 = vpop.xlane.xlu0 %1118
    %v1120 = vsub.f32 %v1108, %v1116
    %v1121 = vsub.f32 %v1111, %v1119
    %v1122 = vmul.f32 %v1120, 1.442695
    %v1123 = vpow.pop %v1122
    %v1124 = vmul.f32 %v1121, 1.442695
    %v1125 = vpow.pop %v1124
    %v1126 = vsel %vm382, %v1123, 0.0
    %1127 = vadd.xlane.f32.xlu0 %v1126
    %v1128 = vpop.xlane.xlu0 %1127
    %v1129 = vsel %vm382, %v1125, 0.0
    %1130 = vadd.xlane.f32.xlu0 %v1129
    %v1131 = vpop.xlane.xlu0 %1130
    %v1132 = vrcp.pop %v1128
    %v1133 = vrcp.pop %v1131
    %v1134 = vmul.f32 %v1123, %v1132
    %v1135 = vmul.f32 %v1125, %v1133
    %v1136 = vpack.c.bf16 %v1135, %v1134
    %v1138 = vsel %vm382, %v1136, 0
    %1140 = vmatprep.subr.bf16.mxu0 0
    %1141 = vmatpush1.bf16.msra.mxu0 %v1066
    %1142 = vmatprep.subr.bf16.mxu0 0
    %1143 = vmatpush1.bf16.msra.mxu0 0
    %1144 = vmatprep.subr.bf16.mxu0 0
    %1145 = vmatpush1.bf16.msra.mxu0 0
    %1146 = vmatprep.subr.bf16.mxu0 0
    %1147 = vmatpush1.bf16.msra.mxu0 0
    %1148 = vmatprep.subr.bf16.mxu0 0
    %1149 = vmatpush1.bf16.msra.mxu0 0
    %1150 = vmatprep.subr.bf16.mxu0 0
    %1151 = vmatpush1.bf16.msra.mxu0 0
    %1152 = vmatprep.subr.bf16.mxu0 0
    %1153 = vmatpush1.bf16.msra.mxu0 0
    %1154 = vmatprep.subr.bf16.mxu0 0
    %1155 = vmatpush1.bf16.msra.mxu0 0
    %1156 = vmatprep.subr.bf16.mxu0 0
    %1157 = vmatpush1.bf16.msra.mxu0 0
    %1158 = vmatprep.subr.bf16.mxu0 0
    %1159 = vmatpush1.bf16.msra.mxu0 0
    %1160 = vmatprep.subr.bf16.mxu0 0
    %1161 = vmatpush1.bf16.msra.mxu0 0
    %1162 = vmatprep.subr.bf16.mxu0 0
    %1163 = vmatpush1.bf16.msra.mxu0 0
    %1164 = vmatprep.subr.bf16.mxu0 0
    %1165 = vmatpush1.bf16.msra.mxu0 0
    %1166 = vmatprep.subr.bf16.mxu0 0
    %1167 = vmatpush1.bf16.msra.mxu0 0
    %1168 = vmatprep.subr.bf16.mxu0 0
    %1169 = vmatpush1.bf16.msra.mxu0 0
    %1170 = vmatprep.subr.bf16.mxu0 0
    %1171 = vmatpush1.bf16.msra.mxu0 0
    %1172 = vmatprep.mubr.bf16.mxu0 0
    %1173 = vmatmul.mubr.bf16.gmra.mrb[0].mxu0 %v1138
    %v1174 = vpop.f32.mrb[0].mxu0
    %v1175 = vadd.f32 0.0, %v1174
    %v1176 = vpop.f32.mrb[0].mxu0
    %v1177 = vpop.f32.mrb[0].mxu0
    %v1178 = vadd.f32 0.0, %v1177
    %v1179 = vpop.f32.mrb[0].mxu0
    %1180 = vdwg.mxu0
    %v1181 = vpack.c.bf16 %v1178, %v1175
    %1183 = vrot.lane.b32.xlu0 %v1064, 96
    %v1184 = vpop.permute.xlu0 %1183
    %1186 = vrot.lane.b32.xlu0 %v1065, 96
    %v1187 = vpop.permute.xlu0 %1186
    %v1189 = vsel %vm334, %v1184, 0
    %v1192 = vsel %vm334, %v1187, 0
    %1194 = vmatprep.subr.bf16.mxu0 0
    %1195 = vmatpush1.bf16.xpose.msra.mxu0 %v1192
    %1196 = vmatprep.subr.bf16.mxu0 0
    %1197 = vmatpush1.bf16.xpose.msra.mxu0 0
    %1198 = vmatprep.subr.bf16.mxu0 0
    %1199 = vmatpush1.bf16.xpose.msra.mxu0 0
    %1200 = vmatprep.subr.bf16.mxu0 0
    %1201 = vmatpush1.bf16.xpose.msra.mxu0 0
    %1202 = vmatprep.subr.bf16.mxu0 0
    %1203 = vmatpush1.bf16.xpose.msra.mxu0 0
    %1204 = vmatprep.subr.bf16.mxu0 0
    %1205 = vmatpush1.bf16.xpose.msra.mxu0 0
    %1206 = vmatprep.subr.bf16.mxu0 0
    %1207 = vmatpush1.bf16.xpose.msra.mxu0 0
    %1208 = vmatprep.subr.bf16.mxu0 0
    %1209 = vmatpush1.bf16.xpose.msra.mxu0 0
    %1210 = vmatprep.subr.bf16.mxu0 0
    %1211 = vmatpush1.bf16.xpose.msra.mxu0 0
    %1212 = vmatprep.subr.bf16.mxu0 0
    %1213 = vmatpush1.bf16.xpose.msra.mxu0 0
    %1214 = vmatprep.subr.bf16.mxu0 0
    %1215 = vmatpush1.bf16.xpose.msra.mxu0 0
    %1216 = vmatprep.subr.bf16.mxu0 0
    %1217 = vmatpush1.bf16.xpose.msra.mxu0 0
    %1218 = vmatprep.subr.bf16.mxu0 0
    %1219 = vmatpush1.bf16.xpose.msra.mxu0 0
    %1220 = vmatprep.subr.bf16.mxu0 0
    %1221 = vmatpush1.bf16.xpose.msra.mxu0 0
    %1222 = vmatprep.subr.bf16.mxu0 0
    %1223 = vmatpush1.bf16.xpose.msra.mxu0 0
    %1224 = vmatprep.subr.bf16.mxu0 0
    %1225 = vmatpush1.bf16.xpose.msra.mxu0 0
    %1226 = vmatprep.mubr.bf16.mxu0 0
    %1227 = vmatmul.mubr.bf16.gmra.mrb[0].mxu0 %v1189
    %v1228 = vpop.f32.mrb[0].mxu0
    %v1229 = vadd.f32 0.0, %v1228
    %v1230 = vpop.f32.mrb[0].mxu0
    %v1231 = vpop.f32.mrb[0].mxu0
    %v1232 = vadd.f32 0.0, %v1231
    %v1233 = vpop.f32.mrb[0].mxu0
    %1234 = vdwg.mxu0
    %v1235 = vsel %vm382, %v1229, -inf
    %1236 = vmax.xlane.f32.xlu0 %v1235
    %v1237 = vpop.xlane.xlu0 %1236
    %v1238 = vsel %vm382, %v1232, -inf
    %1239 = vmax.xlane.f32.xlu0 %v1238
    %v1240 = vpop.xlane.xlu0 %1239
    %v1241 = vsub.f32 %v1229, %v1237
    %v1242 = vsub.f32 %v1232, %v1240
    %v1243 = vmul.f32 %v1241, 1.442695
    %v1244 = vpow.pop %v1243
    %v1245 = vmul.f32 %v1242, 1.442695
    %v1246 = vpow.pop %v1245
    %v1247 = vsel %vm382, %v1244, 0.0
    %1248 = vadd.xlane.f32.xlu0 %v1247
    %v1249 = vpop.xlane.xlu0 %1248
    %v1250 = vsel %vm382, %v1246, 0.0
    %1251 = vadd.xlane.f32.xlu0 %v1250
    %v1252 = vpop.xlane.xlu0 %1251
    %v1253 = vrcp.pop %v1249
    %v1254 = vrcp.pop %v1252
    %v1255 = vmul.f32 %v1244, %v1253
    %v1256 = vmul.f32 %v1246, %v1254
    %v1257 = vpack.c.bf16 %v1256, %v1255
    %1259 = vrot.lane.b32.xlu0 %v1066, 96
    %v1260 = vpop.permute.xlu0 %1259
    %v1263 = vsel %vm382, %v1257, 0
    %1265 = vmatprep.subr.bf16.mxu0 0
    %1266 = vmatpush1.bf16.msra.mxu0 %v1260
    %1267 = vmatprep.subr.bf16.mxu0 0
    %1268 = vmatpush1.bf16.msra.mxu0 0
    %1269 = vmatprep.subr.bf16.mxu0 0
    %1270 = vmatpush1.bf16.msra.mxu0 0
    %1271 = vmatprep.subr.bf16.mxu0 0
    %1272 = vmatpush1.bf16.msra.mxu0 0
    %1273 = vmatprep.subr.bf16.mxu0 0
    %1274 = vmatpush1.bf16.msra.mxu0 0
    %1275 = vmatprep.subr.bf16.mxu0 0
    %1276 = vmatpush1.bf16.msra.mxu0 0
    %1277 = vmatprep.subr.bf16.mxu0 0
    %1278 = vmatpush1.bf16.msra.mxu0 0
    %1279 = vmatprep.subr.bf16.mxu0 0
    %1280 = vmatpush1.bf16.msra.mxu0 0
    %1281 = vmatprep.subr.bf16.mxu0 0
    %1282 = vmatpush1.bf16.msra.mxu0 0
    %1283 = vmatprep.subr.bf16.mxu0 0
    %1284 = vmatpush1.bf16.msra.mxu0 0
    %1285 = vmatprep.subr.bf16.mxu0 0
    %1286 = vmatpush1.bf16.msra.mxu0 0
    %1287 = vmatprep.subr.bf16.mxu0 0
    %1288 = vmatpush1.bf16.msra.mxu0 0
    %1289 = vmatprep.subr.bf16.mxu0 0
    %1290 = vmatpush1.bf16.msra.mxu0 0
    %1291 = vmatprep.subr.bf16.mxu0 0
    %1292 = vmatpush1.bf16.msra.mxu0 0
    %1293 = vmatprep.subr.bf16.mxu0 0
    %1294 = vmatpush1.bf16.msra.mxu0 0
    %1295 = vmatprep.subr.bf16.mxu0 0
    %1296 = vmatpush1.bf16.msra.mxu0 0
    %1297 = vmatprep.mubr.bf16.mxu0 0
    %1298 = vmatmul.mubr.bf16.gmra.mrb[0].mxu0 %v1263
    %v1299 = vpop.f32.mrb[0].mxu0
    %v1300 = vadd.f32 0.0, %v1299
    %v1301 = vpop.f32.mrb[0].mxu0
    %v1302 = vpop.f32.mrb[0].mxu0
    %v1303 = vadd.f32 0.0, %v1302
    %v1304 = vpop.f32.mrb[0].mxu0
    %1305 = vdwg.mxu0
    %v1306 = vpack.c.bf16 %v1303, %v1300
    %v1308 = vsel %vm334, %v1306, 0
    %1310 = vmatprep.subr.bf16.mxu0 0
    %1311 = vmatpush1.bf16.msra.mxu0 %v592
    %1312 = vmatprep.subr.bf16.mxu0 0
    %1313 = vmatpush1.bf16.msra.mxu0 %v593
    %1314 = vmatprep.subr.bf16.mxu0 0
    %1315 = vmatpush1.bf16.msra.mxu0 0
    %1316 = vmatprep.subr.bf16.mxu0 0
    %1317 = vmatpush1.bf16.msra.mxu0 0
    %1318 = vmatprep.subr.bf16.mxu0 0
    %1319 = vmatpush1.bf16.msra.mxu0 0
    %1320 = vmatprep.subr.bf16.mxu0 0
    %1321 = vmatpush1.bf16.msra.mxu0 0
    %1322 = vmatprep.subr.bf16.mxu0 0
    %1323 = vmatpush1.bf16.msra.mxu0 0
    %1324 = vmatprep.subr.bf16.mxu0 0
    %1325 = vmatpush1.bf16.msra.mxu0 0
    %1326 = vmatprep.subr.bf16.mxu0 0
    %1327 = vmatpush1.bf16.msra.mxu0 0
    %1328 = vmatprep.subr.bf16.mxu0 0
    %1329 = vmatpush1.bf16.msra.mxu0 0
    %1330 = vmatprep.subr.bf16.mxu0 0
    %1331 = vmatpush1.bf16.msra.mxu0 0
    %1332 = vmatprep.subr.bf16.mxu0 0
    %1333 = vmatpush1.bf16.msra.mxu0 0
    %1334 = vmatprep.subr.bf16.mxu0 0
    %1335 = vmatpush1.bf16.msra.mxu0 0
    %1336 = vmatprep.subr.bf16.mxu0 0
    %1337 = vmatpush1.bf16.msra.mxu0 0
    %1338 = vmatprep.subr.bf16.mxu0 0
    %1339 = vmatpush1.bf16.msra.mxu0 0
    %1340 = vmatprep.subr.bf16.mxu0 0
    %1341 = vmatpush1.bf16.msra.mxu0 0
    %1342 = vmatprep.mubr.bf16.mxu0 0
    %1343 = vmatmul.mubr.bf16.gmra.mrb[0].mxu0 %v1308
    %v1344 = vpop.f32.mrb[0].mxu0
    %v1345 = vadd.f32 0.0, %v1344
    %v1346 = vpop.f32.mrb[0].mxu0
    %v1347 = vpop.f32.mrb[0].mxu0
    %v1348 = vadd.f32 0.0, %v1347
    %v1349 = vpop.f32.mrb[0].mxu0
    %1350 = vdwg.mxu0
    %v1352 = vsel %vm334, %v1181, 0
    %1354 = vmatprep.subr.bf16.mxu0 0
    %1355 = vmatpush1.bf16.msra.mxu0 %v648
    %1356 = vmatprep.subr.bf16.mxu0 0
    %1357 = vmatpush1.bf16.msra.mxu0 %v649
    %1358 = vmatprep.subr.bf16.mxu0 0
    %1359 = vmatpush1.bf16.msra.mxu0 0
    %1360 = vmatprep.subr.bf16.mxu0 0
    %1361 = vmatpush1.bf16.msra.mxu0 0
    %1362 = vmatprep.subr.bf16.mxu0 0
    %1363 = vmatpush1.bf16.msra.mxu0 0
    %1364 = vmatprep.subr.bf16.mxu0 0
    %1365 = vmatpush1.bf16.msra.mxu0 0
    %1366 = vmatprep.subr.bf16.mxu0 0
    %1367 = vmatpush1.bf16.msra.mxu0 0
    %1368 = vmatprep.subr.bf16.mxu0 0
    %1369 = vmatpush1.bf16.msra.mxu0 0
    %1370 = vmatprep.subr.bf16.mxu0 0
    %1371 = vmatpush1.bf16.msra.mxu0 0
    %1372 = vmatprep.subr.bf16.mxu0 0
    %1373 = vmatpush1.bf16.msra.mxu0 0
    %1374 = vmatprep.subr.bf16.mxu0 0
    %1375 = vmatpush1.bf16.msra.mxu0 0
    %1376 = vmatprep.subr.bf16.mxu0 0
    %1377 = vmatpush1.bf16.msra.mxu0 0
    %1378 = vmatprep.subr.bf16.mxu0 0
    %1379 = vmatpush1.bf16.msra.mxu0 0
    %1380 = vmatprep.subr.bf16.mxu0 0
    %1381 = vmatpush1.bf16.msra.mxu0 0
    %1382 = vmatprep.subr.bf16.mxu0 0
    %1383 = vmatpush1.bf16.msra.mxu0 0
    %1384 = vmatprep.subr.bf16.mxu0 0
    %1385 = vmatpush1.bf16.msra.mxu0 0
    %1386 = vmatprep.mubr.bf16.mxu0 0
    %1387 = vmatmul.mubr.bf16.gmra.mrb[0].mxu0 %v1352
    %v1388 = vpop.f32.mrb[0].mxu0
    %v1389 = vadd.f32 %v1345, %v1388
    %v1390 = vpop.f32.mrb[0].mxu0
    %v1391 = vpop.f32.mrb[0].mxu0
    %v1392 = vadd.f32 %v1348, %v1391
    %v1393 = vpop.f32.mrb[0].mxu0
    %1394 = vdwg.mxu0
    %1395 = vrot.lane.b32.xlu0 %v1064, 64
    %v1396 = vpop.permute.xlu0 %1395
    %1397 = vrot.lane.b32.xlu0 %v1065, 64
    %v1398 = vpop.permute.xlu0 %1397
    %v1400 = vsel %vm334, %v1396, 0
    %v1403 = vsel %vm334, %v1398, 0
    %1405 = vmatprep.subr.bf16.mxu0 0
    %1406 = vmatpush1.bf16.xpose.msra.mxu0 %v1403
    %1407 = vmatprep.subr.bf16.mxu0 0
    %1408 = vmatpush1.bf16.xpose.msra.mxu0 0
    %1409 = vmatprep.subr.bf16.mxu0 0
    %1410 = vmatpush1.bf16.xpose.msra.mxu0 0
    %1411 = vmatprep.subr.bf16.mxu0 0
    %1412 = vmatpush1.bf16.xpose.msra.mxu0 0
    %1413 = vmatprep.subr.bf16.mxu0 0
    %1414 = vmatpush1.bf16.xpose.msra.mxu0 0
    %1415 = vmatprep.subr.bf16.mxu0 0
    %1416 = vmatpush1.bf16.xpose.msra.mxu0 0
    %1417 = vmatprep.subr.bf16.mxu0 0
    %1418 = vmatpush1.bf16.xpose.msra.mxu0 0
    %1419 = vmatprep.subr.bf16.mxu0 0
    %1420 = vmatpush1.bf16.xpose.msra.mxu0 0
    %1421 = vmatprep.subr.bf16.mxu0 0
    %1422 = vmatpush1.bf16.xpose.msra.mxu0 0
    %1423 = vmatprep.subr.bf16.mxu0 0
    %1424 = vmatpush1.bf16.xpose.msra.mxu0 0
    %1425 = vmatprep.subr.bf16.mxu0 0
    %1426 = vmatpush1.bf16.xpose.msra.mxu0 0
    %1427 = vmatprep.subr.bf16.mxu0 0
    %1428 = vmatpush1.bf16.xpose.msra.mxu0 0
    %1429 = vmatprep.subr.bf16.mxu0 0
    %1430 = vmatpush1.bf16.xpose.msra.mxu0 0
    %1431 = vmatprep.subr.bf16.mxu0 0
    %1432 = vmatpush1.bf16.xpose.msra.mxu0 0
    %1433 = vmatprep.subr.bf16.mxu0 0
    %1434 = vmatpush1.bf16.xpose.msra.mxu0 0
    %1435 = vmatprep.subr.bf16.mxu0 0
    %1436 = vmatpush1.bf16.xpose.msra.mxu0 0
    %1437 = vmatprep.mubr.bf16.mxu0 0
    %1438 = vmatmul.mubr.bf16.gmra.mrb[0].mxu0 %v1400
    %v1439 = vpop.f32.mrb[0].mxu0
    %v1440 = vadd.f32 0.0, %v1439
    %v1441 = vpop.f32.mrb[0].mxu0
    %v1442 = vpop.f32.mrb[0].mxu0
    %v1443 = vadd.f32 0.0, %v1442
    %v1444 = vpop.f32.mrb[0].mxu0
    %1445 = vdwg.mxu0
    %v1446 = vsel %vm382, %v1440, -inf
    %1447 = vmax.xlane.f32.xlu0 %v1446
    %v1448 = vpop.xlane.xlu0 %1447
    %v1449 = vsel %vm382, %v1443, -inf
    %1450 = vmax.xlane.f32.xlu0 %v1449
    %v1451 = vpop.xlane.xlu0 %1450
    %v1452 = vsub.f32 %v1440, %v1448
    %v1453 = vsub.f32 %v1443, %v1451
    %v1454 = vmul.f32 %v1452, 1.442695
    %v1455 = vpow.pop %v1454
    %v1456 = vmul.f32 %v1453, 1.442695
    %v1457 = vpow.pop %v1456
    %v1458 = vsel %vm382, %v1455, 0.0
    %1459 = vadd.xlane.f32.xlu0 %v1458
    %v1460 = vpop.xlane.xlu0 %1459
    %v1461 = vsel %vm382, %v1457, 0.0
    %1462 = vadd.xlane.f32.xlu0 %v1461
    %v1463 = vpop.xlane.xlu0 %1462
    %v1464 = vrcp.pop %v1460
    %v1465 = vrcp.pop %v1463
    %v1466 = vmul.f32 %v1455, %v1464
    %v1467 = vmul.f32 %v1457, %v1465
    %v1468 = vpack.c.bf16 %v1467, %v1466
    %1469 = vrot.lane.b32.xlu0 %v1066, 64
    %v1470 = vpop.permute.xlu0 %1469
    %v1473 = vsel %vm382, %v1468, 0
    %1475 = vmatprep.subr.bf16.mxu0 0
    %1476 = vmatpush1.bf16.msra.mxu0 %v1470
    %1477 = vmatprep.subr.bf16.mxu0 0
    %1478 = vmatpush1.bf16.msra.mxu0 0
    %1479 = vmatprep.subr.bf16.mxu0 0
    %1480 = vmatpush1.bf16.msra.mxu0 0
    %1481 = vmatprep.subr.bf16.mxu0 0
    %1482 = vmatpush1.bf16.msra.mxu0 0
    %1483 = vmatprep.subr.bf16.mxu0 0
    %1484 = vmatpush1.bf16.msra.mxu0 0
    %1485 = vmatprep.subr.bf16.mxu0 0
    %1486 = vmatpush1.bf16.msra.mxu0 0
    %1487 = vmatprep.subr.bf16.mxu0 0
    %1488 = vmatpush1.bf16.msra.mxu0 0
    %1489 = vmatprep.subr.bf16.mxu0 0
    %1490 = vmatpush1.bf16.msra.mxu0 0
    %1491 = vmatprep.subr.bf16.mxu0 0
    %1492 = vmatpush1.bf16.msra.mxu0 0
    %1493 = vmatprep.subr.bf16.mxu0 0
    %1494 = vmatpush1.bf16.msra.mxu0 0
    %1495 = vmatprep.subr.bf16.mxu0 0
    %1496 = vmatpush1.bf16.msra.mxu0 0
    %1497 = vmatprep.subr.bf16.mxu0 0
    %1498 = vmatpush1.bf16.msra.mxu0 0
    %1499 = vmatprep.subr.bf16.mxu0 0
    %1500 = vmatpush1.bf16.msra.mxu0 0
    %1501 = vmatprep.subr.bf16.mxu0 0
    %1502 = vmatpush1.bf16.msra.mxu0 0
    %1503 = vmatprep.subr.bf16.mxu0 0
    %1504 = vmatpush1.bf16.msra.mxu0 0
    %1505 = vmatprep.subr.bf16.mxu0 0
    %1506 = vmatpush1.bf16.msra.mxu0 0
    %1507 = vmatprep.mubr.bf16.mxu0 0
    %1508 = vmatmul.mubr.bf16.gmra.mrb[0].mxu0 %v1473
    %v1509 = vpop.f32.mrb[0].mxu0
    %v1510 = vadd.f32 0.0, %v1509
    %v1511 = vpop.f32.mrb[0].mxu0
    %v1512 = vpop.f32.mrb[0].mxu0
    %v1513 = vadd.f32 0.0, %v1512
    %v1514 = vpop.f32.mrb[0].mxu0
    %1515 = vdwg.mxu0
    %v1516 = vpack.c.bf16 %v1513, %v1510
    %v1518 = vsel %vm334, %v1516, 0
    %1520 = vmatprep.subr.bf16.mxu0 0
    %1521 = vmatpush1.bf16.msra.mxu0 %v830
    %1522 = vmatprep.subr.bf16.mxu0 0
    %1523 = vmatpush1.bf16.msra.mxu0 %v831
    %1524 = vmatprep.subr.bf16.mxu0 0
    %1525 = vmatpush1.bf16.msra.mxu0 0
    %1526 = vmatprep.subr.bf16.mxu0 0
    %1527 = vmatpush1.bf16.msra.mxu0 0
    %1528 = vmatprep.subr.bf16.mxu0 0
    %1529 = vmatpush1.bf16.msra.mxu0 0
    %1530 = vmatprep.subr.bf16.mxu0 0
    %1531 = vmatpush1.bf16.msra.mxu0 0
    %1532 = vmatprep.subr.bf16.mxu0 0
    %1533 = vmatpush1.bf16.msra.mxu0 0
    %1534 = vmatprep.subr.bf16.mxu0 0
    %1535 = vmatpush1.bf16.msra.mxu0 0
    %1536 = vmatprep.subr.bf16.mxu0 0
    %1537 = vmatpush1.bf16.msra.mxu0 0
    %1538 = vmatprep.subr.bf16.mxu0 0
    %1539 = vmatpush1.bf16.msra.mxu0 0
    %1540 = vmatprep.subr.bf16.mxu0 0
    %1541 = vmatpush1.bf16.msra.mxu0 0
    %1542 = vmatprep.subr.bf16.mxu0 0
    %1543 = vmatpush1.bf16.msra.mxu0 0
    %1544 = vmatprep.subr.bf16.mxu0 0
    %1545 = vmatpush1.bf16.msra.mxu0 0
    %1546 = vmatprep.subr.bf16.mxu0 0
    %1547 = vmatpush1.bf16.msra.mxu0 0
    %1548 = vmatprep.subr.bf16.mxu0 0
    %1549 = vmatpush1.bf16.msra.mxu0 0
    %1550 = vmatprep.subr.bf16.mxu0 0
    %1551 = vmatpush1.bf16.msra.mxu0 0
    %1552 = vmatprep.mubr.bf16.mxu0 0
    %1553 = vmatmul.mubr.bf16.gmra.mrb[0].mxu0 %v1518
    %v1554 = vpop.f32.mrb[0].mxu0
    %v1555 = vadd.f32 0.0, %v1554
    %v1556 = vpop.f32.mrb[0].mxu0
    %v1557 = vpop.f32.mrb[0].mxu0
    %v1558 = vadd.f32 0.0, %v1557
    %v1559 = vpop.f32.mrb[0].mxu0
    %1560 = vdwg.mxu0
    %v1561 = vadd.f32 %v1389, %v1555
    %v1562 = vadd.f32 %v1392, %v1558
    %1563 = vrot.lane.b32.xlu0 %v1064, 32
    %v1564 = vpop.permute.xlu0 %1563
    %1565 = vrot.lane.b32.xlu0 %v1065, 32
    %v1566 = vpop.permute.xlu0 %1565
    %v1568 = vsel %vm334, %v1564, 0
    %v1571 = vsel %vm334, %v1566, 0
    %1573 = vmatprep.subr.bf16.mxu0 0
    %1574 = vmatpush1.bf16.xpose.msra.mxu0 %v1571
    %1575 = vmatprep.subr.bf16.mxu0 0
    %1576 = vmatpush1.bf16.xpose.msra.mxu0 0
    %1577 = vmatprep.subr.bf16.mxu0 0
    %1578 = vmatpush1.bf16.xpose.msra.mxu0 0
    %1579 = vmatprep.subr.bf16.mxu0 0
    %1580 = vmatpush1.bf16.xpose.msra.mxu0 0
    %1581 = vmatprep.subr.bf16.mxu0 0
    %1582 = vmatpush1.bf16.xpose.msra.mxu0 0
    %1583 = vmatprep.subr.bf16.mxu0 0
    %1584 = vmatpush1.bf16.xpose.msra.mxu0 0
    %1585 = vmatprep.subr.bf16.mxu0 0
    %1586 = vmatpush1.bf16.xpose.msra.mxu0 0
    %1587 = vmatprep.subr.bf16.mxu0 0
    %1588 = vmatpush1.bf16.xpose.msra.mxu0 0
    %1589 = vmatprep.subr.bf16.mxu0 0
    %1590 = vmatpush1.bf16.xpose.msra.mxu0 0
    %1591 = vmatprep.subr.bf16.mxu0 0
    %1592 = vmatpush1.bf16.xpose.msra.mxu0 0
    %1593 = vmatprep.subr.bf16.mxu0 0
    %1594 = vmatpush1.bf16.xpose.msra.mxu0 0
    %1595 = vmatprep.subr.bf16.mxu0 0
    %1596 = vmatpush1.bf16.xpose.msra.mxu0 0
    %1597 = vmatprep.subr.bf16.mxu0 0
    %1598 = vmatpush1.bf16.xpose.msra.mxu0 0
    %1599 = vmatprep.subr.bf16.mxu0 0
    %1600 = vmatpush1.bf16.xpose.msra.mxu0 0
    %1601 = vmatprep.subr.bf16.mxu0 0
    %1602 = vmatpush1.bf16.xpose.msra.mxu0 0
    %1603 = vmatprep.subr.bf16.mxu0 0
    %1604 = vmatpush1.bf16.xpose.msra.mxu0 0
    %1605 = vmatprep.mubr.bf16.mxu0 0
    %1606 = vmatmul.mubr.bf16.gmra.mrb[0].mxu0 %v1568
    %v1607 = vpop.f32.mrb[0].mxu0
    %v1608 = vadd.f32 0.0, %v1607
    %v1609 = vpop.f32.mrb[0].mxu0
    %v1610 = vpop.f32.mrb[0].mxu0
    %v1611 = vadd.f32 0.0, %v1610
    %v1612 = vpop.f32.mrb[0].mxu0
    %1613 = vdwg.mxu0
    %v1614 = vsel %vm382, %v1608, -inf
    %1615 = vmax.xlane.f32.xlu0 %v1614
    %v1616 = vpop.xlane.xlu0 %1615
    %v1617 = vsel %vm382, %v1611, -inf
    %1618 = vmax.xlane.f32.xlu0 %v1617
    %v1619 = vpop.xlane.xlu0 %1618
    %v1620 = vsub.f32 %v1608, %v1616
    %v1621 = vsub.f32 %v1611, %v1619
    %v1622 = vmul.f32 %v1620, 1.442695
    %v1623 = vpow.pop %v1622
    %v1624 = vmul.f32 %v1621, 1.442695
    %v1625 = vpow.pop %v1624
    %v1626 = vsel %vm382, %v1623, 0.0
    %1627 = vadd.xlane.f32.xlu0 %v1626
    %v1628 = vpop.xlane.xlu0 %1627
    %v1629 = vsel %vm382, %v1625, 0.0
    %1630 = vadd.xlane.f32.xlu0 %v1629
    %v1631 = vpop.xlane.xlu0 %1630
    %v1632 = vrcp.pop %v1628
    %v1633 = vrcp.pop %v1631
    %v1634 = vmul.f32 %v1623, %v1632
    %v1635 = vmul.f32 %v1625, %v1633
    %v1636 = vpack.c.bf16 %v1635, %v1634
    %1637 = vrot.lane.b32.xlu0 %v1066, 32
    %v1638 = vpop.permute.xlu0 %1637
    %v1641 = vsel %vm382, %v1636, 0
    %1643 = vmatprep.subr.bf16.mxu0 0
    %1644 = vmatpush1.bf16.msra.mxu0 %v1638
    %1645 = vmatprep.subr.bf16.mxu0 0
    %1646 = vmatpush1.bf16.msra.mxu0 0
    %1647 = vmatprep.subr.bf16.mxu0 0
    %1648 = vmatpush1.bf16.msra.mxu0 0
    %1649 = vmatprep.subr.bf16.mxu0 0
    %1650 = vmatpush1.bf16.msra.mxu0 0
    %1651 = vmatprep.subr.bf16.mxu0 0
    %1652 = vmatpush1.bf16.msra.mxu0 0
    %1653 = vmatprep.subr.bf16.mxu0 0
    %1654 = vmatpush1.bf16.msra.mxu0 0
    %1655 = vmatprep.subr.bf16.mxu0 0
    %1656 = vmatpush1.bf16.msra.mxu0 0
    %1657 = vmatprep.subr.bf16.mxu0 0
    %1658 = vmatpush1.bf16.msra.mxu0 0
    %1659 = vmatprep.subr.bf16.mxu0 0
    %1660 = vmatpush1.bf16.msra.mxu0 0
    %1661 = vmatprep.subr.bf16.mxu0 0
    %1662 = vmatpush1.bf16.msra.mxu0 0
    %1663 = vmatprep.subr.bf16.mxu0 0
    %1664 = vmatpush1.bf16.msra.mxu0 0
    %1665 = vmatprep.subr.bf16.mxu0 0
    %1666 = vmatpush1.bf16.msra.mxu0 0
    %1667 = vmatprep.subr.bf16.mxu0 0
    %1668 = vmatpush1.bf16.msra.mxu0 0
    %1669 = vmatprep.subr.bf16.mxu0 0
    %1670 = vmatpush1.bf16.msra.mxu0 0
    %1671 = vmatprep.subr.bf16.mxu0 0
    %1672 = vmatpush1.bf16.msra.mxu0 0
    %1673 = vmatprep.subr.bf16.mxu0 0
    %1674 = vmatpush1.bf16.msra.mxu0 0
    %1675 = vmatprep.mubr.bf16.mxu0 0
    %1676 = vmatmul.mubr.bf16.gmra.mrb[0].mxu0 %v1641
    %v1677 = vpop.f32.mrb[0].mxu0
    %v1678 = vadd.f32 0.0, %v1677
    %v1679 = vpop.f32.mrb[0].mxu0
    %v1680 = vpop.f32.mrb[0].mxu0
    %v1681 = vadd.f32 0.0, %v1680
    %v1682 = vpop.f32.mrb[0].mxu0
    %1683 = vdwg.mxu0
    %v1684 = vpack.c.bf16 %v1681, %v1678
    %v1686 = vsel %vm334, %v1684, 0
    %1688 = vmatprep.subr.bf16.mxu0 0
    %1689 = vmatpush1.bf16.msra.mxu0 %v1014
    %1690 = vmatprep.subr.bf16.mxu0 0
    %1691 = vmatpush1.bf16.msra.mxu0 %v1015
    %1692 = vmatprep.subr.bf16.mxu0 0
    %1693 = vmatpush1.bf16.msra.mxu0 0
    %1694 = vmatprep.subr.bf16.mxu0 0
    %1695 = vmatpush1.bf16.msra.mxu0 0
    %1696 = vmatprep.subr.bf16.mxu0 0
    %1697 = vmatpush1.bf16.msra.mxu0 0
    %1698 = vmatprep.subr.bf16.mxu0 0
    %1699 = vmatpush1.bf16.msra.mxu0 0
    %1700 = vmatprep.subr.bf16.mxu0 0
    %1701 = vmatpush1.bf16.msra.mxu0 0
    %1702 = vmatprep.subr.bf16.mxu0 0
    %1703 = vmatpush1.bf16.msra.mxu0 0
    %1704 = vmatprep.subr.bf16.mxu0 0
    %1705 = vmatpush1.bf16.msra.mxu0 0
    %1706 = vmatprep.subr.bf16.mxu0 0
    %1707 = vmatpush1.bf16.msra.mxu0 0
    %1708 = vmatprep.subr.bf16.mxu0 0
    %1709 = vmatpush1.bf16.msra.mxu0 0
    %1710 = vmatprep.subr.bf16.mxu0 0
    %1711 = vmatpush1.bf16.msra.mxu0 0
    %1712 = vmatprep.subr.bf16.mxu0 0
    %1713 = vmatpush1.bf16.msra.mxu0 0
    %1714 = vmatprep.subr.bf16.mxu0 0
    %1715 = vmatpush1.bf16.msra.mxu0 0
    %1716 = vmatprep.subr.bf16.mxu0 0
    %1717 = vmatpush1.bf16.msra.mxu0 0
    %1718 = vmatprep.subr.bf16.mxu0 0
    %1719 = vmatpush1.bf16.msra.mxu0 0
    %1720 = vmatprep.mubr.bf16.mxu0 0
    %1721 = vmatmul.mubr.bf16.gmra.mrb[0].mxu0 %v1686
    %v1722 = vpop.f32.mrb[0].mxu0
    %v1723 = vadd.f32 0.0, %v1722
    %v1724 = vpop.f32.mrb[0].mxu0
    %v1725 = vpop.f32.mrb[0].mxu0
    %v1726 = vadd.f32 0.0, %v1725
    %v1727 = vpop.f32.mrb[0].mxu0
    %1728 = vdwg.mxu0
    %v1729 = vadd.f32 %v1561, %v1723
    %v1730 = vadd.f32 %v1562, %v1726
    %v1731 = vld [vmem:[%s4] sm:$0x1]
    %v1733 = vlaneseq
    %v1734 = vshrl.u32 %v1733, 7
    %v1735 = vsub.s32 0, %v1734
    %v1736 = vrot.slane %v1731, %v1735
    %v1738 = vadd.f32 %v1062, %v1736
    %v1739 = vadd.f32 %v1063, %v1736
    %v1740 = vadd.f32 %v1729, %v1736
    %v1741 = vadd.f32 %v1730, %v1736
    %v1742 = vadd.f32 %v46, %v1738
    %v1743 = vadd.f32 %v47, %v1739
    %v1744 = vadd.f32 %v48, %v1740
    %v1745 = vadd.f32 %v49, %v1741
    %v1746 = vld [vmem:[%s5] sm:$0x1]
    %v1747 = vld [vmem:[%s6] sm:$0x1]
    %1748 = vadd.xlane.f32.xlu0 %v1742
    %v1749 = vpop.xlane.xlu0 %1748
    %1750 = vadd.xlane.f32.xlu0 %v1743
    %v1751 = vpop.xlane.xlu0 %1750
    %1752 = vadd.xlane.f32.xlu0 %v1744
    %v1753 = vpop.xlane.xlu0 %1752
    %1754 = vadd.xlane.f32.xlu0 %v1745
    %v1755 = vpop.xlane.xlu0 %1754
    %v1756 = vrcp.pop 128.0
    %v1757 = vmul.f32 %v1749, %v1756
    %v1758 = vmul.f32 %v1751, %v1756
    %v1759 = vmul.f32 %v1753, %v1756
    %v1760 = vmul.f32 %v1755, %v1756
    %v1761 = vsub.f32 %v1742, %v1757
    %v1762 = vsub.f32 %v1743, %v1758
    %v1763 = vsub.f32 %v1744, %v1759
    %v1764 = vsub.f32 %v1745, %v1760
    %v1765 = vmul.f32 %v1761, %v1761
    %v1766 = vmul.f32 %v1762, %v1762
    %v1767 = vmul.f32 %v1763, %v1763
    %v1768 = vmul.f32 %v1764, %v1764
    %1769 = vadd.xlane.f32.xlu0 %v1765
    %v1770 = vpop.xlane.xlu0 %1769
    %1771 = vadd.xlane.f32.xlu0 %v1766
    %v1772 = vpop.xlane.xlu0 %1771
    %1773 = vadd.xlane.f32.xlu0 %v1767
    %v1774 = vpop.xlane.xlu0 %1773
    %1775 = vadd.xlane.f32.xlu0 %v1768
    %v1776 = vpop.xlane.xlu0 %1775
    %v1777 = vmul.f32 %v1770, %v1756
    %v1778 = vmul.f32 %v1772, %v1756
    %v1779 = vmul.f32 %v1774, %v1756
    %v1780 = vmul.f32 %v1776, %v1756
    %v1781 = vadd.f32 %v1777, 1e-05
    %v1782 = vadd.f32 %v1778, 1e-05
    %v1783 = vadd.f32 %v1779, 1e-05
    %v1784 = vadd.f32 %v1780, 1e-05
    %v1785 = vrsqrt.pop %v1781
    %v1786 = vrsqrt.pop %v1782
    %v1787 = vrsqrt.pop %v1783
    %v1788 = vrsqrt.pop %v1784
    %v1789 = vmul.f32 %v1761, %v1785
    %v1790 = vmul.f32 %v1762, %v1786
    %v1791 = vmul.f32 %v1763, %v1787
    %v1792 = vmul.f32 %v1764, %v1788
    %v1794 = vlaneseq
    %v1795 = vshrl.u32 %v1794, 7
    %v1796 = vsub.s32 0, %v1795
    %v1797 = vrot.slane %v1746, %v1796
    %v1799 = vmul.f32 %v1789, %v1797
    %v1800 = vmul.f32 %v1790, %v1797
    %v1801 = vmul.f32 %v1791, %v1797
    %v1802 = vmul.f32 %v1792, %v1797
    %v1804 = vlaneseq
    %v1805 = vshrl.u32 %v1804, 7
    %v1806 = vsub.s32 0, %v1805
    %v1807 = vrot.slane %v1747, %v1806
    %v1809 = vadd.f32 %v1799, %v1807
    %v1810 = vadd.f32 %v1800, %v1807
    %v1811 = vadd.f32 %v1801, %v1807
    %v1812 = vadd.f32 %v1802, %v1807
    %v1813 = vpack.c.bf16 %v1810, %v1809
    %v1814 = vpack.c.bf16 %v1812, %v1811
    %v1815 = vld [vmem:[%s7] sm:$0xff]
    %v1816 = vld [vmem:[%s7 + $0x8] sm:$0xff]
    %v1817 = vld [vmem:[%s7 + $0x10] sm:$0xff]
    %v1818 = vld [vmem:[%s7 + $0x18] sm:$0xff]
    %v1819 = vld [vmem:[%s7 + $0x20] sm:$0xff]
    %v1820 = vld [vmem:[%s7 + $0x28] sm:$0xff]
    %v1821 = vld [vmem:[%s7 + $0x30] sm:$0xff]
    %v1822 = vld [vmem:[%s7 + $0x38] sm:$0xff]
    %v1823 = vld [vmem:[%s7 + $0x40] sm:$0xff]
    %v1824 = vld [vmem:[%s7 + $0x48] sm:$0xff]
    %v1825 = vld [vmem:[%s7 + $0x50] sm:$0xff]
    %v1826 = vld [vmem:[%s7 + $0x58] sm:$0xff]
    %v1827 = vld [vmem:[%s7 + $0x60] sm:$0xff]
    %v1828 = vld [vmem:[%s7 + $0x68] sm:$0xff]
    %v1829 = vld [vmem:[%s7 + $0x70] sm:$0xff]
    %v1830 = vld [vmem:[%s7 + $0x78] sm:$0xff]
    %v1831 = vld [vmem:[%s7 + $0x80] sm:$0xff]
    %v1832 = vld [vmem:[%s7 + $0x88] sm:$0xff]
    %v1833 = vld [vmem:[%s7 + $0x90] sm:$0xff]
    %v1834 = vld [vmem:[%s7 + $0x98] sm:$0xff]
    %v1835 = vld [vmem:[%s7 + $0xa0] sm:$0xff]
    %v1836 = vld [vmem:[%s7 + $0xa8] sm:$0xff]
    %v1837 = vld [vmem:[%s7 + $0xb0] sm:$0xff]
    %v1838 = vld [vmem:[%s7 + $0xb8] sm:$0xff]
    %v1839 = vld [vmem:[%s7 + $0xc0] sm:$0xff]
    %v1840 = vld [vmem:[%s7 + $0xc8] sm:$0xff]
    %v1841 = vld [vmem:[%s7 + $0xd0] sm:$0xff]
    %v1842 = vld [vmem:[%s7 + $0xd8] sm:$0xff]
    %v1843 = vld [vmem:[%s7 + $0xe0] sm:$0xff]
    %v1844 = vld [vmem:[%s7 + $0xe8] sm:$0xff]
    %v1845 = vld [vmem:[%s7 + $0xf0] sm:$0xff]
    %v1846 = vld [vmem:[%s7 + $0xf8] sm:$0xff]
    %v1847 = vld [vmem:[%s8] sm:$0xf]
    %v1849 = vlaneseq
    %v1850 = vshrl.u32 %v1849, 7
    %v1851 = vsub.s32 0, %v1850
    %v1852 = vrot.slane %v1847, %v1851
    %v1853 = vlaneseq
    %v1854 = vshrl.u32 %v1853, 7
    %v1855 = vsub.s32 1, %v1854
    %v1856 = vrot.slane %v1847, %v1855
    %v1857 = vlaneseq
    %v1858 = vshrl.u32 %v1857, 7
    %v1859 = vsub.s32 2, %v1858
    %v1860 = vrot.slane %v1847, %v1859
    %v1861 = vlaneseq
    %v1862 = vshrl.u32 %v1861, 7
    %v1863 = vsub.s32 3, %v1862
    %v1864 = vrot.slane %v1847, %v1863
    %v1901 = vunpack.c.l.b16 %v1815
    %v1902 = vunpack.c.h.b16 %v1815
    %v1903 = vunpack.c.l.b16 %v1816
    %v1904 = vunpack.c.h.b16 %v1816
    %v1905 = vunpack.c.l.b16 %v1817
    %v1906 = vunpack.c.h.b16 %v1817
    %v1907 = vunpack.c.l.b16 %v1818
    %v1908 = vunpack.c.h.b16 %v1818
    %v1909 = vunpack.c.l.b16 %v1819
    %v1910 = vunpack.c.h.b16 %v1819
    %v1911 = vunpack.c.l.b16 %v1820
    %v1912 = vunpack.c.h.b16 %v1820
    %v1913 = vunpack.c.l.b16 %v1821
    %v1914 = vunpack.c.h.b16 %v1821
    %v1915 = vunpack.c.l.b16 %v1822
    %v1916 = vunpack.c.h.b16 %v1822
    %v1917 = vunpack.c.l.b16 %v1823
    %v1918 = vunpack.c.h.b16 %v1823
    %v1919 = vunpack.c.l.b16 %v1824
    %v1920 = vunpack.c.h.b16 %v1824
    %v1921 = vunpack.c.l.b16 %v1825
    %v1922 = vunpack.c.h.b16 %v1825
    %v1923 = vunpack.c.l.b16 %v1826
    %v1924 = vunpack.c.h.b16 %v1826
    %v1925 = vunpack.c.l.b16 %v1827
    %v1926 = vunpack.c.h.b16 %v1827
    %v1927 = vunpack.c.l.b16 %v1828
    %v1928 = vunpack.c.h.b16 %v1828
    %v1929 = vunpack.c.l.b16 %v1829
    %v1930 = vunpack.c.h.b16 %v1829
    %v1931 = vunpack.c.l.b16 %v1830
    %v1932 = vunpack.c.h.b16 %v1830
    %v1933 = vunpack.c.l.b16 %v1831
    %v1934 = vunpack.c.h.b16 %v1831
    %v1935 = vunpack.c.l.b16 %v1832
    %v1936 = vunpack.c.h.b16 %v1832
    %v1937 = vunpack.c.l.b16 %v1833
    %v1938 = vunpack.c.h.b16 %v1833
    %v1939 = vunpack.c.l.b16 %v1834
    %v1940 = vunpack.c.h.b16 %v1834
    %v1941 = vunpack.c.l.b16 %v1835
    %v1942 = vunpack.c.h.b16 %v1835
    %v1943 = vunpack.c.l.b16 %v1836
    %v1944 = vunpack.c.h.b16 %v1836
    %v1945 = vunpack.c.l.b16 %v1837
    %v1946 = vunpack.c.h.b16 %v1837
    %v1947 = vunpack.c.l.b16 %v1838
    %v1948 = vunpack.c.h.b16 %v1838
    %v1949 = vunpack.c.l.b16 %v1839
    %v1950 = vunpack.c.h.b16 %v1839
    %v1951 = vunpack.c.l.b16 %v1840
    %v1952 = vunpack.c.h.b16 %v1840
    %v1953 = vunpack.c.l.b16 %v1841
    %v1954 = vunpack.c.h.b16 %v1841
    %v1955 = vunpack.c.l.b16 %v1842
    %v1956 = vunpack.c.h.b16 %v1842
    %v1957 = vunpack.c.l.b16 %v1843
    %v1958 = vunpack.c.h.b16 %v1843
    %v1959 = vunpack.c.l.b16 %v1844
    %v1960 = vunpack.c.h.b16 %v1844
    %v1961 = vunpack.c.l.b16 %v1845
    %v1962 = vunpack.c.h.b16 %v1845
    %v1963 = vunpack.c.l.b16 %v1846
    %v1964 = vunpack.c.h.b16 %v1846
    %v1965 = vpack.c.b16 %v1905, %v1901
    %v1966 = vpack.c.b16 %v1906, %v1902
    %v1967 = vpack.c.b16 %v1907, %v1903
    %v1968 = vpack.c.b16 %v1908, %v1904
    %v1969 = vpack.c.b16 %v1913, %v1909
    %v1970 = vpack.c.b16 %v1914, %v1910
    %v1971 = vpack.c.b16 %v1915, %v1911
    %v1972 = vpack.c.b16 %v1916, %v1912
    %v1973 = vpack.c.b16 %v1921, %v1917
    %v1974 = vpack.c.b16 %v1922, %v1918
    %v1975 = vpack.c.b16 %v1923, %v1919
    %v1976 = vpack.c.b16 %v1924, %v1920
    %v1977 = vpack.c.b16 %v1929, %v1925
    %v1978 = vpack.c.b16 %v1930, %v1926
    %v1979 = vpack.c.b16 %v1931, %v1927
    %v1980 = vpack.c.b16 %v1932, %v1928
    %v1981 = vpack.c.b16 %v1937, %v1933
    %v1982 = vpack.c.b16 %v1938, %v1934
    %v1983 = vpack.c.b16 %v1939, %v1935
    %v1984 = vpack.c.b16 %v1940, %v1936
    %v1985 = vpack.c.b16 %v1945, %v1941
    %v1986 = vpack.c.b16 %v1946, %v1942
    %v1987 = vpack.c.b16 %v1947, %v1943
    %v1988 = vpack.c.b16 %v1948, %v1944
    %v1989 = vpack.c.b16 %v1953, %v1949
    %v1990 = vpack.c.b16 %v1954, %v1950
    %v1991 = vpack.c.b16 %v1955, %v1951
    %v1992 = vpack.c.b16 %v1956, %v1952
    %v1993 = vpack.c.b16 %v1961, %v1957
    %v1994 = vpack.c.b16 %v1962, %v1958
    %v1995 = vpack.c.b16 %v1963, %v1959
    %v1996 = vpack.c.b16 %v1964, %v1960
    %2029 = vmatprep.subr.bf16.mxu0 %v1966
    %2030 = vmatpush1.bf16.msra.mxu0 %v1965
    %2031 = vmatprep.subr.bf16.mxu0 %v1970
    %2032 = vmatpush1.bf16.msra.mxu0 %v1969
    %2033 = vmatprep.subr.bf16.mxu0 %v1974
    %2034 = vmatpush1.bf16.msra.mxu0 %v1973
    %2035 = vmatprep.subr.bf16.mxu0 %v1978
    %2036 = vmatpush1.bf16.msra.mxu0 %v1977
    %2037 = vmatprep.subr.bf16.mxu0 %v1982
    %2038 = vmatpush1.bf16.msra.mxu0 %v1981
    %2039 = vmatprep.subr.bf16.mxu0 %v1986
    %2040 = vmatpush1.bf16.msra.mxu0 %v1985
    %2041 = vmatprep.subr.bf16.mxu0 %v1990
    %2042 = vmatpush1.bf16.msra.mxu0 %v1989
    %2043 = vmatprep.subr.bf16.mxu0 %v1994
    %2044 = vmatpush1.bf16.msra.mxu0 %v1993
    %2045 = vmatprep.subr.bf16.mxu0 0
    %2046 = vmatpush1.bf16.msra.mxu0 0
    %2047 = vmatprep.subr.bf16.mxu0 0
    %2048 = vmatpush1.bf16.msra.mxu0 0
    %2049 = vmatprep.subr.bf16.mxu0 0
    %2050 = vmatpush1.bf16.msra.mxu0 0
    %2051 = vmatprep.subr.bf16.mxu0 0
    %2052 = vmatpush1.bf16.msra.mxu0 0
    %2053 = vmatprep.subr.bf16.mxu0 0
    %2054 = vmatpush1.bf16.msra.mxu0 0
    %2055 = vmatprep.subr.bf16.mxu0 0
    %2056 = vmatpush1.bf16.msra.mxu0 0
    %2057 = vmatprep.subr.bf16.mxu0 0
    %2058 = vmatpush1.bf16.msra.mxu0 0
    %2059 = vmatprep.subr.bf16.mxu0 0
    %2060 = vmatpush1.bf16.msra.mxu0 0
    %2061 = vmatprep.mubr.bf16.mxu0 0
    %2062 = vmatmul.mubr.bf16.gmra.mrb[0].mxu0 %v1813
    %v2063 = vpop.f32.mrb[0].mxu0
    %v2064 = vadd.f32 %v1852, %v2063
    %v2065 = vpop.f32.mrb[0].mxu0
    %v2066 = vadd.f32 %v1856, %v2065
    %v2067 = vpop.f32.mrb[0].mxu0
    %v2068 = vadd.f32 %v1852, %v2067
    %v2069 = vpop.f32.mrb[0].mxu0
    %v2070 = vadd.f32 %v1856, %v2069
    %2071 = vmatprep.mubr.bf16.mxu0 0
    %2072 = vmatmul.mubr.bf16.gmra.mrb[0].mxu0 %v1814
    %v2073 = vpop.f32.mrb[0].mxu0
    %v2074 = vadd.f32 %v1852, %v2073
    %v2075 = vpop.f32.mrb[0].mxu0
    %v2076 = vadd.f32 %v1856, %v2075
    %v2077 = vpop.f32.mrb[0].mxu0
    %v2078 = vadd.f32 %v1852, %v2077
    %v2079 = vpop.f32.mrb[0].mxu0
    %v2080 = vadd.f32 %v1856, %v2079
    %2081 = vdwg.mxu0
    %2082 = vmatprep.subr.bf16.mxu0 %v1968
    %2083 = vmatpush1.bf16.msra.mxu0 %v1967
    %2084 = vmatprep.subr.bf16.mxu0 %v1972
    %2085 = vmatpush1.bf16.msra.mxu0 %v1971
    %2086 = vmatprep.subr.bf16.mxu0 %v1976
    %2087 = vmatpush1.bf16.msra.mxu0 %v1975
    %2088 = vmatprep.subr.bf16.mxu0 %v1980
    %2089 = vmatpush1.bf16.msra.mxu0 %v1979
    %2090 = vmatprep.subr.bf16.mxu0 %v1984
    %2091 = vmatpush1.bf16.msra.mxu0 %v1983
    %2092 = vmatprep.subr.bf16.mxu0 %v1988
    %2093 = vmatpush1.bf16.msra.mxu0 %v1987
    %2094 = vmatprep.subr.bf16.mxu0 %v1992
    %2095 = vmatpush1.bf16.msra.mxu0 %v1991
    %2096 = vmatprep.subr.bf16.mxu0 %v1996
    %2097 = vmatpush1.bf16.msra.mxu0 %v1995
    %2098 = vmatprep.subr.bf16.mxu0 0
    %2099 = vmatpush1.bf16.msra.mxu0 0
    %2100 = vmatprep.subr.bf16.mxu0 0
    %2101 = vmatpush1.bf16.msra.mxu0 0
    %2102 = vmatprep.subr.bf16.mxu0 0
    %2103 = vmatpush1.bf16.msra.mxu0 0
    %2104 = vmatprep.subr.bf16.mxu0 0
    %2105 = vmatpush1.bf16.msra.mxu0 0
    %2106 = vmatprep.subr.bf16.mxu0 0
    %2107 = vmatpush1.bf16.msra.mxu0 0
    %2108 = vmatprep.subr.bf16.mxu0 0
    %2109 = vmatpush1.bf16.msra.mxu0 0
    %2110 = vmatprep.subr.bf16.mxu0 0
    %2111 = vmatpush1.bf16.msra.mxu0 0
    %2112 = vmatprep.subr.bf16.mxu0 0
    %2113 = vmatpush1.bf16.msra.mxu0 0
    %2114 = vmatprep.mubr.bf16.mxu0 0
    %2115 = vmatmul.mubr.bf16.gmra.mrb[0].mxu0 %v1813
    %v2116 = vpop.f32.mrb[0].mxu0
    %v2117 = vadd.f32 %v1860, %v2116
    %v2118 = vpop.f32.mrb[0].mxu0
    %v2119 = vadd.f32 %v1864, %v2118
    %v2120 = vpop.f32.mrb[0].mxu0
    %v2121 = vadd.f32 %v1860, %v2120
    %v2122 = vpop.f32.mrb[0].mxu0
    %v2123 = vadd.f32 %v1864, %v2122
    %2124 = vmatprep.mubr.bf16.mxu0 0
    %2125 = vmatmul.mubr.bf16.gmra.mrb[0].mxu0 %v1814
    %v2126 = vpop.f32.mrb[0].mxu0
    %v2127 = vadd.f32 %v1860, %v2126
    %v2128 = vpop.f32.mrb[0].mxu0
    %v2129 = vadd.f32 %v1864, %v2128
    %v2130 = vpop.f32.mrb[0].mxu0
    %v2131 = vadd.f32 %v1860, %v2130
    %v2132 = vpop.f32.mrb[0].mxu0
    %v2133 = vadd.f32 %v1864, %v2132
    %2134 = vdwg.mxu0
    %v2135 = vmul.f32 %v2064, 0.5
    %v2136 = vmul.f32 %v2066, 0.5
    %v2137 = vmul.f32 %v2117, 0.5
    %v2138 = vmul.f32 %v2119, 0.5
    %v2139 = vmul.f32 %v2068, 0.5
    %v2140 = vmul.f32 %v2070, 0.5
    %v2141 = vmul.f32 %v2121, 0.5
    %v2142 = vmul.f32 %v2123, 0.5
    %v2143 = vmul.f32 %v2074, 0.5
    %v2144 = vmul.f32 %v2076, 0.5
    %v2145 = vmul.f32 %v2127, 0.5
    %v2146 = vmul.f32 %v2129, 0.5
    %v2147 = vmul.f32 %v2078, 0.5
    %v2148 = vmul.f32 %v2080, 0.5
    %v2149 = vmul.f32 %v2131, 0.5
    %v2150 = vmul.f32 %v2133, 0.5
    %v2151 = vmul.f32 %v2064, 0.044715
    %v2152 = vmul.f32 %v2066, 0.044715
    %v2153 = vmul.f32 %v2117, 0.044715
    %v2154 = vmul.f32 %v2119, 0.044715
    %v2155 = vmul.f32 %v2068, 0.044715
    %v2156 = vmul.f32 %v2070, 0.044715
    %v2157 = vmul.f32 %v2121, 0.044715
    %v2158 = vmul.f32 %v2123, 0.044715
    %v2159 = vmul.f32 %v2074, 0.044715
    %v2160 = vmul.f32 %v2076, 0.044715
    %v2161 = vmul.f32 %v2127, 0.044715
    %v2162 = vmul.f32 %v2129, 0.044715
    %v2163 = vmul.f32 %v2078, 0.044715
    %v2164 = vmul.f32 %v2080, 0.044715
    %v2165 = vmul.f32 %v2131, 0.044715
    %v2166 = vmul.f32 %v2133, 0.044715
    %v2167 = vmul.f32 %v2151, %v2064
    %v2168 = vmul.f32 %v2152, %v2066
    %v2169 = vmul.f32 %v2153, %v2117
    %v2170 = vmul.f32 %v2154, %v2119
    %v2171 = vmul.f32 %v2155, %v2068
    %v2172 = vmul.f32 %v2156, %v2070
    %v2173 = vmul.f32 %v2157, %v2121
    %v2174 = vmul.f32 %v2158, %v2123
    %v2175 = vmul.f32 %v2159, %v2074
    %v2176 = vmul.f32 %v2160, %v2076
    %v2177 = vmul.f32 %v2161, %v2127
    %v2178 = vmul.f32 %v2162, %v2129
    %v2179 = vmul.f32 %v2163, %v2078
    %v2180 = vmul.f32 %v2164, %v2080
    %v2181 = vmul.f32 %v2165, %v2131
    %v2182 = vmul.f32 %v2166, %v2133
    %v2183 = vmul.f32 %v2167, %v2064
    %v2184 = vmul.f32 %v2168, %v2066
    %v2185 = vmul.f32 %v2169, %v2117
    %v2186 = vmul.f32 %v2170, %v2119
    %v2187 = vmul.f32 %v2171, %v2068
    %v2188 = vmul.f32 %v2172, %v2070
    %v2189 = vmul.f32 %v2173, %v2121
    %v2190 = vmul.f32 %v2174, %v2123
    %v2191 = vmul.f32 %v2175, %v2074
    %v2192 = vmul.f32 %v2176, %v2076
    %v2193 = vmul.f32 %v2177, %v2127
    %v2194 = vmul.f32 %v2178, %v2129
    %v2195 = vmul.f32 %v2179, %v2078
    %v2196 = vmul.f32 %v2180, %v2080
    %v2197 = vmul.f32 %v2181, %v2131
    %v2198 = vmul.f32 %v2182, %v2133
    %v2199 = vadd.f32 %v2064, %v2183
    %v2200 = vadd.f32 %v2066, %v2184
    %v2201 = vadd.f32 %v2117, %v2185
    %v2202 = vadd.f32 %v2119, %v2186
    %v2203 = vadd.f32 %v2068, %v2187
    %v2204 = vadd.f32 %v2070, %v2188
    %v2205 = vadd.f32 %v2121, %v2189
    %v2206 = vadd.f32 %v2123, %v2190
    %v2207 = vadd.f32 %v2074, %v2191
    %v2208 = vadd.f32 %v2076, %v2192
    %v2209 = vadd.f32 %v2127, %v2193
    %v2210 = vadd.f32 %v2129, %v2194
    %v2211 = vadd.f32 %v2078, %v2195
    %v2212 = vadd.f32 %v2080, %v2196
    %v2213 = vadd.f32 %v2131, %v2197
    %v2214 = vadd.f32 %v2133, %v2198
    %v2215 = vmul.f32 %v2199, 0.7978846
    %v2216 = vmul.f32 %v2200, 0.7978846
    %v2217 = vmul.f32 %v2201, 0.7978846
    %v2218 = vmul.f32 %v2202, 0.7978846
    %v2219 = vmul.f32 %v2203, 0.7978846
    %v2220 = vmul.f32 %v2204, 0.7978846
    %v2221 = vmul.f32 %v2205, 0.7978846
    %v2222 = vmul.f32 %v2206, 0.7978846
    %v2223 = vmul.f32 %v2207, 0.7978846
    %v2224 = vmul.f32 %v2208, 0.7978846
    %v2225 = vmul.f32 %v2209, 0.7978846
    %v2226 = vmul.f32 %v2210, 0.7978846
    %v2227 = vmul.f32 %v2211, 0.7978846
    %v2228 = vmul.f32 %v2212, 0.7978846
    %v2229 = vmul.f32 %v2213, 0.7978846
    %v2230 = vmul.f32 %v2214, 0.7978846
    %v2231 = vtanh.pop %v2215
    %v2232 = vtanh.pop %v2216
    %v2233 = vtanh.pop %v2217
    %v2234 = vtanh.pop %v2218
    %v2235 = vtanh.pop %v2219
    %v2236 = vtanh.pop %v2220
    %v2237 = vtanh.pop %v2221
    %v2238 = vtanh.pop %v2222
    %v2239 = vtanh.pop %v2223
    %v2240 = vtanh.pop %v2224
    %v2241 = vtanh.pop %v2225
    %v2242 = vtanh.pop %v2226
    %v2243 = vtanh.pop %v2227
    %v2244 = vtanh.pop %v2228
    %v2245 = vtanh.pop %v2229
    %v2246 = vtanh.pop %v2230
    %v2247 = vadd.f32 %v2231, 1.0
    %v2248 = vadd.f32 %v2232, 1.0
    %v2249 = vadd.f32 %v2233, 1.0
    %v2250 = vadd.f32 %v2234, 1.0
    %v2251 = vadd.f32 %v2235, 1.0
    %v2252 = vadd.f32 %v2236, 1.0
    %v2253 = vadd.f32 %v2237, 1.0
    %v2254 = vadd.f32 %v2238, 1.0
    %v2255 = vadd.f32 %v2239, 1.0
    %v2256 = vadd.f32 %v2240, 1.0
    %v2257 = vadd.f32 %v2241, 1.0
    %v2258 = vadd.f32 %v2242, 1.0
    %v2259 = vadd.f32 %v2243, 1.0
    %v2260 = vadd.f32 %v2244, 1.0
    %v2261 = vadd.f32 %v2245, 1.0
    %v2262 = vadd.f32 %v2246, 1.0
    %v2263 = vmul.f32 %v2135, %v2247
    %v2264 = vmul.f32 %v2136, %v2248
    %v2265 = vmul.f32 %v2137, %v2249
    %v2266 = vmul.f32 %v2138, %v2250
    %v2267 = vmul.f32 %v2139, %v2251
    %v2268 = vmul.f32 %v2140, %v2252
    %v2269 = vmul.f32 %v2141, %v2253
    %v2270 = vmul.f32 %v2142, %v2254
    %v2271 = vmul.f32 %v2143, %v2255
    %v2272 = vmul.f32 %v2144, %v2256
    %v2273 = vmul.f32 %v2145, %v2257
    %v2274 = vmul.f32 %v2146, %v2258
    %v2275 = vmul.f32 %v2147, %v2259
    %v2276 = vmul.f32 %v2148, %v2260
    %v2277 = vmul.f32 %v2149, %v2261
    %v2278 = vmul.f32 %v2150, %v2262
    %v2279 = vpack.c.bf16 %v2267, %v2263
    %v2280 = vpack.c.bf16 %v2268, %v2264
    %v2281 = vpack.c.bf16 %v2269, %v2265
    %v2282 = vpack.c.bf16 %v2270, %v2266
    %v2283 = vpack.c.bf16 %v2275, %v2271
    %v2284 = vpack.c.bf16 %v2276, %v2272
    %v2285 = vpack.c.bf16 %v2277, %v2273
    %v2286 = vpack.c.bf16 %v2278, %v2274
    %v2287 = vld [vmem:[%s9] sm:$0xf]
    %v2288 = vld [vmem:[%s9 + $0x4] sm:$0xf]
    %v2289 = vld [vmem:[%s9 + $0x8] sm:$0xf]
    %v2290 = vld [vmem:[%s9 + $0xc] sm:$0xf]
    %v2291 = vld [vmem:[%s9 + $0x10] sm:$0xf]
    %v2292 = vld [vmem:[%s9 + $0x14] sm:$0xf]
    %v2293 = vld [vmem:[%s9 + $0x18] sm:$0xf]
    %v2294 = vld [vmem:[%s9 + $0x1c] sm:$0xf]
    %v2295 = vld [vmem:[%s9 + $0x20] sm:$0xf]
    %v2296 = vld [vmem:[%s9 + $0x24] sm:$0xf]
    %v2297 = vld [vmem:[%s9 + $0x28] sm:$0xf]
    %v2298 = vld [vmem:[%s9 + $0x2c] sm:$0xf]
    %v2299 = vld [vmem:[%s9 + $0x30] sm:$0xf]
    %v2300 = vld [vmem:[%s9 + $0x34] sm:$0xf]
    %v2301 = vld [vmem:[%s9 + $0x38] sm:$0xf]
    %v2302 = vld [vmem:[%s9 + $0x3c] sm:$0xf]
    %v2303 = vld [vmem:[%s9 + $0x40] sm:$0xf]
    %v2304 = vld [vmem:[%s9 + $0x44] sm:$0xf]
    %v2305 = vld [vmem:[%s9 + $0x48] sm:$0xf]
    %v2306 = vld [vmem:[%s9 + $0x4c] sm:$0xf]
    %v2307 = vld [vmem:[%s9 + $0x50] sm:$0xf]
    %v2308 = vld [vmem:[%s9 + $0x54] sm:$0xf]
    %v2309 = vld [vmem:[%s9 + $0x58] sm:$0xf]
    %v2310 = vld [vmem:[%s9 + $0x5c] sm:$0xf]
    %v2311 = vld [vmem:[%s9 + $0x60] sm:$0xf]
    %v2312 = vld [vmem:[%s9 + $0x64] sm:$0xf]
    %v2313 = vld [vmem:[%s9 + $0x68] sm:$0xf]
    %v2314 = vld [vmem:[%s9 + $0x6c] sm:$0xf]
    %v2315 = vld [vmem:[%s9 + $0x70] sm:$0xf]
    %v2316 = vld [vmem:[%s9 + $0x74] sm:$0xf]
    %v2317 = vld [vmem:[%s9 + $0x78] sm:$0xf]
    %v2318 = vld [vmem:[%s9 + $0x7c] sm:$0xf]
    %v2319 = vld [vmem:[%s9 + $0x80] sm:$0xf]
    %v2320 = vld [vmem:[%s9 + $0x84] sm:$0xf]
    %v2321 = vld [vmem:[%s9 + $0x88] sm:$0xf]
    %v2322 = vld [vmem:[%s9 + $0x8c] sm:$0xf]
    %v2323 = vld [vmem:[%s9 + $0x90] sm:$0xf]
    %v2324 = vld [vmem:[%s9 + $0x94] sm:$0xf]
    %v2325 = vld [vmem:[%s9 + $0x98] sm:$0xf]
    %v2326 = vld [vmem:[%s9 + $0x9c] sm:$0xf]
    %v2327 = vld [vmem:[%s9 + $0xa0] sm:$0xf]
    %v2328 = vld [vmem:[%s9 + $0xa4] sm:$0xf]
    %v2329 = vld [vmem:[%s9 + $0xa8] sm:$0xf]
    %v2330 = vld [vmem:[%s9 + $0xac] sm:$0xf]
    %v2331 = vld [vmem:[%s9 + $0xb0] sm:$0xf]
    %v2332 = vld [vmem:[%s9 + $0xb4] sm:$0xf]
    %v2333 = vld [vmem:[%s9 + $0xb8] sm:$0xf]
    %v2334 = vld [vmem:[%s9 + $0xbc] sm:$0xf]
    %v2335 = vld [vmem:[%s9 + $0xc0] sm:$0xf]
    %v2336 = vld [vmem:[%s9 + $0xc4] sm:$0xf]
    %v2337 = vld [vmem:[%s9 + $0xc8] sm:$0xf]
    %v2338 = vld [vmem:[%s9 + $0xcc] sm:$0xf]
    %v2339 = vld [vmem:[%s9 + $0xd0] sm:$0xf]
    %v2340 = vld [vmem:[%s9 + $0xd4] sm:$0xf]
    %v2341 = vld [vmem:[%s9 + $0xd8] sm:$0xf]
    %v2342 = vld [vmem:[%s9 + $0xdc] sm:$0xf]
    %v2343 = vld [vmem:[%s9 + $0xe0] sm:$0xf]
    %v2344 = vld [vmem:[%s9 + $0xe4] sm:$0xf]
    %v2345 = vld [vmem:[%s9 + $0xe8] sm:$0xf]
    %v2346 = vld [vmem:[%s9 + $0xec] sm:$0xf]
    %v2347 = vld [vmem:[%s9 + $0xf0] sm:$0xf]
    %v2348 = vld [vmem:[%s9 + $0xf4] sm:$0xf]
    %v2349 = vld [vmem:[%s9 + $0xf8] sm:$0xf]
    %v2350 = vld [vmem:[%s9 + $0xfc] sm:$0xf]
    %v2351 = vld [vmem:[%s10] sm:$0x1]
    %v2353 = vlaneseq
    %v2354 = vshrl.u32 %v2353, 7
    %v2355 = vsub.s32 0, %v2354
    %v2356 = vrot.slane %v2351, %v2355
    %v2422 = vunpack.c.l.b16 %v2287
    %v2423 = vunpack.c.l.b16 %v2288
    %v2424 = vunpack.c.l.b16 %v2289
    %v2425 = vunpack.c.l.b16 %v2290
    %v2426 = vunpack.c.l.b16 %v2291
    %v2427 = vunpack.c.l.b16 %v2292
    %v2428 = vunpack.c.l.b16 %v2293
    %v2429 = vunpack.c.l.b16 %v2294
    %v2430 = vunpack.c.l.b16 %v2295
    %v2431 = vunpack.c.l.b16 %v2296
    %v2432 = vunpack.c.l.b16 %v2297
    %v2433 = vunpack.c.l.b16 %v2298
    %v2434 = vunpack.c.l.b16 %v2299
    %v2435 = vunpack.c.l.b16 %v2300
    %v2436 = vunpack.c.l.b16 %v2301
    %v2437 = vunpack.c.l.b16 %v2302
    %v2438 = vunpack.c.l.b16 %v2303
    %v2439 = vunpack.c.l.b16 %v2304
    %v2440 = vunpack.c.l.b16 %v2305
    %v2441 = vunpack.c.l.b16 %v2306
    %v2442 = vunpack.c.l.b16 %v2307
    %v2443 = vunpack.c.l.b16 %v2308
    %v2444 = vunpack.c.l.b16 %v2309
    %v2445 = vunpack.c.l.b16 %v2310
    %v2446 = vunpack.c.l.b16 %v2311
    %v2447 = vunpack.c.l.b16 %v2312
    %v2448 = vunpack.c.l.b16 %v2313
    %v2449 = vunpack.c.l.b16 %v2314
    %v2450 = vunpack.c.l.b16 %v2315
    %v2451 = vunpack.c.l.b16 %v2316
    %v2452 = vunpack.c.l.b16 %v2317
    %v2453 = vunpack.c.l.b16 %v2318
    %v2454 = vunpack.c.l.b16 %v2319
    %v2455 = vunpack.c.l.b16 %v2320
    %v2456 = vunpack.c.l.b16 %v2321
    %v2457 = vunpack.c.l.b16 %v2322
    %v2458 = vunpack.c.l.b16 %v2323
    %v2459 = vunpack.c.l.b16 %v2324
    %v2460 = vunpack.c.l.b16 %v2325
    %v2461 = vunpack.c.l.b16 %v2326
    %v2462 = vunpack.c.l.b16 %v2327
    %v2463 = vunpack.c.l.b16 %v2328
    %v2464 = vunpack.c.l.b16 %v2329
    %v2465 = vunpack.c.l.b16 %v2330
    %v2466 = vunpack.c.l.b16 %v2331
    %v2467 = vunpack.c.l.b16 %v2332
    %v2468 = vunpack.c.l.b16 %v2333
    %v2469 = vunpack.c.l.b16 %v2334
    %v2470 = vunpack.c.l.b16 %v2335
    %v2471 = vunpack.c.l.b16 %v2336
    %v2472 = vunpack.c.l.b16 %v2337
    %v2473 = vunpack.c.l.b16 %v2338
    %v2474 = vunpack.c.l.b16 %v2339
    %v2475 = vunpack.c.l.b16 %v2340
    %v2476 = vunpack.c.l.b16 %v2341
    %v2477 = vunpack.c.l.b16 %v2342
    %v2478 = vunpack.c.l.b16 %v2343
    %v2479 = vunpack.c.l.b16 %v2344
    %v2480 = vunpack.c.l.b16 %v2345
    %v2481 = vunpack.c.l.b16 %v2346
    %v2482 = vunpack.c.l.b16 %v2347
    %v2483 = vunpack.c.l.b16 %v2348
    %v2484 = vunpack.c.l.b16 %v2349
    %v2485 = vunpack.c.l.b16 %v2350
    %v2486 = vpack.c.b16 %v2423, %v2422
    %v2487 = vpack.c.b16 %v2425, %v2424
    %v2488 = vpack.c.b16 %v2427, %v2426
    %v2489 = vpack.c.b16 %v2429, %v2428
    %v2490 = vpack.c.b16 %v2431, %v2430
    %v2491 = vpack.c.b16 %v2433, %v2432
    %v2492 = vpack.c.b16 %v2435, %v2434
    %v2493 = vpack.c.b16 %v2437, %v2436
    %v2494 = vpack.c.b16 %v2439, %v2438
    %v2495 = vpack.c.b16 %v2441, %v2440
    %v2496 = vpack.c.b16 %v2443, %v2442
    %v2497 = vpack.c.b16 %v2445, %v2444
    %v2498 = vpack.c.b16 %v2447, %v2446
    %v2499 = vpack.c.b16 %v2449, %v2448
    %v2500 = vpack.c.b16 %v2451, %v2450
    %v2501 = vpack.c.b16 %v2453, %v2452
    %v2502 = vpack.c.b16 %v2455, %v2454
    %v2503 = vpack.c.b16 %v2457, %v2456
    %v2504 = vpack.c.b16 %v2459, %v2458
    %v2505 = vpack.c.b16 %v2461, %v2460
    %v2506 = vpack.c.b16 %v2463, %v2462
    %v2507 = vpack.c.b16 %v2465, %v2464
    %v2508 = vpack.c.b16 %v2467, %v2466
    %v2509 = vpack.c.b16 %v2469, %v2468
    %v2510 = vpack.c.b16 %v2471, %v2470
    %v2511 = vpack.c.b16 %v2473, %v2472
    %v2512 = vpack.c.b16 %v2475, %v2474
    %v2513 = vpack.c.b16 %v2477, %v2476
    %v2514 = vpack.c.b16 %v2479, %v2478
    %v2515 = vpack.c.b16 %v2481, %v2480
    %v2516 = vpack.c.b16 %v2483, %v2482
    %v2517 = vpack.c.b16 %v2485, %v2484
    %2550 = vmatprep.subr.bf16.mxu0 0
    %2551 = vmatpush1.bf16.msra.mxu0 %v2486
    %2552 = vmatprep.subr.bf16.mxu0 0
    %2553 = vmatpush1.bf16.msra.mxu0 %v2487
    %2554 = vmatprep.subr.bf16.mxu0 0
    %2555 = vmatpush1.bf16.msra.mxu0 %v2488
    %2556 = vmatprep.subr.bf16.mxu0 0
    %2557 = vmatpush1.bf16.msra.mxu0 %v2489
    %2558 = vmatprep.subr.bf16.mxu0 0
    %2559 = vmatpush1.bf16.msra.mxu0 %v2490
    %2560 = vmatprep.subr.bf16.mxu0 0
    %2561 = vmatpush1.bf16.msra.mxu0 %v2491
    %2562 = vmatprep.subr.bf16.mxu0 0
    %2563 = vmatpush1.bf16.msra.mxu0 %v2492
    %2564 = vmatprep.subr.bf16.mxu0 0
    %2565 = vmatpush1.bf16.msra.mxu0 %v2493
    %2566 = vmatprep.subr.bf16.mxu0 0
    %2567 = vmatpush1.bf16.msra.mxu0 %v2494
    %2568 = vmatprep.subr.bf16.mxu0 0
    %2569 = vmatpush1.bf16.msra.mxu0 %v2495
    %2570 = vmatprep.subr.bf16.mxu0 0
    %2571 = vmatpush1.bf16.msra.mxu0 %v2496
    %2572 = vmatprep.subr.bf16.mxu0 0
    %2573 = vmatpush1.bf16.msra.mxu0 %v2497
    %2574 = vmatprep.subr.bf16.mxu0 0
    %2575 = vmatpush1.bf16.msra.mxu0 %v2498
    %2576 = vmatprep.subr.bf16.mxu0 0
    %2577 = vmatpush1.bf16.msra.mxu0 %v2499
    %2578 = vmatprep.subr.bf16.mxu0 0
    %2579 = vmatpush1.bf16.msra.mxu0 %v2500
    %2580 = vmatprep.subr.bf16.mxu0 0
    %2581 = vmatpush1.bf16.msra.mxu0 %v2501
    %2582 = vmatprep.mubr.bf16.mxu0 %v2280
    %2583 = vmatmul.mubr.bf16.gmra.mrb[0].mxu0 %v2279
    %v2584 = vpop.f32.mrb[0].mxu0
    %v2585 = vadd.f32 %v2356, %v2584
    %v2586 = vpop.f32.mrb[0].mxu0
    %v2587 = vpop.f32.mrb[0].mxu0
    %v2588 = vadd.f32 %v2356, %v2587
    %v2589 = vpop.f32.mrb[0].mxu0
    %2590 = vmatprep.mubr.bf16.mxu0 %v2284
    %2591 = vmatmul.mubr.bf16.gmra.mrb[0].mxu0 %v2283
    %v2592 = vpop.f32.mrb[0].mxu0
    %v2593 = vadd.f32 %v2356, %v2592
    %v2594 = vpop.f32.mrb[0].mxu0
    %v2595 = vpop.f32.mrb[0].mxu0
    %v2596 = vadd.f32 %v2356, %v2595
    %v2597 = vpop.f32.mrb[0].mxu0
    %2598 = vdwg.mxu0
    %2599 = vmatprep.subr.bf16.mxu0 0
    %2600 = vmatpush1.bf16.msra.mxu0 %v2502
    %2601 = vmatprep.subr.bf16.mxu0 0
    %2602 = vmatpush1.bf16.msra.mxu0 %v2503
    %2603 = vmatprep.subr.bf16.mxu0 0
    %2604 = vmatpush1.bf16.msra.mxu0 %v2504
    %2605 = vmatprep.subr.bf16.mxu0 0
    %2606 = vmatpush1.bf16.msra.mxu0 %v2505
    %2607 = vmatprep.subr.bf16.mxu0 0
    %2608 = vmatpush1.bf16.msra.mxu0 %v2506
    %2609 = vmatprep.subr.bf16.mxu0 0
    %2610 = vmatpush1.bf16.msra.mxu0 %v2507
    %2611 = vmatprep.subr.bf16.mxu0 0
    %2612 = vmatpush1.bf16.msra.mxu0 %v2508
    %2613 = vmatprep.subr.bf16.mxu0 0
    %2614 = vmatpush1.bf16.msra.mxu0 %v2509
    %2615 = vmatprep.subr.bf16.mxu0 0
    %2616 = vmatpush1.bf16.msra.mxu0 %v2510
    %2617 = vmatprep.subr.bf16.mxu0 0
    %2618 = vmatpush1.bf16.msra.mxu0 %v2511
    %2619 = vmatprep.subr.bf16.mxu0 0
    %2620 = vmatpush1.bf16.msra.mxu0 %v2512
    %2621 = vmatprep.subr.bf16.mxu0 0
    %2622 = vmatpush1.bf16.msra.mxu0 %v2513
    %2623 = vmatprep.subr.bf16.mxu0 0
    %2624 = vmatpush1.bf16.msra.mxu0 %v2514
    %2625 = vmatprep.subr.bf16.mxu0 0
    %2626 = vmatpush1.bf16.msra.mxu0 %v2515
    %2627 = vmatprep.subr.bf16.mxu0 0
    %2628 = vmatpush1.bf16.msra.mxu0 %v2516
    %2629 = vmatprep.subr.bf16.mxu0 0
    %2630 = vmatpush1.bf16.msra.mxu0 %v2517
    %2631 = vmatprep.mubr.bf16.mxu0 %v2282
    %2632 = vmatmul.mubr.bf16.gmra.mrb[0].mxu0 %v2281
    %v2633 = vpop.f32.mrb[0].mxu0
    %v2634 = vadd.f32 %v2585, %v2633
    %v2635 = vpop.f32.mrb[0].mxu0
    %v2636 = vpop.f32.mrb[0].mxu0
    %v2637 = vadd.f32 %v2588, %v2636
    %v2638 = vpop.f32.mrb[0].mxu0
    %2639 = vmatprep.mubr.bf16.mxu0 %v2286
    %2640 = vmatmul.mubr.bf16.gmra.mrb[0].mxu0 %v2285
    %v2641 = vpop.f32.mrb[0].mxu0
    %v2642 = vadd.f32 %v2593, %v2641
    %v2643 = vpop.f32.mrb[0].mxu0
    %v2644 = vpop.f32.mrb[0].mxu0
    %v2645 = vadd.f32 %v2596, %v2644
    %v2646 = vpop.f32.mrb[0].mxu0
    %2647 = vdwg.mxu0
    %v2648 = vadd.f32 %v1809, %v2634
    %v2649 = vadd.f32 %v1810, %v2637
    %v2650 = vadd.f32 %v1811, %v2642
    %v2651 = vadd.f32 %v1812, %v2645
    %v2652 = vld [vmem:[%s11] sm:$0x1]
    %v2653 = vld [vmem:[%s12] sm:$0x1]
    %2654 = vadd.xlane.f32.xlu0 %v2648
    %v2655 = vpop.xlane.xlu0 %2654
    %2656 = vadd.xlane.f32.xlu0 %v2649
    %v2657 = vpop.xlane.xlu0 %2656
    %2658 = vadd.xlane.f32.xlu0 %v2650
    %v2659 = vpop.xlane.xlu0 %2658
    %2660 = vadd.xlane.f32.xlu0 %v2651
    %v2661 = vpop.xlane.xlu0 %2660
    %v2662 = vmul.f32 %v2655, %v1756
    %v2663 = vmul.f32 %v2657, %v1756
    %v2664 = vmul.f32 %v2659, %v1756
    %v2665 = vmul.f32 %v2661, %v1756
    %v2666 = vsub.f32 %v2648, %v2662
    %v2667 = vsub.f32 %v2649, %v2663
    %v2668 = vsub.f32 %v2650, %v2664
    %v2669 = vsub.f32 %v2651, %v2665
    %v2670 = vmul.f32 %v2666, %v2666
    %v2671 = vmul.f32 %v2667, %v2667
    %v2672 = vmul.f32 %v2668, %v2668
    %v2673 = vmul.f32 %v2669, %v2669
    %2674 = vadd.xlane.f32.xlu0 %v2670
    %v2675 = vpop.xlane.xlu0 %2674
    %2676 = vadd.xlane.f32.xlu0 %v2671
    %v2677 = vpop.xlane.xlu0 %2676
    %2678 = vadd.xlane.f32.xlu0 %v2672
    %v2679 = vpop.xlane.xlu0 %2678
    %2680 = vadd.xlane.f32.xlu0 %v2673
    %v2681 = vpop.xlane.xlu0 %2680
    %v2682 = vmul.f32 %v2675, %v1756
    %v2683 = vmul.f32 %v2677, %v1756
    %v2684 = vmul.f32 %v2679, %v1756
    %v2685 = vmul.f32 %v2681, %v1756
    %v2686 = vadd.f32 %v2682, 1e-05
    %v2687 = vadd.f32 %v2683, 1e-05
    %v2688 = vadd.f32 %v2684, 1e-05
    %v2689 = vadd.f32 %v2685, 1e-05
    %v2690 = vrsqrt.pop %v2686
    %v2691 = vrsqrt.pop %v2687
    %v2692 = vrsqrt.pop %v2688
    %v2693 = vrsqrt.pop %v2689
    %v2694 = vmul.f32 %v2666, %v2690
    %v2695 = vmul.f32 %v2667, %v2691
    %v2696 = vmul.f32 %v2668, %v2692
    %v2697 = vmul.f32 %v2669, %v2693
    %v2699 = vlaneseq
    %v2700 = vshrl.u32 %v2699, 7
    %v2701 = vsub.s32 0, %v2700
    %v2702 = vrot.slane %v2652, %v2701
    %v2704 = vmul.f32 %v2694, %v2702
    %v2705 = vmul.f32 %v2695, %v2702
    %v2706 = vmul.f32 %v2696, %v2702
    %v2707 = vmul.f32 %v2697, %v2702
    %v2709 = vlaneseq
    %v2710 = vshrl.u32 %v2709, 7
    %v2711 = vsub.s32 0, %v2710
    %v2712 = vrot.slane %v2653, %v2711
    %v2714 = vadd.f32 %v2704, %v2712
    %v2715 = vadd.f32 %v2705, %v2712
    %v2716 = vadd.f32 %v2706, %v2712
    %v2717 = vadd.f32 %v2707, %v2712
    %2718 = vst [vmem:[#allocation2] sm:$0xff] %v2714
    %2719 = vst [vmem:[#allocation2 + $0x8] sm:$0xff] %v2715
    %2720 = vst [vmem:[#allocation2 + $0x10] sm:$0xff] %v2716
    %2721 = vst [vmem:[#allocation2 + $0x18] sm:$0xff] %v2717
    // Predicated region
    $region54: #{encoder_layer.1} parent=1 // pred_check
      _
    $region55: #{encoder_layer.1} parent=1 // pred_check_branch
      %2723 = sbr.rel (0) target = $region57
    $region56: #{encoder_layer.1} parent=1 // pred_region
      %s2725 = ssub.s32 512, 512
      %2726 = vsyncadd [#allocation3], %s2725
      %s2727 = sshll.u32 [#allocation2], 4
      %s2728 = int_to_ptr.vmem [resolvable:$true] %s2727
      %2733 = dma.vmem_to_hbm [thread:$0]  %s2728, 512, %s13, [#allocation3], 128, 128, 8
    $region57: #{encoder_layer.1} parent=1 // pred_fallthru
      _
    // Predicated region
    $region58: #{encoder_layer.1} parent=1 // pred_check
      _
    $region59: #{encoder_layer.1} parent=1 // pred_check_branch
      %2735 = sbr.rel (0) target = $region61
    $region60: #{encoder_layer.1} parent=1 // pred_region
      %2736 = dma.done [#allocation3], 512
    $region61: #{encoder_layer.1} parent=1 // pred_fallthru
      _
    %2737 = vsyncpa [#allocation3], 1

</llo_original>
